<compile_context>
chip_gen: v7x
topology: tpu7x:2x2x1
jax: 0.10.0
libtpu: 0.0.40
codegen_flags: <defaults>
</compile_context>

<pallas_src>
from functools import partial

import numpy as np

import jax
import jax.numpy as jnp
from jax.experimental import pallas as pl
from jax.experimental.pallas import tpu as pltpu

# ---------------- constants (from ATSTMel.__init__) ----------------
SR = 16000
N_FFT = 1024
WIN_LENGTH = 1024
HOP = 160
N_MELS = 64
F_MIN, F_MAX = 60.0, 7800.0
N_FREQS = N_FFT // 2 + 1          # 513 onesided rFFT bins
N_FREQS_K = 512                   # lane-aligned: bin 512 has a zero fbank row
TOP_DB = 80.0
AMIN = 1e-10
MIN_V, MAX_V = -79.6482, 50.6842  # MinMax scaler constants


def _round_up(x, m):
    return (x + m - 1) // m * m


# ---------------- deterministic "parameters" (fixed buffers, numpy) ----------------
def _hann_window():
    # torch.hann_window(1024, periodic=True)
    n = np.arange(WIN_LENGTH, dtype=np.float64)
    return 0.5 - 0.5 * np.cos(2.0 * np.pi * n / WIN_LENGTH)


def _rdft_windowed(n_freqs):
    # Real DFT as a matmul with the Hann window folded in:
    #   X[k] = sum_n x[n] * w[n] * exp(-2*pi*i*k*n/N),  k = 0..n_freqs-1
    n = np.arange(N_FFT, dtype=np.float64)[:, None]
    k = np.arange(n_freqs, dtype=np.float64)[None, :]
    ang = 2.0 * np.pi * n * k / N_FFT
    w = _hann_window()[:, None]
    cos_w = (w * np.cos(ang)).astype(np.float32)      # (N_FFT, n_freqs)
    sin_w = (-w * np.sin(ang)).astype(np.float32)     # (N_FFT, n_freqs)
    return cos_w, sin_w


def _melscale_fbanks():
    # torchaudio.functional.melscale_fbanks(513, 60, 7800, 64, 16000,
    #                                       norm=None, mel_scale="htk")
    all_freqs = np.linspace(0.0, SR // 2, N_FREQS)
    m_min = 2595.0 * np.log10(1.0 + F_MIN / 700.0)
    m_max = 2595.0 * np.log10(1.0 + F_MAX / 700.0)
    m_pts = np.linspace(m_min, m_max, N_MELS + 2)
    f_pts = 700.0 * (10.0 ** (m_pts / 2595.0) - 1.0)
    f_diff = f_pts[1:] - f_pts[:-1]                              # (n_mels+1,)
    slopes = f_pts[None, :] - all_freqs[:, None]                 # (n_freqs, n_mels+2)
    down = (-1.0 * slopes[:, :-2]) / f_diff[:-1]
    up = slopes[:, 2:] / f_diff[1:]
    fb = np.maximum(0.0, np.minimum(down, up))
    return fb.astype(np.float32)                                 # (513, 64)


_FB_FULL = _melscale_fbanks()                                    # (513, 64)
# Trimming 513 -> 512 freq bins is exact iff the dropped rows are all zero.
assert np.all(_FB_FULL[N_FREQS_K:] == 0.0)
_FB = np.ascontiguousarray(_FB_FULL[:N_FREQS_K])                 # (512, 64)
_COS_W, _SIN_W = _rdft_windowed(N_FREQS_K)                       # (1024, 512) each
_WDFT = np.concatenate([_COS_W, _SIN_W], axis=1)                 # (1024, 1024)


# ---------------- Pallas kernel ----------------
def _mel_db_kernel(frames_ref, wdft_ref, fb_ref, db_ref, tmax_ref, *,
                   tile_f, n_frames):
    # frames_ref: (1, tile_f, N_FFT)   bf16  raw frames (window folded into wdft)
    # wdft_ref:   (N_FFT, 2*N_FREQS_K) bf16  VMEM-resident [w*cos | -w*sin]
    # fb_ref:     (N_FREQS_K, N_MELS)  bf16  VMEM-resident mel filterbank
    # db_ref:     (1, N_MELS, tile_f)  f32   lane-dense dB output block
    # tmax_ref:   (1, 1, 8, 128)       f32   per-tile max (padding cols masked)
    x = frames_ref[0]                                              # (tile_f, N_FFT)
    y = jnp.dot(x, wdft_ref[...],
                preferred_element_type=jnp.float32)                # 1 MXU chain
    re = y[:, :N_FREQS_K]                                          # lane-aligned slices
    im = y[:, N_FREQS_K:]
    power = re * re + im * im                                      # |STFT|^2  (tile_f, 512)
    mel = jnp.dot(power.astype(jnp.bfloat16), fb_ref[...],
                  preferred_element_type=jnp.float32)              # (tile_f, 64)
    db = 10.0 * jnp.log10(jnp.maximum(mel, AMIN))
    db_t = db.T                                                    # (64, tile_f) lane-dense
    db_ref[0] = db_t

    # Per-tile max over VALID frame columns only (padding frames can hold
    # reflected-tail audio and must never raise the global top_db max).
    col = (pl.program_id(1) * tile_f
           + jax.lax.broadcasted_iota(jnp.int32, (N_MELS, tile_f), 1))
    masked = jnp.where(col < n_frames, db_t, jnp.float32(-1e9))
    tmax_ref[0, 0] = jnp.zeros((8, 128), jnp.float32) + jnp.max(masked)


# ---------------- wrapper ----------------
def atst_mel(audio, *, max_tile_frames=1024):
    """audio: (B, T) float32 -> (B, 1, N_MELS, n_frames) float32."""
    audio = jnp.asarray(audio, jnp.float32)
    B, T = audio.shape
    n_frames = T // HOP + 1

    # Frame-axis tiling: big tiles amortize the ~0.35us/step grid overhead.
    # tile_f=1024 keeps total VMEM ~20 MiB (fits v7x's 64 MiB/TC); on v5e/v6e
    # max_tile_frames=2048 is also viable.
    tile_f = min(max_tile_frames, _round_up(n_frames, 128))
    n_pad = _round_up(n_frames, tile_f)
    num_tiles = n_pad // tile_f

    # center=True reflect padding + framing, in bf16 and in the SAMPLE domain:
    # the (B, n_pad, N_FFT) framed tensor is materialized exactly once in bf16
    # (no f32 frames, no extra pad copy, no second cast copy).
    audio_bf = audio.astype(jnp.bfloat16)
    padded = jnp.pad(audio_bf, ((0, 0), (N_FFT // 2, N_FFT // 2)), mode="reflect")
    extra = (n_pad - 1) * HOP + N_FFT - padded.shape[1]
    if extra > 0:
        padded = jnp.pad(padded, ((0, 0), (0, extra)))             # zeros at the tail
    idx = np.arange(n_pad)[:, None] * HOP + np.arange(N_FFT)[None, :]
    frames = padded[:, idx]                                        # (B, n_pad, N_FFT) bf16

    wdft = jnp.asarray(_WDFT, dtype=jnp.bfloat16)                  # (1024, 1024)
    fb = jnp.asarray(_FB, dtype=jnp.bfloat16)                      # (512, 64)

    kernel = partial(_mel_db_kernel, tile_f=tile_f, n_frames=n_frames)

    db, tmax = pl.pallas_call(
        kernel,
        out_shape=(
            jax.ShapeDtypeStruct((B, N_MELS, n_pad), jnp.float32),
            jax.ShapeDtypeStruct((B, num_tiles, 8, 128), jnp.float32),
        ),
        grid=(B, num_tiles),
        in_specs=[
            pl.BlockSpec((1, tile_f, N_FFT), lambda b, i: (b, i, 0)),
            pl.BlockSpec((N_FFT, 2 * N_FREQS_K), lambda b, i: (0, 0)),   # resident
            pl.BlockSpec((N_FREQS_K, N_MELS), lambda b, i: (0, 0)),      # resident
        ],
        out_specs=(
            pl.BlockSpec((1, N_MELS, tile_f), lambda b, i: (b, 0, i)),
            pl.BlockSpec((1, 1, 8, 128), lambda b, i: (b, i, 0, 0)),
        ),
        compiler_params=pltpu.CompilerParams(
            dimension_semantics=("parallel", "parallel"),
            vmem_limit_bytes=40 * 1024 * 1024),
    )(frames, wdft, fb)

    # Global top_db max (torchaudio uses a single max over the whole 3-D
    # (B, 64, T) spectrogram).  Computed from the per-tile maxima — no re-read
    # of the dB array from HBM.
    gmax = jnp.max(tmax)

    # Finalize in plain XLA (fuses floor/clamp/scale/crop into one small pass
    # over only the valid n_frames columns).
    spec = db[:, :, :n_frames]
    spec = jnp.maximum(spec, gmax - TOP_DB)                        # top_db floor
    spec = jnp.clip(spec, -50.0, 80.0)                             # ATSTMel.amp2db clamp
    spec = (spec - MIN_V) / (MAX_V - MIN_V) * 2.0 - 1.0            # MinMax scaler
    return spec[:, None, :, :]                                     # (B, 1, 64, n_frames)


# ---------------- pure-JAX f32 reference (independent path: rFFT) ----------------
def atst_mel_ref(audio):
    audio = jnp.asarray(audio, jnp.float32)
    B, T = audio.shape
    n_frames = T // HOP + 1
    padded = jnp.pad(audio, ((0, 0), (N_FFT // 2, N_FFT // 2)), mode="reflect")
    idx = np.arange(n_frames)[:, None] * HOP + np.arange(N_FFT)[None, :]
    win = jnp.asarray(_hann_window().astype(np.float32))
    frames = padded[:, idx] * win[None, None, :]                   # (B, n_frames, N_FFT)
    spec = jnp.fft.rfft(frames, n=N_FFT, axis=-1)                  # (B, n_frames, 513)
    power = jnp.real(spec) ** 2 + jnp.imag(spec) ** 2
    mel = jnp.einsum("btf,fm->bmt", power, jnp.asarray(_FB_FULL),
                     precision=jax.lax.Precision.HIGHEST)          # (B, 64, n_frames)
    db = 10.0 * jnp.log10(jnp.maximum(mel, AMIN))
    db = jnp.maximum(db, jnp.max(db) - TOP_DB)
    db = jnp.clip(db, -50.0, 80.0)
    out = (db - MIN_V) / (MAX_V - MIN_V) * 2.0 - 1.0
    return out[:, None, :, :]


if __name__ == "__main__":
    key = jax.random.PRNGKey(0)
    B, T = 2, 1600  # 0.1 s of 16 kHz audio -> 11 frames
    audio = jax.random.normal(key, (B, T), dtype=jnp.float32)

    fn = jax.jit(atst_mel)
    out = jax.block_until_ready(fn(audio))
    ref = jax.block_until_ready(atst_mel_ref(audio))

    n_frames = T // HOP + 1
    assert out.shape == (B, 1, N_MELS, n_frames), out.shape
    assert out.dtype == jnp.float32
    assert bool(jnp.all(jnp.isfinite(out)))
    # bf16 folded-window DFT + bf16 mel projection introduce <~0.5 dB worst-case
    # error, which the clamp + (x+79.65)/130.33*2-1 scaling compresses to well
    # under 2e-2.
    err = float(jnp.max(jnp.abs(out - ref)))
    assert err < 2e-2, err
    print("KERNEL_OK")
</pallas_src>

<mosaic_0001>
module attributes {stable_mosaic.version = 11 : i64} {
  func.func @_mel_db_kernel(%arg0: i32, %arg1: i32, %arg2: memref<1x128x1024xbf16, #tpu.memory_space<vmem>>, %arg3: memref<1024x1024xbf16, #tpu.memory_space<vmem>>, %arg4: memref<512x64xbf16, #tpu.memory_space<vmem>>, %arg5: memref<1x64x128xf32, #tpu.memory_space<vmem>>, %arg6: memref<1x1x8x128xf32, #tpu.memory_space<vmem>>) attributes {dimension_semantics = [#tpu.dimension_semantics<parallel>, #tpu.dimension_semantics<parallel>], iteration_bounds = array<i64: 2, 1>, scalar_prefetch = 0 : i64, scratch_operands = 0 : i64, tpu.core_type = #tpu.core_type<tc>, window_params = [{transform_indices = @transform_0, window_bounds = array<i64: 1, 128, 1024>}, {pipeline_mode = #tpu.pipeline_mode<synchronous>, transform_indices = @transform_1, window_bounds = array<i64: 1024, 1024>}, {pipeline_mode = #tpu.pipeline_mode<synchronous>, transform_indices = @transform_2, window_bounds = array<i64: 512, 64>}, {transform_indices = @transform_3, window_bounds = array<i64: 1, 64, 128>}, {transform_indices = @transform_4, window_bounds = array<i64: 1, 1, 8, 128>}]} {
    %c0 = arith.constant 0 : index
    %c0_0 = arith.constant 0 : index
    %c0_1 = arith.constant 0 : index
    %0 = vector.load %arg2[%c0, %c0_0, %c0_1] : memref<1x128x1024xbf16, #tpu.memory_space<vmem>>, vector<1x128x1024xbf16>
    %1 = vector.shape_cast %0 : vector<1x128x1024xbf16> to vector<128x1024xbf16>
    %c0_2 = arith.constant 0 : index
    %c0_3 = arith.constant 0 : index
    %2 = vector.load %arg3[%c0_2, %c0_3] : memref<1024x1024xbf16, #tpu.memory_space<vmem>>, vector<1024x1024xbf16>
    %cst = arith.constant dense<0.000000e+00> : vector<128x1024xf32>
    %3 = tpu.matmul %1, %2, %cst {dimension_numbers = #tpu.dot_dimension_numbers<[1], [0], [0], [1], [0, 0, 1, 1], [], []>} : vector<128x1024xbf16>, vector<1024x1024xbf16>, vector<128x1024xf32> -> vector<128x1024xf32>
    %4 = vector.extract_strided_slice %3 {offsets = [0, 0], sizes = [128, 512], strides = [1, 1]} : vector<128x1024xf32> to vector<128x512xf32>
    %5 = vector.extract_strided_slice %3 {offsets = [0, 512], sizes = [128, 512], strides = [1, 1]} : vector<128x1024xf32> to vector<128x512xf32>
    %6 = arith.mulf %4, %4 : vector<128x512xf32>
    %7 = arith.mulf %5, %5 : vector<128x512xf32>
    %8 = arith.addf %6, %7 : vector<128x512xf32>
    %9 = arith.truncf %8 : vector<128x512xf32> to vector<128x512xbf16>
    %c0_4 = arith.constant 0 : index
    %c0_5 = arith.constant 0 : index
    %10 = vector.load %arg4[%c0_4, %c0_5] : memref<512x64xbf16, #tpu.memory_space<vmem>>, vector<512x64xbf16>
    %cst_6 = arith.constant dense<0.000000e+00> : vector<128x64xf32>
    %11 = tpu.matmul %9, %10, %cst_6 {dimension_numbers = #tpu.dot_dimension_numbers<[1], [0], [0], [1], [0, 0, 1, 1], [], []>} : vector<128x512xbf16>, vector<512x64xbf16>, vector<128x64xf32> -> vector<128x64xf32>
    %cst_7 = arith.constant 1.000000e-10 : f32
    %12 = vector.broadcast %cst_7 : f32 to vector<128x64xf32>
    %13 = arith.maximumf %11, %12 : vector<128x64xf32>
    %14 = math.log %13 : vector<128x64xf32>
    %cst_8 = arith.constant 0.434294492 : f32
    %15 = vector.broadcast %cst_8 : f32 to vector<128x64xf32>
    %16 = arith.mulf %14, %15 : vector<128x64xf32>
    %cst_9 = arith.constant 1.000000e+01 : f32
    %17 = vector.broadcast %cst_9 : f32 to vector<128x64xf32>
    %18 = arith.mulf %17, %16 : vector<128x64xf32>
    %19 = tpu.transpose %18, [1, 0] : vector<128x64xf32> -> vector<64x128xf32>
    %c0_10 = arith.constant 0 : index
    %c0_11 = arith.constant 0 : index
    %c0_12 = arith.constant 0 : index
    %20 = vector.load %arg5[%c0_10, %c0_11, %c0_12] : memref<1x64x128xf32, #tpu.memory_space<vmem>>, vector<1x64x128xf32>
    %21 = vector.shape_cast %20 : vector<1x64x128xf32> to vector<64x128xf32>
    %22 = vector.shape_cast %19 : vector<64x128xf32> to vector<1x64x128xf32>
    tpu.vector_store %arg5[%c0_10, %c0_11, %c0_12], %22 {strides = array<i32>} : memref<1x64x128xf32, #tpu.memory_space<vmem>>, vector<1x64x128xf32>,
    %c128_i32 = arith.constant 128 : i32
    %23 = arith.muli %arg1, %c128_i32 : i32
    %24 = tpu.iota {dimensions = array<i32: 1>} : vector<64x128xi32>
    %25 = vector.broadcast %23 : i32 to vector<64x128xi32>
    %26 = arith.addi %25, %24 : vector<64x128xi32>
    %c11_i32 = arith.constant 11 : i32
    %27 = vector.broadcast %c11_i32 : i32 to vector<64x128xi32>
    %28 = arith.cmpi slt, %26, %27 : vector<64x128xi32>
    %cst_13 = arith.constant -1.000000e+09 : f32
    %29 = vector.broadcast %cst_13 : f32 to vector<64x128xf32>
    %30 = arith.select %28, %19, %29 : vector<64x128xi1>, vector<64x128xf32>
    %cst_14 = arith.constant 0.000000e+00 : f32
    %31 = vector.broadcast %cst_14 : f32 to vector<8x128xf32>
    %32 = vector.shape_cast %30 : vector<64x128xf32> to vector<1x64x128xf32>
    %cst_15 = arith.constant dense<0xFF800000> : vector<1xf32>
    %33 = vector.multi_reduction <maximumf>, %32, %cst_15 [1, 2] : vector<1x64x128xf32> to vector<1xf32>
    %34 = vector.shape_cast %33 : vector<1xf32> to vector<1x1x1xf32>
    %35 = vector.extract %34[0, 0, 0] : f32 from vector<1x1x1xf32>
    %36 = vector.broadcast %35 : f32 to vector<8x128xf32>
    %37 = arith.addf %31, %36 : vector<8x128xf32>
    %c0_16 = arith.constant 0 : index
    %c0_17 = arith.constant 0 : index
    %c0_18 = arith.constant 0 : index
    %c0_19 = arith.constant 0 : index
    %38 = vector.load %arg6[%c0_16, %c0_17, %c0_18, %c0_19] : memref<1x1x8x128xf32, #tpu.memory_space<vmem>>, vector<1x1x8x128xf32>
    %39 = vector.shape_cast %38 : vector<1x1x8x128xf32> to vector<8x128xf32>
    %40 = vector.shape_cast %37 : vector<8x128xf32> to vector<1x1x8x128xf32>
    tpu.vector_store %arg6[%c0_16, %c0_17, %c0_18, %c0_19], %40 {strides = array<i32>} : memref<1x1x8x128xf32, #tpu.memory_space<vmem>>, vector<1x1x8x128xf32>,
    return
  }
  func.func @transform_0(%arg0: i32, %arg1: i32) -> (i32, i32, i32) {
    %c0_i32 = arith.constant 0 : i32
    %c0_i32_0 = arith.constant 0 : i32
    return %arg0, %arg1, %c0_i32 : i32, i32, i32
  }
  func.func @transform_1(%arg0: i32, %arg1: i32) -> (i32, i32) {
    %c0_i32 = arith.constant 0 : i32
    %c0_i32_0 = arith.constant 0 : i32
    %c0_i32_1 = arith.constant 0 : i32
    return %c0_i32, %c0_i32_0 : i32, i32
  }
  func.func @transform_2(%arg0: i32, %arg1: i32) -> (i32, i32) {
    %c0_i32 = arith.constant 0 : i32
    %c0_i32_0 = arith.constant 0 : i32
    %c0_i32_1 = arith.constant 0 : i32
    return %c0_i32, %c0_i32_0 : i32, i32
  }
  func.func @transform_3(%arg0: i32, %arg1: i32) -> (i32, i32, i32) {
    %c0_i32 = arith.constant 0 : i32
    %c0_i32_0 = arith.constant 0 : i32
    return %arg0, %c0_i32, %arg1 : i32, i32, i32
  }
  func.func @transform_4(%arg0: i32, %arg1: i32) -> (i32, i32, i32, i32) {
    %c0_i32 = arith.constant 0 : i32
    %c0_i32_0 = arith.constant 0 : i32
    %c0_i32_1 = arith.constant 0 : i32
    return %arg0, %arg1, %c0_i32, %c0_i32_0 : i32, i32, i32, i32
  }
}

</mosaic_0001>

<llo_original>
// kernel: atst_mel.1
$region0: #{atst_mel.1}
  #allocation0 [shape = 'u32[]', space=smem, size = 0x4, offset = 0x4, fixed_abs, tag = 'smem constant byte address 0x4 - core index']
  #allocation1 [shape = 'u32[144,128]{1,0:T(1,128)}', space=vmem, size = 0x12000, scoped, tag = 'internal scratch']
  %s0 = inlined_call_operand.hbm [shape: bf16[2,128,1024], index: 0, kind: input, shape index: {}]
  %s1 = inlined_call_operand.vmem [shape: bf16[1024,1024], index: 1, kind: input, shape index: {}]
  %s2 = inlined_call_operand.hbm [shape: bf16[512,64], index: 2, kind: input, shape index: {}]
  %s3 = inlined_call_operand.vmem [shape: f32[2,64,128], index: 3, kind: output, shape index: {0}]
  %s4 = inlined_call_operand.vmem [shape: f32[2,1,8,128], index: 4, kind: output, shape index: {1}]
  %5 = xla_tuple %s3, %s4
  %s6 = sld [smem:[#allocation0]]
  $region61: #{atst_mel.1} parent=0
    _
  %s8 = ssub.s32 1, %s6
  %s9 = scalar_select 0, %s8, %s6
  $region1: #{atst_mel.1} parent=0
    #allocation2 [shape = 'u8[524288]{0}', space=vmem, size = 0x80000, scoped, tag = 'input window, operand 0']
    #allocation3 [shape = 's32[2]{0}', space=sflag, size = 0x8, scoped, tag = 'scoped memory for atst_mel.1']
    #allocation4 [shape = 'u8[131072]{0}', space=vmem, size = 0x20000, scoped, tag = 'input window, operand 2, single buffered']
    #allocation5 [shape = 's32[1]{0}', space=sflag, size = 0x4, scoped, tag = 'scoped memory for atst_mel.1']
    %10 = vsyncpa [#allocation3], 0
    %s11 = scalar_lea.sflag [#allocation3], 1
    %12 = vsyncpa %s11, 0
    %13 = vsyncpa [#allocation5], 0
    loop: start=0, step=1, limit=4
    $region2: #{atst_mel.1} parent=1 // loop_pre_header
      _
    $region3: #{atst_mel.1} parent=1 // loop_header
      %s15 = sphi 0, %s19
      %p16 = scmp.ge.s32.totalorder %s15, 4
      %s22 = sphi 0, %s34
      %s23 = sphi 0, %s30
      %s24 = sphi 0, %s22
      %s25 = sphi 0, %s23
      %s26 = sphi 0, %s24
      %s27 = sphi 0, %s25
      %s39 = sphi 0, %s41
      %s42 = sphi 0, %s39
      %s43 = sphi 0, %s42
      %s59 = sphi 0, %s43
      %s63 = sphi 0, %s63
      %s65 = sphi 0, %s63
      %s66 = sphi 0, %s65
      %s80 = sphi 0, %s66
      %s84 = sphi 0, %s84
      %s86 = sphi 0, %s84
      %s87 = sphi 0, %s86
      %s101 = sphi 0, %s87
      %s109 = sphi 0, %s111
      %s112 = sphi 0, %s109
      %s113 = sphi 0, %s112
      %s129 = sphi 0, %s113
      %s137 = sphi 0, %s139
      %s140 = sphi 0, %s137
      %s141 = sphi 0, %s140
      %s157 = sphi 0, %s141
    $region4: #{atst_mel.1} parent=1 // loop_header_branch
      %18 = sbr.rel (%p16) target = $region8
    $region5: #{atst_mel.1} parent=1 // loop_body
      %s20 = ssub.s32 %s15, 1
      %s21 = ssub.s32 %s15, 2
      %s28 = sadd.s32 1, %s23
      %p29 = scmp.ge.s32.totalorder %s28, 1
      %s30 = scalar_select %p29, 0, %s28
      %s31 = sadd.s32 1, %s22
      %s32 = scalar_select %p29, %s31, %s22
      %p33 = scmp.ge.s32.totalorder %s32, 2
      %s34 = scalar_select %p33, 0, %s32
      %s35 = ssub.s32 %s22, %s34
      %s36 = ssub.s32 %s23, %s30
      %s37 = sor.u32 %s35, %s36
      %p38 = scmp.eq.s32.totalorder %s37, 0
      %s40 = sadd.s32 %s39, 1
      %s41 = scalar_select %p38, %s39, %s40
      %p44 = pneg %p38
      %p45 = scmp.eq.s32.totalorder %s15, 1
      %p46 = por %p44, %p45
      %p47 = scmp.ne.s32.totalorder %s39, %s42
      %p48 = scmp.eq.s32.totalorder %s15, 0
      %p49 = por %p47, %p48
      %p50 = scmp.ne.s32.totalorder %s39, %s42
      %p51 = scmp.eq.s32.totalorder %s20, 1
      %p52 = por %p50, %p51
      %p53 = scmp.ne.s32.totalorder %s42, %s43
      %p54 = scmp.eq.s32.totalorder %s20, 0
      %p55 = por %p53, %p54
      %p56 = scmp.ne.s32.totalorder %s42, %s43
      %p57 = scmp.eq.s32.totalorder %s21, 1
      %p58 = por %p56, %p57
      %p60 = scmp.ne.s32.totalorder %s43, %s59
      %p61 = scmp.eq.s32.totalorder %s21, 0
      %p62 = por %p60, %p61
      %s64 = sadd.s32 %s63, 1
      %p67 = scmp.eq.s32.totalorder %s15, 1
      %p68 = scmp.ne.s32.totalorder %s63, %s65
      %p69 = scmp.eq.s32.totalorder %s15, 0
      %p70 = por %p68, %p69
      %p71 = scmp.ne.s32.totalorder %s63, %s65
      %p72 = scmp.eq.s32.totalorder %s20, 1
      %p73 = por %p71, %p72
      %p74 = scmp.ne.s32.totalorder %s65, %s66
      %p75 = scmp.eq.s32.totalorder %s20, 0
      %p76 = por %p74, %p75
      %p77 = scmp.ne.s32.totalorder %s65, %s66
      %p78 = scmp.eq.s32.totalorder %s21, 1
      %p79 = por %p77, %p78
      %p81 = scmp.ne.s32.totalorder %s66, %s80
      %p82 = scmp.eq.s32.totalorder %s21, 0
      %p83 = por %p81, %p82
      %s85 = sadd.s32 %s84, 1
      %p88 = scmp.eq.s32.totalorder %s15, 1
      %p89 = scmp.ne.s32.totalorder %s84, %s86
      %p90 = scmp.eq.s32.totalorder %s15, 0
      %p91 = por %p89, %p90
      %p92 = scmp.ne.s32.totalorder %s84, %s86
      %p93 = scmp.eq.s32.totalorder %s20, 1
      %p94 = por %p92, %p93
      %p95 = scmp.ne.s32.totalorder %s86, %s87
      %p96 = scmp.eq.s32.totalorder %s20, 0
      %p97 = por %p95, %p96
      %p98 = scmp.ne.s32.totalorder %s86, %s87
      %p99 = scmp.eq.s32.totalorder %s21, 1
      %p100 = por %p98, %p99
      %p102 = scmp.ne.s32.totalorder %s87, %s101
      %p103 = scmp.eq.s32.totalorder %s21, 0
      %p104 = por %p102, %p103
      %s105 = ssub.s32 %s22, %s34
      %s106 = ssub.s32 %s23, %s30
      %s107 = sor.u32 %s105, %s106
      %p108 = scmp.eq.s32.totalorder %s107, 0
      %s110 = sadd.s32 %s109, 1
      %s111 = scalar_select %p108, %s109, %s110
      %p114 = pneg %p108
      %p115 = scmp.eq.s32.totalorder %s15, 1
      %p116 = por %p114, %p115
      %p117 = scmp.ne.s32.totalorder %s109, %s112
      %p118 = scmp.eq.s32.totalorder %s15, 0
      %p119 = por %p117, %p118
      %p120 = scmp.ne.s32.totalorder %s109, %s112
      %p121 = scmp.eq.s32.totalorder %s20, 1
      %p122 = por %p120, %p121
      %p123 = scmp.ne.s32.totalorder %s112, %s113
      %p124 = scmp.eq.s32.totalorder %s20, 0
      %p125 = por %p123, %p124
      %p126 = scmp.ne.s32.totalorder %s112, %s113
      %p127 = scmp.eq.s32.totalorder %s21, 1
      %p128 = por %p126, %p127
      %p130 = scmp.ne.s32.totalorder %s113, %s129
      %p131 = scmp.eq.s32.totalorder %s21, 0
      %p132 = por %p130, %p131
      %s133 = ssub.s32 %s22, %s34
      %s134 = ssub.s32 %s23, %s30
      %s135 = sor.u32 %s133, %s134
      %p136 = scmp.eq.s32.totalorder %s135, 0
      %s138 = sadd.s32 %s137, 1
      %s139 = scalar_select %p136, %s137, %s138
      %p142 = pneg %p136
      %p143 = scmp.eq.s32.totalorder %s15, 1
      %p144 = por %p142, %p143
      %p145 = scmp.ne.s32.totalorder %s137, %s140
      %p146 = scmp.eq.s32.totalorder %s15, 0
      %p147 = por %p145, %p146
      %p148 = scmp.ne.s32.totalorder %s137, %s140
      %p149 = scmp.eq.s32.totalorder %s20, 1
      %p150 = por %p148, %p149
      %p151 = scmp.ne.s32.totalorder %s140, %s141
      %p152 = scmp.eq.s32.totalorder %s20, 0
      %p153 = por %p151, %p152
      %p154 = scmp.ne.s32.totalorder %s140, %s141
      %p155 = scmp.eq.s32.totalorder %s21, 1
      %p156 = por %p154, %p155
      %p158 = scmp.ne.s32.totalorder %s141, %s157
      %p159 = scmp.eq.s32.totalorder %s21, 0
      %p160 = por %p158, %p159
      %p161 = scmp.le.s32.totalorder 1, %s15
      %p162 = scmp.lt.s32.totalorder %s15, 3
      %p163 = pnand %p161, %p162
      %p164 = pneg %p163
      // Predicated region
      $region9: #{atst_mel.1} parent=5 // pred_check
        _
      $region10: #{atst_mel.1} parent=5 // pred_check_branch
        %166 = sbr.rel (%p163) target = $region12
      $region11: #{atst_mel.1} parent=5 // pred_region
        %s167 = ssub.s32 %s15, 1
        // Predicated region
        $region13: #{atst_mel.1} parent=11 // pred_check
          %p168 = pneg %p76
        $region14: #{atst_mel.1} parent=11 // pred_check_branch
          %170 = sbr.rel (%p168) target = $region16
        $region15: #{atst_mel.1} parent=11 // pred_region
          _
        $region16: #{atst_mel.1} parent=11 // pred_fallthru
          _
        // Predicated region
        $region17: #{atst_mel.1} parent=11 // pred_check
          %p171 = pneg %p97
        $region18: #{atst_mel.1} parent=11 // pred_check_branch
          %173 = sbr.rel (%p171) target = $region20
        $region19: #{atst_mel.1} parent=11 // pred_region
          %s175 = ssub.s32 4096, 4096
          %176 = vsyncadd [#allocation5], %s175
          %s177 = sshll.u32 [#allocation4], 4
          %s178 = int_to_ptr.vmem [resolvable:$true] %s177
          %183 = dma.hbm_to_vmem [thread:$0]  %s2, 4096, %s178, [#allocation5], 64, 64, 4
        $region20: #{atst_mel.1} parent=11 // pred_fallthru
          _
      $region12: #{atst_mel.1} parent=5 // pred_fallthru
        _
      %p184 = scmp.lt.s32.totalorder %s15, 2
      // Predicated region
      $region21: #{atst_mel.1} parent=5 // pred_check
        %p185 = pneg %p184
      $region22: #{atst_mel.1} parent=5 // pred_check_branch
        %187 = sbr.rel (%p185) target = $region24
      $region23: #{atst_mel.1} parent=5 // pred_region
        // Predicated region
        $region25: #{atst_mel.1} parent=23 // pred_check
          %p188 = pneg %p49
        $region26: #{atst_mel.1} parent=23 // pred_check_branch
          %190 = sbr.rel (%p188) target = $region28
        $region27: #{atst_mel.1} parent=23 // pred_region
          %s191 = sand.u32 %s39, 1
          %s192 = scalar_lea.sflag [#allocation3], %s191
          %s193 = sand.u32 %s39, 1
          %s194 = smul.addr %s193, 512
          %s195 = scalar_lea.vmem [#allocation2], %s194
          %s196 = smul.u32 16, %s23
          %s198 = ssub.s32 8192, 8192
          %199 = vsyncadd %s192, %s198
          %s200 = smul.addr %s196, 8
          %s201 = smul.addr %s22, 128
          %s202 = sadd.s32 %s200, %s201
          %s203 = smul.addr %s202, 64
          %s204 = scalar_lea.hbm %s0, %s203
          %s205 = sshll.u32 %s195, 4
          %s206 = int_to_ptr.vmem [resolvable:$true] %s205
          %211 = dma.hbm_to_vmem [thread:$0]  %s204, 8192, %s206, %s192, 512, 512, 32
        $region28: #{atst_mel.1} parent=23 // pred_fallthru
          _
      $region24: #{atst_mel.1} parent=5 // pred_fallthru
        _
      %p212 = scmp.le.s32.totalorder 1, %s15
      %p213 = scmp.lt.s32.totalorder %s15, 3
      %p214 = pnand %p212, %p213
      %p215 = pneg %p214
      // Predicated region
      $region29: #{atst_mel.1} parent=5 // pred_check
        _
      $region30: #{atst_mel.1} parent=5 // pred_check_branch
        %217 = sbr.rel (%p214) target = $region32
      $region31: #{atst_mel.1} parent=5 // pred_region
        %s218 = ssub.s32 %s15, 1
        %s219 = sand.u32 %s42, 1
        %s220 = scalar_lea.sflag [#allocation3], %s219
        %s221 = sand.u32 %s42, 1
        %s222 = smul.addr %s221, 512
        %s223 = scalar_lea.vmem [#allocation2], %s222
        // Predicated region
        $region33: #{atst_mel.1} parent=31 // pred_check
          %p224 = pneg %p55
        $region34: #{atst_mel.1} parent=31 // pred_check_branch
          %226 = sbr.rel (%p224) target = $region36
        $region35: #{atst_mel.1} parent=31 // pred_region
          %227 = dma.done %s220, 8192
        $region36: #{atst_mel.1} parent=31 // pred_fallthru
          _
        // Predicated region
        $region37: #{atst_mel.1} parent=31 // pred_check
          %p228 = pneg %p97
        $region38: #{atst_mel.1} parent=31 // pred_check_branch
          %230 = sbr.rel (%p228) target = $region40
        $region39: #{atst_mel.1} parent=31 // pred_region
          %231 = dma.done [#allocation5], 4096
        $region40: #{atst_mel.1} parent=31 // pred_fallthru
          _
        %s232 = sand.u32 %s42, 1
        %s233 = scalar_lea.sflag [#allocation3], %s232
        %s234 = sand.u32 %s42, 1
        %s235 = smul.addr %s234, 512
        %s236 = scalar_lea.vmem [#allocation2], %s235
        %p237 = pneg %p55
        %p238 = pneg %p52
        %p239 = pneg %p76
        %p240 = pneg %p73
        %p241 = pneg %p97
        %p242 = pneg %p94
        %p243 = pneg %p125
        %p244 = pneg %p122
        %p245 = scmp.lt.s32.totalorder %s24, 1
        %s246 = scalar_select %p245, %s24, 1
        %p247 = scmp.lt.s32.totalorder %s25, 0
        %s248 = scalar_select %p247, %s25, 0
        %s249 = smul.addr %s246, 8
        %s250 = sadd.s32 %s248, %s249
        %s251 = smul.addr %s250, 8
        %s252 = scalar_lea.vmem %s3, %s251
        %p253 = pneg %p153
        %p254 = pneg %p150
        %p255 = scmp.lt.s32.totalorder %s24, 1
        %s256 = scalar_select %p255, %s24, 1
        %p257 = scmp.lt.s32.totalorder %s25, 0
        %s258 = scalar_select %p257, %s25, 0
        %s259 = sadd.s32 %s258, %s256
        %s260 = smul.addr %s259, 8
        %s261 = scalar_lea.vmem %s4, %s260
        %s262 = smul.u32 16, %s25
        %p263 = scmp.lt.s32.totalorder %s24, 1
        %s264 = scalar_select %p263, %s24, 1
        %p265 = scmp.lt.s32.totalorder %s25, 0
        %s266 = scalar_select %p265, %s25, 0
        %s267 = smul.addr %s264, 8
        %s268 = sadd.s32 %s266, %s267
        %s269 = smul.addr %s268, 8
        %s270 = scalar_lea.vmem %s3, %s269
        %p271 = scmp.lt.s32.totalorder %s24, 1
        %s272 = scalar_select %p271, %s24, 1
        %p273 = scmp.lt.s32.totalorder %s25, 0
        %s274 = scalar_select %p273, %s25, 0
        %s275 = sadd.s32 %s274, %s272
        %s276 = smul.addr %s275, 8
        %s277 = scalar_lea.vmem %s4, %s276
        %v279 = vld [vmem:[%s223] sm:$0xff]
        %v280 = vld [vmem:[%s223 + $0x8] sm:$0xff]
        %v281 = vld [vmem:[%s223 + $0x10] sm:$0xff]
        %v282 = vld [vmem:[%s223 + $0x18] sm:$0xff]
        %v283 = vld [vmem:[%s223 + $0x20] sm:$0xff]
        %v284 = vld [vmem:[%s223 + $0x28] sm:$0xff]
        %v285 = vld [vmem:[%s223 + $0x30] sm:$0xff]
        %v286 = vld [vmem:[%s223 + $0x38] sm:$0xff]
        %v287 = vld [vmem:[%s223 + $0x40] sm:$0xff]
        %v288 = vld [vmem:[%s223 + $0x48] sm:$0xff]
        %v289 = vld [vmem:[%s223 + $0x50] sm:$0xff]
        %v290 = vld [vmem:[%s223 + $0x58] sm:$0xff]
        %v291 = vld [vmem:[%s223 + $0x60] sm:$0xff]
        %v292 = vld [vmem:[%s223 + $0x68] sm:$0xff]
        %v293 = vld [vmem:[%s223 + $0x70] sm:$0xff]
        %v294 = vld [vmem:[%s223 + $0x78] sm:$0xff]
        %v295 = vld [vmem:[%s223 + $0x80] sm:$0xff]
        %v296 = vld [vmem:[%s223 + $0x88] sm:$0xff]
        %v297 = vld [vmem:[%s223 + $0x90] sm:$0xff]
        %v298 = vld [vmem:[%s223 + $0x98] sm:$0xff]
        %v299 = vld [vmem:[%s223 + $0xa0] sm:$0xff]
        %v300 = vld [vmem:[%s223 + $0xa8] sm:$0xff]
        %v301 = vld [vmem:[%s223 + $0xb0] sm:$0xff]
        %v302 = vld [vmem:[%s223 + $0xb8] sm:$0xff]
        %v303 = vld [vmem:[%s223 + $0xc0] sm:$0xff]
        %v304 = vld [vmem:[%s223 + $0xc8] sm:$0xff]
        %v305 = vld [vmem:[%s223 + $0xd0] sm:$0xff]
        %v306 = vld [vmem:[%s223 + $0xd8] sm:$0xff]
        %v307 = vld [vmem:[%s223 + $0xe0] sm:$0xff]
        %v308 = vld [vmem:[%s223 + $0xe8] sm:$0xff]
        %v309 = vld [vmem:[%s223 + $0xf0] sm:$0xff]
        %v310 = vld [vmem:[%s223 + $0xf8] sm:$0xff]
        %v311 = vld [vmem:[%s223 + $0x100] sm:$0xff]
        %v312 = vld [vmem:[%s223 + $0x108] sm:$0xff]
        %v313 = vld [vmem:[%s223 + $0x110] sm:$0xff]
        %v314 = vld [vmem:[%s223 + $0x118] sm:$0xff]
        %v315 = vld [vmem:[%s223 + $0x120] sm:$0xff]
        %v316 = vld [vmem:[%s223 + $0x128] sm:$0xff]
        %v317 = vld [vmem:[%s223 + $0x130] sm:$0xff]
        %v318 = vld [vmem:[%s223 + $0x138] sm:$0xff]
        %v319 = vld [vmem:[%s223 + $0x140] sm:$0xff]
        %v320 = vld [vmem:[%s223 + $0x148] sm:$0xff]
        %v321 = vld [vmem:[%s223 + $0x150] sm:$0xff]
        %v322 = vld [vmem:[%s223 + $0x158] sm:$0xff]
        %v323 = vld [vmem:[%s223 + $0x160] sm:$0xff]
        %v324 = vld [vmem:[%s223 + $0x168] sm:$0xff]
        %v325 = vld [vmem:[%s223 + $0x170] sm:$0xff]
        %v326 = vld [vmem:[%s223 + $0x178] sm:$0xff]
        %v327 = vld [vmem:[%s223 + $0x180] sm:$0xff]
        %v328 = vld [vmem:[%s223 + $0x188] sm:$0xff]
        %v329 = vld [vmem:[%s223 + $0x190] sm:$0xff]
        %v330 = vld [vmem:[%s223 + $0x198] sm:$0xff]
        %v331 = vld [vmem:[%s223 + $0x1a0] sm:$0xff]
        %v332 = vld [vmem:[%s223 + $0x1a8] sm:$0xff]
        %v333 = vld [vmem:[%s223 + $0x1b0] sm:$0xff]
        %v334 = vld [vmem:[%s223 + $0x1b8] sm:$0xff]
        %v335 = vld [vmem:[%s223 + $0x1c0] sm:$0xff]
        %v336 = vld [vmem:[%s223 + $0x1c8] sm:$0xff]
        %v337 = vld [vmem:[%s223 + $0x1d0] sm:$0xff]
        %v338 = vld [vmem:[%s223 + $0x1d8] sm:$0xff]
        %v339 = vld [vmem:[%s223 + $0x1e0] sm:$0xff]
        %v340 = vld [vmem:[%s223 + $0x1e8] sm:$0xff]
        %v341 = vld [vmem:[%s223 + $0x1f0] sm:$0xff]
        %v342 = vld [vmem:[%s223 + $0x1f8] sm:$0xff]
        %v343 = vld [vmem:[%s1] sm:$0xff]
        %v344 = vld [vmem:[%s1 + $0x8] sm:$0xff]
        %v345 = vld [vmem:[%s1 + $0x10] sm:$0xff]
        %v346 = vld [vmem:[%s1 + $0x18] sm:$0xff]
        %v347 = vld [vmem:[%s1 + $0x20] sm:$0xff]
        %v348 = vld [vmem:[%s1 + $0x28] sm:$0xff]
        %v349 = vld [vmem:[%s1 + $0x30] sm:$0xff]
        %v350 = vld [vmem:[%s1 + $0x38] sm:$0xff]
        %v351 = vld [vmem:[%s1 + $0x40] sm:$0xff]
        %v352 = vld [vmem:[%s1 + $0x48] sm:$0xff]
        %v353 = vld [vmem:[%s1 + $0x50] sm:$0xff]
        %v354 = vld [vmem:[%s1 + $0x58] sm:$0xff]
        %v355 = vld [vmem:[%s1 + $0x60] sm:$0xff]
        %v356 = vld [vmem:[%s1 + $0x68] sm:$0xff]
        %v357 = vld [vmem:[%s1 + $0x70] sm:$0xff]
        %v358 = vld [vmem:[%s1 + $0x78] sm:$0xff]
        %v359 = vld [vmem:[%s1 + $0x80] sm:$0xff]
        %v360 = vld [vmem:[%s1 + $0x88] sm:$0xff]
        %v361 = vld [vmem:[%s1 + $0x90] sm:$0xff]
        %v362 = vld [vmem:[%s1 + $0x98] sm:$0xff]
        %v363 = vld [vmem:[%s1 + $0xa0] sm:$0xff]
        %v364 = vld [vmem:[%s1 + $0xa8] sm:$0xff]
        %v365 = vld [vmem:[%s1 + $0xb0] sm:$0xff]
        %v366 = vld [vmem:[%s1 + $0xb8] sm:$0xff]
        %v367 = vld [vmem:[%s1 + $0xc0] sm:$0xff]
        %v368 = vld [vmem:[%s1 + $0xc8] sm:$0xff]
        %v369 = vld [vmem:[%s1 + $0xd0] sm:$0xff]
        %v370 = vld [vmem:[%s1 + $0xd8] sm:$0xff]
        %v371 = vld [vmem:[%s1 + $0xe0] sm:$0xff]
        %v372 = vld [vmem:[%s1 + $0xe8] sm:$0xff]
        %v373 = vld [vmem:[%s1 + $0xf0] sm:$0xff]
        %v374 = vld [vmem:[%s1 + $0xf8] sm:$0xff]
        %v375 = vld [vmem:[%s1 + $0x100] sm:$0xff]
        %v376 = vld [vmem:[%s1 + $0x108] sm:$0xff]
        %v377 = vld [vmem:[%s1 + $0x110] sm:$0xff]
        %v378 = vld [vmem:[%s1 + $0x118] sm:$0xff]
        %v379 = vld [vmem:[%s1 + $0x120] sm:$0xff]
        %v380 = vld [vmem:[%s1 + $0x128] sm:$0xff]
        %v381 = vld [vmem:[%s1 + $0x130] sm:$0xff]
        %v382 = vld [vmem:[%s1 + $0x138] sm:$0xff]
        %v383 = vld [vmem:[%s1 + $0x140] sm:$0xff]
        %v384 = vld [vmem:[%s1 + $0x148] sm:$0xff]
        %v385 = vld [vmem:[%s1 + $0x150] sm:$0xff]
        %v386 = vld [vmem:[%s1 + $0x158] sm:$0xff]
        %v387 = vld [vmem:[%s1 + $0x160] sm:$0xff]
        %v388 = vld [vmem:[%s1 + $0x168] sm:$0xff]
        %v389 = vld [vmem:[%s1 + $0x170] sm:$0xff]
        %v390 = vld [vmem:[%s1 + $0x178] sm:$0xff]
        %v391 = vld [vmem:[%s1 + $0x180] sm:$0xff]
        %v392 = vld [vmem:[%s1 + $0x188] sm:$0xff]
        %v393 = vld [vmem:[%s1 + $0x190] sm:$0xff]
        %v394 = vld [vmem:[%s1 + $0x198] sm:$0xff]
        %v395 = vld [vmem:[%s1 + $0x1a0] sm:$0xff]
        %v396 = vld [vmem:[%s1 + $0x1a8] sm:$0xff]
        %v397 = vld [vmem:[%s1 + $0x1b0] sm:$0xff]
        %v398 = vld [vmem:[%s1 + $0x1b8] sm:$0xff]
        %v399 = vld [vmem:[%s1 + $0x1c0] sm:$0xff]
        %v400 = vld [vmem:[%s1 + $0x1c8] sm:$0xff]
        %v401 = vld [vmem:[%s1 + $0x1d0] sm:$0xff]
        %v402 = vld [vmem:[%s1 + $0x1d8] sm:$0xff]
        %v403 = vld [vmem:[%s1 + $0x1e0] sm:$0xff]
        %v404 = vld [vmem:[%s1 + $0x1e8] sm:$0xff]
        %v405 = vld [vmem:[%s1 + $0x1f0] sm:$0xff]
        %v406 = vld [vmem:[%s1 + $0x1f8] sm:$0xff]
        %v407 = vld [vmem:[%s1 + $0x200] sm:$0xff]
        %v408 = vld [vmem:[%s1 + $0x208] sm:$0xff]
        %v409 = vld [vmem:[%s1 + $0x210] sm:$0xff]
        %v410 = vld [vmem:[%s1 + $0x218] sm:$0xff]
        %v411 = vld [vmem:[%s1 + $0x220] sm:$0xff]
        %v412 = vld [vmem:[%s1 + $0x228] sm:$0xff]
        %v413 = vld [vmem:[%s1 + $0x230] sm:$0xff]
        %v414 = vld [vmem:[%s1 + $0x238] sm:$0xff]
        %v415 = vld [vmem:[%s1 + $0x240] sm:$0xff]
        %v416 = vld [vmem:[%s1 + $0x248] sm:$0xff]
        %v417 = vld [vmem:[%s1 + $0x250] sm:$0xff]
        %v418 = vld [vmem:[%s1 + $0x258] sm:$0xff]
        %v419 = vld [vmem:[%s1 + $0x260] sm:$0xff]
        %v420 = vld [vmem:[%s1 + $0x268] sm:$0xff]
        %v421 = vld [vmem:[%s1 + $0x270] sm:$0xff]
        %v422 = vld [vmem:[%s1 + $0x278] sm:$0xff]
        %v423 = vld [vmem:[%s1 + $0x280] sm:$0xff]
        %v424 = vld [vmem:[%s1 + $0x288] sm:$0xff]
        %v425 = vld [vmem:[%s1 + $0x290] sm:$0xff]
        %v426 = vld [vmem:[%s1 + $0x298] sm:$0xff]
        %v427 = vld [vmem:[%s1 + $0x2a0] sm:$0xff]
        %v428 = vld [vmem:[%s1 + $0x2a8] sm:$0xff]
        %v429 = vld [vmem:[%s1 + $0x2b0] sm:$0xff]
        %v430 = vld [vmem:[%s1 + $0x2b8] sm:$0xff]
        %v431 = vld [vmem:[%s1 + $0x2c0] sm:$0xff]
        %v432 = vld [vmem:[%s1 + $0x2c8] sm:$0xff]
        %v433 = vld [vmem:[%s1 + $0x2d0] sm:$0xff]
        %v434 = vld [vmem:[%s1 + $0x2d8] sm:$0xff]
        %v435 = vld [vmem:[%s1 + $0x2e0] sm:$0xff]
        %v436 = vld [vmem:[%s1 + $0x2e8] sm:$0xff]
        %v437 = vld [vmem:[%s1 + $0x2f0] sm:$0xff]
        %v438 = vld [vmem:[%s1 + $0x2f8] sm:$0xff]
        %v439 = vld [vmem:[%s1 + $0x300] sm:$0xff]
        %v440 = vld [vmem:[%s1 + $0x308] sm:$0xff]
        %v441 = vld [vmem:[%s1 + $0x310] sm:$0xff]
        %v442 = vld [vmem:[%s1 + $0x318] sm:$0xff]
        %v443 = vld [vmem:[%s1 + $0x320] sm:$0xff]
        %v444 = vld [vmem:[%s1 + $0x328] sm:$0xff]
        %v445 = vld [vmem:[%s1 + $0x330] sm:$0xff]
        %v446 = vld [vmem:[%s1 + $0x338] sm:$0xff]
        %v447 = vld [vmem:[%s1 + $0x340] sm:$0xff]
        %v448 = vld [vmem:[%s1 + $0x348] sm:$0xff]
        %v449 = vld [vmem:[%s1 + $0x350] sm:$0xff]
        %v450 = vld [vmem:[%s1 + $0x358] sm:$0xff]
        %v451 = vld [vmem:[%s1 + $0x360] sm:$0xff]
        %v452 = vld [vmem:[%s1 + $0x368] sm:$0xff]
        %v453 = vld [vmem:[%s1 + $0x370] sm:$0xff]
        %v454 = vld [vmem:[%s1 + $0x378] sm:$0xff]
        %v455 = vld [vmem:[%s1 + $0x380] sm:$0xff]
        %v456 = vld [vmem:[%s1 + $0x388] sm:$0xff]
        %v457 = vld [vmem:[%s1 + $0x390] sm:$0xff]
        %v458 = vld [vmem:[%s1 + $0x398] sm:$0xff]
        %v459 = vld [vmem:[%s1 + $0x3a0] sm:$0xff]
        %v460 = vld [vmem:[%s1 + $0x3a8] sm:$0xff]
        %v461 = vld [vmem:[%s1 + $0x3b0] sm:$0xff]
        %v462 = vld [vmem:[%s1 + $0x3b8] sm:$0xff]
        %v463 = vld [vmem:[%s1 + $0x3c0] sm:$0xff]
        %v464 = vld [vmem:[%s1 + $0x3c8] sm:$0xff]
        %v465 = vld [vmem:[%s1 + $0x3d0] sm:$0xff]
        %v466 = vld [vmem:[%s1 + $0x3d8] sm:$0xff]
        %v467 = vld [vmem:[%s1 + $0x3e0] sm:$0xff]
        %v468 = vld [vmem:[%s1 + $0x3e8] sm:$0xff]
        %v469 = vld [vmem:[%s1 + $0x3f0] sm:$0xff]
        %v470 = vld [vmem:[%s1 + $0x3f8] sm:$0xff]
        %v471 = vld [vmem:[%s1 + $0x400] sm:$0xff]
        %v472 = vld [vmem:[%s1 + $0x408] sm:$0xff]
        %v473 = vld [vmem:[%s1 + $0x410] sm:$0xff]
        %v474 = vld [vmem:[%s1 + $0x418] sm:$0xff]
        %v475 = vld [vmem:[%s1 + $0x420] sm:$0xff]
        %v476 = vld [vmem:[%s1 + $0x428] sm:$0xff]
        %v477 = vld [vmem:[%s1 + $0x430] sm:$0xff]
        %v478 = vld [vmem:[%s1 + $0x438] sm:$0xff]
        %v479 = vld [vmem:[%s1 + $0x440] sm:$0xff]
        %v480 = vld [vmem:[%s1 + $0x448] sm:$0xff]
        %v481 = vld [vmem:[%s1 + $0x450] sm:$0xff]
        %v482 = vld [vmem:[%s1 + $0x458] sm:$0xff]
        %v483 = vld [vmem:[%s1 + $0x460] sm:$0xff]
        %v484 = vld [vmem:[%s1 + $0x468] sm:$0xff]
        %v485 = vld [vmem:[%s1 + $0x470] sm:$0xff]
        %v486 = vld [vmem:[%s1 + $0x478] sm:$0xff]
        %v487 = vld [vmem:[%s1 + $0x480] sm:$0xff]
        %v488 = vld [vmem:[%s1 + $0x488] sm:$0xff]
        %v489 = vld [vmem:[%s1 + $0x490] sm:$0xff]
        %v490 = vld [vmem:[%s1 + $0x498] sm:$0xff]
        %v491 = vld [vmem:[%s1 + $0x4a0] sm:$0xff]
        %v492 = vld [vmem:[%s1 + $0x4a8] sm:$0xff]
        %v493 = vld [vmem:[%s1 + $0x4b0] sm:$0xff]
        %v494 = vld [vmem:[%s1 + $0x4b8] sm:$0xff]
        %v495 = vld [vmem:[%s1 + $0x4c0] sm:$0xff]
        %v496 = vld [vmem:[%s1 + $0x4c8] sm:$0xff]
        %v497 = vld [vmem:[%s1 + $0x4d0] sm:$0xff]
        %v498 = vld [vmem:[%s1 + $0x4d8] sm:$0xff]
        %v499 = vld [vmem:[%s1 + $0x4e0] sm:$0xff]
        %v500 = vld [vmem:[%s1 + $0x4e8] sm:$0xff]
        %v501 = vld [vmem:[%s1 + $0x4f0] sm:$0xff]
        %v502 = vld [vmem:[%s1 + $0x4f8] sm:$0xff]
        %v503 = vld [vmem:[%s1 + $0x500] sm:$0xff]
        %v504 = vld [vmem:[%s1 + $0x508] sm:$0xff]
        %v505 = vld [vmem:[%s1 + $0x510] sm:$0xff]
        %v506 = vld [vmem:[%s1 + $0x518] sm:$0xff]
        %v507 = vld [vmem:[%s1 + $0x520] sm:$0xff]
        %v508 = vld [vmem:[%s1 + $0x528] sm:$0xff]
        %v509 = vld [vmem:[%s1 + $0x530] sm:$0xff]
        %v510 = vld [vmem:[%s1 + $0x538] sm:$0xff]
        %v511 = vld [vmem:[%s1 + $0x540] sm:$0xff]
        %v512 = vld [vmem:[%s1 + $0x548] sm:$0xff]
        %v513 = vld [vmem:[%s1 + $0x550] sm:$0xff]
        %v514 = vld [vmem:[%s1 + $0x558] sm:$0xff]
        %v515 = vld [vmem:[%s1 + $0x560] sm:$0xff]
        %v516 = vld [vmem:[%s1 + $0x568] sm:$0xff]
        %v517 = vld [vmem:[%s1 + $0x570] sm:$0xff]
        %v518 = vld [vmem:[%s1 + $0x578] sm:$0xff]
        %v519 = vld [vmem:[%s1 + $0x580] sm:$0xff]
        %v520 = vld [vmem:[%s1 + $0x588] sm:$0xff]
        %v521 = vld [vmem:[%s1 + $0x590] sm:$0xff]
        %v522 = vld [vmem:[%s1 + $0x598] sm:$0xff]
        %v523 = vld [vmem:[%s1 + $0x5a0] sm:$0xff]
        %v524 = vld [vmem:[%s1 + $0x5a8] sm:$0xff]
        %v525 = vld [vmem:[%s1 + $0x5b0] sm:$0xff]
        %v526 = vld [vmem:[%s1 + $0x5b8] sm:$0xff]
        %v527 = vld [vmem:[%s1 + $0x5c0] sm:$0xff]
        %v528 = vld [vmem:[%s1 + $0x5c8] sm:$0xff]
        %v529 = vld [vmem:[%s1 + $0x5d0] sm:$0xff]
        %v530 = vld [vmem:[%s1 + $0x5d8] sm:$0xff]
        %v531 = vld [vmem:[%s1 + $0x5e0] sm:$0xff]
        %v532 = vld [vmem:[%s1 + $0x5e8] sm:$0xff]
        %v533 = vld [vmem:[%s1 + $0x5f0] sm:$0xff]
        %v534 = vld [vmem:[%s1 + $0x5f8] sm:$0xff]
        %v535 = vld [vmem:[%s1 + $0x600] sm:$0xff]
        %v536 = vld [vmem:[%s1 + $0x608] sm:$0xff]
        %v537 = vld [vmem:[%s1 + $0x610] sm:$0xff]
        %v538 = vld [vmem:[%s1 + $0x618] sm:$0xff]
        %v539 = vld [vmem:[%s1 + $0x620] sm:$0xff]
        %v540 = vld [vmem:[%s1 + $0x628] sm:$0xff]
        %v541 = vld [vmem:[%s1 + $0x630] sm:$0xff]
        %v542 = vld [vmem:[%s1 + $0x638] sm:$0xff]
        %v543 = vld [vmem:[%s1 + $0x640] sm:$0xff]
        %v544 = vld [vmem:[%s1 + $0x648] sm:$0xff]
        %v545 = vld [vmem:[%s1 + $0x650] sm:$0xff]
        %v546 = vld [vmem:[%s1 + $0x658] sm:$0xff]
        %v547 = vld [vmem:[%s1 + $0x660] sm:$0xff]
        %v548 = vld [vmem:[%s1 + $0x668] sm:$0xff]
        %v549 = vld [vmem:[%s1 + $0x670] sm:$0xff]
        %v550 = vld [vmem:[%s1 + $0x678] sm:$0xff]
        %v551 = vld [vmem:[%s1 + $0x680] sm:$0xff]
        %v552 = vld [vmem:[%s1 + $0x688] sm:$0xff]
        %v553 = vld [vmem:[%s1 + $0x690] sm:$0xff]
        %v554 = vld [vmem:[%s1 + $0x698] sm:$0xff]
        %v555 = vld [vmem:[%s1 + $0x6a0] sm:$0xff]
        %v556 = vld [vmem:[%s1 + $0x6a8] sm:$0xff]
        %v557 = vld [vmem:[%s1 + $0x6b0] sm:$0xff]
        %v558 = vld [vmem:[%s1 + $0x6b8] sm:$0xff]
        %v559 = vld [vmem:[%s1 + $0x6c0] sm:$0xff]
        %v560 = vld [vmem:[%s1 + $0x6c8] sm:$0xff]
        %v561 = vld [vmem:[%s1 + $0x6d0] sm:$0xff]
        %v562 = vld [vmem:[%s1 + $0x6d8] sm:$0xff]
        %v563 = vld [vmem:[%s1 + $0x6e0] sm:$0xff]
        %v564 = vld [vmem:[%s1 + $0x6e8] sm:$0xff]
        %v565 = vld [vmem:[%s1 + $0x6f0] sm:$0xff]
        %v566 = vld [vmem:[%s1 + $0x6f8] sm:$0xff]
        %v567 = vld [vmem:[%s1 + $0x700] sm:$0xff]
        %v568 = vld [vmem:[%s1 + $0x708] sm:$0xff]
        %v569 = vld [vmem:[%s1 + $0x710] sm:$0xff]
        %v570 = vld [vmem:[%s1 + $0x718] sm:$0xff]
        %v571 = vld [vmem:[%s1 + $0x720] sm:$0xff]
        %v572 = vld [vmem:[%s1 + $0x728] sm:$0xff]
        %v573 = vld [vmem:[%s1 + $0x730] sm:$0xff]
        %v574 = vld [vmem:[%s1 + $0x738] sm:$0xff]
        %v575 = vld [vmem:[%s1 + $0x740] sm:$0xff]
        %v576 = vld [vmem:[%s1 + $0x748] sm:$0xff]
        %v577 = vld [vmem:[%s1 + $0x750] sm:$0xff]
        %v578 = vld [vmem:[%s1 + $0x758] sm:$0xff]
        %v579 = vld [vmem:[%s1 + $0x760] sm:$0xff]
        %v580 = vld [vmem:[%s1 + $0x768] sm:$0xff]
        %v581 = vld [vmem:[%s1 + $0x770] sm:$0xff]
        %v582 = vld [vmem:[%s1 + $0x778] sm:$0xff]
        %v583 = vld [vmem:[%s1 + $0x780] sm:$0xff]
        %v584 = vld [vmem:[%s1 + $0x788] sm:$0xff]
        %v585 = vld [vmem:[%s1 + $0x790] sm:$0xff]
        %v586 = vld [vmem:[%s1 + $0x798] sm:$0xff]
        %v587 = vld [vmem:[%s1 + $0x7a0] sm:$0xff]
        %v588 = vld [vmem:[%s1 + $0x7a8] sm:$0xff]
        %v589 = vld [vmem:[%s1 + $0x7b0] sm:$0xff]
        %v590 = vld [vmem:[%s1 + $0x7b8] sm:$0xff]
        %v591 = vld [vmem:[%s1 + $0x7c0] sm:$0xff]
        %v592 = vld [vmem:[%s1 + $0x7c8] sm:$0xff]
        %v593 = vld [vmem:[%s1 + $0x7d0] sm:$0xff]
        %v594 = vld [vmem:[%s1 + $0x7d8] sm:$0xff]
        %v595 = vld [vmem:[%s1 + $0x7e0] sm:$0xff]
        %v596 = vld [vmem:[%s1 + $0x7e8] sm:$0xff]
        %v597 = vld [vmem:[%s1 + $0x7f0] sm:$0xff]
        %v598 = vld [vmem:[%s1 + $0x7f8] sm:$0xff]
        %v599 = vld [vmem:[%s1 + $0x800] sm:$0xff]
        %v600 = vld [vmem:[%s1 + $0x808] sm:$0xff]
        %v601 = vld [vmem:[%s1 + $0x810] sm:$0xff]
        %v602 = vld [vmem:[%s1 + $0x818] sm:$0xff]
        %v603 = vld [vmem:[%s1 + $0x820] sm:$0xff]
        %v604 = vld [vmem:[%s1 + $0x828] sm:$0xff]
        %v605 = vld [vmem:[%s1 + $0x830] sm:$0xff]
        %v606 = vld [vmem:[%s1 + $0x838] sm:$0xff]
        %v607 = vld [vmem:[%s1 + $0x840] sm:$0xff]
        %v608 = vld [vmem:[%s1 + $0x848] sm:$0xff]
        %v609 = vld [vmem:[%s1 + $0x850] sm:$0xff]
        %v610 = vld [vmem:[%s1 + $0x858] sm:$0xff]
        %v611 = vld [vmem:[%s1 + $0x860] sm:$0xff]
        %v612 = vld [vmem:[%s1 + $0x868] sm:$0xff]
        %v613 = vld [vmem:[%s1 + $0x870] sm:$0xff]
        %v614 = vld [vmem:[%s1 + $0x878] sm:$0xff]
        %v615 = vld [vmem:[%s1 + $0x880] sm:$0xff]
        %v616 = vld [vmem:[%s1 + $0x888] sm:$0xff]
        %v617 = vld [vmem:[%s1 + $0x890] sm:$0xff]
        %v618 = vld [vmem:[%s1 + $0x898] sm:$0xff]
        %v619 = vld [vmem:[%s1 + $0x8a0] sm:$0xff]
        %v620 = vld [vmem:[%s1 + $0x8a8] sm:$0xff]
        %v621 = vld [vmem:[%s1 + $0x8b0] sm:$0xff]
        %v622 = vld [vmem:[%s1 + $0x8b8] sm:$0xff]
        %v623 = vld [vmem:[%s1 + $0x8c0] sm:$0xff]
        %v624 = vld [vmem:[%s1 + $0x8c8] sm:$0xff]
        %v625 = vld [vmem:[%s1 + $0x8d0] sm:$0xff]
        %v626 = vld [vmem:[%s1 + $0x8d8] sm:$0xff]
        %v627 = vld [vmem:[%s1 + $0x8e0] sm:$0xff]
        %v628 = vld [vmem:[%s1 + $0x8e8] sm:$0xff]
        %v629 = vld [vmem:[%s1 + $0x8f0] sm:$0xff]
        %v630 = vld [vmem:[%s1 + $0x8f8] sm:$0xff]
        %v631 = vld [vmem:[%s1 + $0x900] sm:$0xff]
        %v632 = vld [vmem:[%s1 + $0x908] sm:$0xff]
        %v633 = vld [vmem:[%s1 + $0x910] sm:$0xff]
        %v634 = vld [vmem:[%s1 + $0x918] sm:$0xff]
        %v635 = vld [vmem:[%s1 + $0x920] sm:$0xff]
        %v636 = vld [vmem:[%s1 + $0x928] sm:$0xff]
        %v637 = vld [vmem:[%s1 + $0x930] sm:$0xff]
        %v638 = vld [vmem:[%s1 + $0x938] sm:$0xff]
        %v639 = vld [vmem:[%s1 + $0x940] sm:$0xff]
        %v640 = vld [vmem:[%s1 + $0x948] sm:$0xff]
        %v641 = vld [vmem:[%s1 + $0x950] sm:$0xff]
        %v642 = vld [vmem:[%s1 + $0x958] sm:$0xff]
        %v643 = vld [vmem:[%s1 + $0x960] sm:$0xff]
        %v644 = vld [vmem:[%s1 + $0x968] sm:$0xff]
        %v645 = vld [vmem:[%s1 + $0x970] sm:$0xff]
        %v646 = vld [vmem:[%s1 + $0x978] sm:$0xff]
        %v647 = vld [vmem:[%s1 + $0x980] sm:$0xff]
        %v648 = vld [vmem:[%s1 + $0x988] sm:$0xff]
        %v649 = vld [vmem:[%s1 + $0x990] sm:$0xff]
        %v650 = vld [vmem:[%s1 + $0x998] sm:$0xff]
        %v651 = vld [vmem:[%s1 + $0x9a0] sm:$0xff]
        %v652 = vld [vmem:[%s1 + $0x9a8] sm:$0xff]
        %v653 = vld [vmem:[%s1 + $0x9b0] sm:$0xff]
        %v654 = vld [vmem:[%s1 + $0x9b8] sm:$0xff]
        %v655 = vld [vmem:[%s1 + $0x9c0] sm:$0xff]
        %v656 = vld [vmem:[%s1 + $0x9c8] sm:$0xff]
        %v657 = vld [vmem:[%s1 + $0x9d0] sm:$0xff]
        %v658 = vld [vmem:[%s1 + $0x9d8] sm:$0xff]
        %v659 = vld [vmem:[%s1 + $0x9e0] sm:$0xff]
        %v660 = vld [vmem:[%s1 + $0x9e8] sm:$0xff]
        %v661 = vld [vmem:[%s1 + $0x9f0] sm:$0xff]
        %v662 = vld [vmem:[%s1 + $0x9f8] sm:$0xff]
        %v663 = vld [vmem:[%s1 + $0xa00] sm:$0xff]
        %v664 = vld [vmem:[%s1 + $0xa08] sm:$0xff]
        %v665 = vld [vmem:[%s1 + $0xa10] sm:$0xff]
        %v666 = vld [vmem:[%s1 + $0xa18] sm:$0xff]
        %v667 = vld [vmem:[%s1 + $0xa20] sm:$0xff]
        %v668 = vld [vmem:[%s1 + $0xa28] sm:$0xff]
        %v669 = vld [vmem:[%s1 + $0xa30] sm:$0xff]
        %v670 = vld [vmem:[%s1 + $0xa38] sm:$0xff]
        %v671 = vld [vmem:[%s1 + $0xa40] sm:$0xff]
        %v672 = vld [vmem:[%s1 + $0xa48] sm:$0xff]
        %v673 = vld [vmem:[%s1 + $0xa50] sm:$0xff]
        %v674 = vld [vmem:[%s1 + $0xa58] sm:$0xff]
        %v675 = vld [vmem:[%s1 + $0xa60] sm:$0xff]
        %v676 = vld [vmem:[%s1 + $0xa68] sm:$0xff]
        %v677 = vld [vmem:[%s1 + $0xa70] sm:$0xff]
        %v678 = vld [vmem:[%s1 + $0xa78] sm:$0xff]
        %v679 = vld [vmem:[%s1 + $0xa80] sm:$0xff]
        %v680 = vld [vmem:[%s1 + $0xa88] sm:$0xff]
        %v681 = vld [vmem:[%s1 + $0xa90] sm:$0xff]
        %v682 = vld [vmem:[%s1 + $0xa98] sm:$0xff]
        %v683 = vld [vmem:[%s1 + $0xaa0] sm:$0xff]
        %v684 = vld [vmem:[%s1 + $0xaa8] sm:$0xff]
        %v685 = vld [vmem:[%s1 + $0xab0] sm:$0xff]
        %v686 = vld [vmem:[%s1 + $0xab8] sm:$0xff]
        %v687 = vld [vmem:[%s1 + $0xac0] sm:$0xff]
        %v688 = vld [vmem:[%s1 + $0xac8] sm:$0xff]
        %v689 = vld [vmem:[%s1 + $0xad0] sm:$0xff]
        %v690 = vld [vmem:[%s1 + $0xad8] sm:$0xff]
        %v691 = vld [vmem:[%s1 + $0xae0] sm:$0xff]
        %v692 = vld [vmem:[%s1 + $0xae8] sm:$0xff]
        %v693 = vld [vmem:[%s1 + $0xaf0] sm:$0xff]
        %v694 = vld [vmem:[%s1 + $0xaf8] sm:$0xff]
        %v695 = vld [vmem:[%s1 + $0xb00] sm:$0xff]
        %v696 = vld [vmem:[%s1 + $0xb08] sm:$0xff]
        %v697 = vld [vmem:[%s1 + $0xb10] sm:$0xff]
        %v698 = vld [vmem:[%s1 + $0xb18] sm:$0xff]
        %v699 = vld [vmem:[%s1 + $0xb20] sm:$0xff]
        %v700 = vld [vmem:[%s1 + $0xb28] sm:$0xff]
        %v701 = vld [vmem:[%s1 + $0xb30] sm:$0xff]
        %v702 = vld [vmem:[%s1 + $0xb38] sm:$0xff]
        %v703 = vld [vmem:[%s1 + $0xb40] sm:$0xff]
        %v704 = vld [vmem:[%s1 + $0xb48] sm:$0xff]
        %v705 = vld [vmem:[%s1 + $0xb50] sm:$0xff]
        %v706 = vld [vmem:[%s1 + $0xb58] sm:$0xff]
        %v707 = vld [vmem:[%s1 + $0xb60] sm:$0xff]
        %v708 = vld [vmem:[%s1 + $0xb68] sm:$0xff]
        %v709 = vld [vmem:[%s1 + $0xb70] sm:$0xff]
        %v710 = vld [vmem:[%s1 + $0xb78] sm:$0xff]
        %v711 = vld [vmem:[%s1 + $0xb80] sm:$0xff]
        %v712 = vld [vmem:[%s1 + $0xb88] sm:$0xff]
        %v713 = vld [vmem:[%s1 + $0xb90] sm:$0xff]
        %v714 = vld [vmem:[%s1 + $0xb98] sm:$0xff]
        %v715 = vld [vmem:[%s1 + $0xba0] sm:$0xff]
        %v716 = vld [vmem:[%s1 + $0xba8] sm:$0xff]
        %v717 = vld [vmem:[%s1 + $0xbb0] sm:$0xff]
        %v718 = vld [vmem:[%s1 + $0xbb8] sm:$0xff]
        %v719 = vld [vmem:[%s1 + $0xbc0] sm:$0xff]
        %v720 = vld [vmem:[%s1 + $0xbc8] sm:$0xff]
        %v721 = vld [vmem:[%s1 + $0xbd0] sm:$0xff]
        %v722 = vld [vmem:[%s1 + $0xbd8] sm:$0xff]
        %v723 = vld [vmem:[%s1 + $0xbe0] sm:$0xff]
        %v724 = vld [vmem:[%s1 + $0xbe8] sm:$0xff]
        %v725 = vld [vmem:[%s1 + $0xbf0] sm:$0xff]
        %v726 = vld [vmem:[%s1 + $0xbf8] sm:$0xff]
        %v727 = vld [vmem:[%s1 + $0xc00] sm:$0xff]
        %v728 = vld [vmem:[%s1 + $0xc08] sm:$0xff]
        %v729 = vld [vmem:[%s1 + $0xc10] sm:$0xff]
        %v730 = vld [vmem:[%s1 + $0xc18] sm:$0xff]
        %v731 = vld [vmem:[%s1 + $0xc20] sm:$0xff]
        %v732 = vld [vmem:[%s1 + $0xc28] sm:$0xff]
        %v733 = vld [vmem:[%s1 + $0xc30] sm:$0xff]
        %v734 = vld [vmem:[%s1 + $0xc38] sm:$0xff]
        %v735 = vld [vmem:[%s1 + $0xc40] sm:$0xff]
        %v736 = vld [vmem:[%s1 + $0xc48] sm:$0xff]
        %v737 = vld [vmem:[%s1 + $0xc50] sm:$0xff]
        %v738 = vld [vmem:[%s1 + $0xc58] sm:$0xff]
        %v739 = vld [vmem:[%s1 + $0xc60] sm:$0xff]
        %v740 = vld [vmem:[%s1 + $0xc68] sm:$0xff]
        %v741 = vld [vmem:[%s1 + $0xc70] sm:$0xff]
        %v742 = vld [vmem:[%s1 + $0xc78] sm:$0xff]
        %v743 = vld [vmem:[%s1 + $0xc80] sm:$0xff]
        %v744 = vld [vmem:[%s1 + $0xc88] sm:$0xff]
        %v745 = vld [vmem:[%s1 + $0xc90] sm:$0xff]
        %v746 = vld [vmem:[%s1 + $0xc98] sm:$0xff]
        %v747 = vld [vmem:[%s1 + $0xca0] sm:$0xff]
        %v748 = vld [vmem:[%s1 + $0xca8] sm:$0xff]
        %v749 = vld [vmem:[%s1 + $0xcb0] sm:$0xff]
        %v750 = vld [vmem:[%s1 + $0xcb8] sm:$0xff]
        %v751 = vld [vmem:[%s1 + $0xcc0] sm:$0xff]
        %v752 = vld [vmem:[%s1 + $0xcc8] sm:$0xff]
        %v753 = vld [vmem:[%s1 + $0xcd0] sm:$0xff]
        %v754 = vld [vmem:[%s1 + $0xcd8] sm:$0xff]
        %v755 = vld [vmem:[%s1 + $0xce0] sm:$0xff]
        %v756 = vld [vmem:[%s1 + $0xce8] sm:$0xff]
        %v757 = vld [vmem:[%s1 + $0xcf0] sm:$0xff]
        %v758 = vld [vmem:[%s1 + $0xcf8] sm:$0xff]
        %v759 = vld [vmem:[%s1 + $0xd00] sm:$0xff]
        %v760 = vld [vmem:[%s1 + $0xd08] sm:$0xff]
        %v761 = vld [vmem:[%s1 + $0xd10] sm:$0xff]
        %v762 = vld [vmem:[%s1 + $0xd18] sm:$0xff]
        %v763 = vld [vmem:[%s1 + $0xd20] sm:$0xff]
        %v764 = vld [vmem:[%s1 + $0xd28] sm:$0xff]
        %v765 = vld [vmem:[%s1 + $0xd30] sm:$0xff]
        %v766 = vld [vmem:[%s1 + $0xd38] sm:$0xff]
        %v767 = vld [vmem:[%s1 + $0xd40] sm:$0xff]
        %v768 = vld [vmem:[%s1 + $0xd48] sm:$0xff]
        %v769 = vld [vmem:[%s1 + $0xd50] sm:$0xff]
        %v770 = vld [vmem:[%s1 + $0xd58] sm:$0xff]
        %v771 = vld [vmem:[%s1 + $0xd60] sm:$0xff]
        %v772 = vld [vmem:[%s1 + $0xd68] sm:$0xff]
        %v773 = vld [vmem:[%s1 + $0xd70] sm:$0xff]
        %v774 = vld [vmem:[%s1 + $0xd78] sm:$0xff]
        %v775 = vld [vmem:[%s1 + $0xd80] sm:$0xff]
        %v776 = vld [vmem:[%s1 + $0xd88] sm:$0xff]
        %v777 = vld [vmem:[%s1 + $0xd90] sm:$0xff]
        %v778 = vld [vmem:[%s1 + $0xd98] sm:$0xff]
        %v779 = vld [vmem:[%s1 + $0xda0] sm:$0xff]
        %v780 = vld [vmem:[%s1 + $0xda8] sm:$0xff]
        %v781 = vld [vmem:[%s1 + $0xdb0] sm:$0xff]
        %v782 = vld [vmem:[%s1 + $0xdb8] sm:$0xff]
        %v783 = vld [vmem:[%s1 + $0xdc0] sm:$0xff]
        %v784 = vld [vmem:[%s1 + $0xdc8] sm:$0xff]
        %v785 = vld [vmem:[%s1 + $0xdd0] sm:$0xff]
        %v786 = vld [vmem:[%s1 + $0xdd8] sm:$0xff]
        %v787 = vld [vmem:[%s1 + $0xde0] sm:$0xff]
        %v788 = vld [vmem:[%s1 + $0xde8] sm:$0xff]
        %v789 = vld [vmem:[%s1 + $0xdf0] sm:$0xff]
        %v790 = vld [vmem:[%s1 + $0xdf8] sm:$0xff]
        %v791 = vld [vmem:[%s1 + $0xe00] sm:$0xff]
        %v792 = vld [vmem:[%s1 + $0xe08] sm:$0xff]
        %v793 = vld [vmem:[%s1 + $0xe10] sm:$0xff]
        %v794 = vld [vmem:[%s1 + $0xe18] sm:$0xff]
        %v795 = vld [vmem:[%s1 + $0xe20] sm:$0xff]
        %v796 = vld [vmem:[%s1 + $0xe28] sm:$0xff]
        %v797 = vld [vmem:[%s1 + $0xe30] sm:$0xff]
        %v798 = vld [vmem:[%s1 + $0xe38] sm:$0xff]
        %v799 = vld [vmem:[%s1 + $0xe40] sm:$0xff]
        %v800 = vld [vmem:[%s1 + $0xe48] sm:$0xff]
        %v801 = vld [vmem:[%s1 + $0xe50] sm:$0xff]
        %v802 = vld [vmem:[%s1 + $0xe58] sm:$0xff]
        %v803 = vld [vmem:[%s1 + $0xe60] sm:$0xff]
        %v804 = vld [vmem:[%s1 + $0xe68] sm:$0xff]
        %v805 = vld [vmem:[%s1 + $0xe70] sm:$0xff]
        %v806 = vld [vmem:[%s1 + $0xe78] sm:$0xff]
        %v807 = vld [vmem:[%s1 + $0xe80] sm:$0xff]
        %v808 = vld [vmem:[%s1 + $0xe88] sm:$0xff]
        %v809 = vld [vmem:[%s1 + $0xe90] sm:$0xff]
        %v810 = vld [vmem:[%s1 + $0xe98] sm:$0xff]
        %v811 = vld [vmem:[%s1 + $0xea0] sm:$0xff]
        %v812 = vld [vmem:[%s1 + $0xea8] sm:$0xff]
        %v813 = vld [vmem:[%s1 + $0xeb0] sm:$0xff]
        %v814 = vld [vmem:[%s1 + $0xeb8] sm:$0xff]
        %v815 = vld [vmem:[%s1 + $0xec0] sm:$0xff]
        %v816 = vld [vmem:[%s1 + $0xec8] sm:$0xff]
        %v817 = vld [vmem:[%s1 + $0xed0] sm:$0xff]
        %v818 = vld [vmem:[%s1 + $0xed8] sm:$0xff]
        %v819 = vld [vmem:[%s1 + $0xee0] sm:$0xff]
        %v820 = vld [vmem:[%s1 + $0xee8] sm:$0xff]
        %v821 = vld [vmem:[%s1 + $0xef0] sm:$0xff]
        %v822 = vld [vmem:[%s1 + $0xef8] sm:$0xff]
        %v823 = vld [vmem:[%s1 + $0xf00] sm:$0xff]
        %v824 = vld [vmem:[%s1 + $0xf08] sm:$0xff]
        %v825 = vld [vmem:[%s1 + $0xf10] sm:$0xff]
        %v826 = vld [vmem:[%s1 + $0xf18] sm:$0xff]
        %v827 = vld [vmem:[%s1 + $0xf20] sm:$0xff]
        %v828 = vld [vmem:[%s1 + $0xf28] sm:$0xff]
        %v829 = vld [vmem:[%s1 + $0xf30] sm:$0xff]
        %v830 = vld [vmem:[%s1 + $0xf38] sm:$0xff]
        %v831 = vld [vmem:[%s1 + $0xf40] sm:$0xff]
        %v832 = vld [vmem:[%s1 + $0xf48] sm:$0xff]
        %v833 = vld [vmem:[%s1 + $0xf50] sm:$0xff]
        %v834 = vld [vmem:[%s1 + $0xf58] sm:$0xff]
        %v835 = vld [vmem:[%s1 + $0xf60] sm:$0xff]
        %v836 = vld [vmem:[%s1 + $0xf68] sm:$0xff]
        %v837 = vld [vmem:[%s1 + $0xf70] sm:$0xff]
        %v838 = vld [vmem:[%s1 + $0xf78] sm:$0xff]
        %v839 = vld [vmem:[%s1 + $0xf80] sm:$0xff]
        %v840 = vld [vmem:[%s1 + $0xf88] sm:$0xff]
        %v841 = vld [vmem:[%s1 + $0xf90] sm:$0xff]
        %v842 = vld [vmem:[%s1 + $0xf98] sm:$0xff]
        %v843 = vld [vmem:[%s1 + $0xfa0] sm:$0xff]
        %v844 = vld [vmem:[%s1 + $0xfa8] sm:$0xff]
        %v845 = vld [vmem:[%s1 + $0xfb0] sm:$0xff]
        %v846 = vld [vmem:[%s1 + $0xfb8] sm:$0xff]
        %v847 = vld [vmem:[%s1 + $0xfc0] sm:$0xff]
        %v848 = vld [vmem:[%s1 + $0xfc8] sm:$0xff]
        %v849 = vld [vmem:[%s1 + $0xfd0] sm:$0xff]
        %v850 = vld [vmem:[%s1 + $0xfd8] sm:$0xff]
        %v851 = vld [vmem:[%s1 + $0xfe0] sm:$0xff]
        %v852 = vld [vmem:[%s1 + $0xfe8] sm:$0xff]
        %v853 = vld [vmem:[%s1 + $0xff0] sm:$0xff]
        %v854 = vld [vmem:[%s1 + $0xff8] sm:$0xff]
        %v919 = vunpack.c.l.b16 %v279
        %v920 = vunpack.c.h.b16 %v279
        %v921 = vunpack.c.l.b16 %v280
        %v922 = vunpack.c.h.b16 %v280
        %v923 = vunpack.c.l.b16 %v281
        %v924 = vunpack.c.h.b16 %v281
        %v925 = vunpack.c.l.b16 %v282
        %v926 = vunpack.c.h.b16 %v282
        %v927 = vunpack.c.l.b16 %v283
        %v928 = vunpack.c.h.b16 %v283
        %v929 = vunpack.c.l.b16 %v284
        %v930 = vunpack.c.h.b16 %v284
        %v931 = vunpack.c.l.b16 %v285
        %v932 = vunpack.c.h.b16 %v285
        %v933 = vunpack.c.l.b16 %v286
        %v934 = vunpack.c.h.b16 %v286
        %v935 = vunpack.c.l.b16 %v287
        %v936 = vunpack.c.h.b16 %v287
        %v937 = vunpack.c.l.b16 %v288
        %v938 = vunpack.c.h.b16 %v288
        %v939 = vunpack.c.l.b16 %v289
        %v940 = vunpack.c.h.b16 %v289
        %v941 = vunpack.c.l.b16 %v290
        %v942 = vunpack.c.h.b16 %v290
        %v943 = vunpack.c.l.b16 %v291
        %v944 = vunpack.c.h.b16 %v291
        %v945 = vunpack.c.l.b16 %v292
        %v946 = vunpack.c.h.b16 %v292
        %v947 = vunpack.c.l.b16 %v293
        %v948 = vunpack.c.h.b16 %v293
        %v949 = vunpack.c.l.b16 %v294
        %v950 = vunpack.c.h.b16 %v294
        %v951 = vunpack.c.l.b16 %v295
        %v952 = vunpack.c.h.b16 %v295
        %v953 = vunpack.c.l.b16 %v296
        %v954 = vunpack.c.h.b16 %v296
        %v955 = vunpack.c.l.b16 %v297
        %v956 = vunpack.c.h.b16 %v297
        %v957 = vunpack.c.l.b16 %v298
        %v958 = vunpack.c.h.b16 %v298
        %v959 = vunpack.c.l.b16 %v299
        %v960 = vunpack.c.h.b16 %v299
        %v961 = vunpack.c.l.b16 %v300
        %v962 = vunpack.c.h.b16 %v300
        %v963 = vunpack.c.l.b16 %v301
        %v964 = vunpack.c.h.b16 %v301
        %v965 = vunpack.c.l.b16 %v302
        %v966 = vunpack.c.h.b16 %v302
        %v967 = vunpack.c.l.b16 %v303
        %v968 = vunpack.c.h.b16 %v303
        %v969 = vunpack.c.l.b16 %v304
        %v970 = vunpack.c.h.b16 %v304
        %v971 = vunpack.c.l.b16 %v305
        %v972 = vunpack.c.h.b16 %v305
        %v973 = vunpack.c.l.b16 %v306
        %v974 = vunpack.c.h.b16 %v306
        %v975 = vunpack.c.l.b16 %v307
        %v976 = vunpack.c.h.b16 %v307
        %v977 = vunpack.c.l.b16 %v308
        %v978 = vunpack.c.h.b16 %v308
        %v979 = vunpack.c.l.b16 %v309
        %v980 = vunpack.c.h.b16 %v309
        %v981 = vunpack.c.l.b16 %v310
        %v982 = vunpack.c.h.b16 %v310
        %v983 = vunpack.c.l.b16 %v311
        %v984 = vunpack.c.h.b16 %v311
        %v985 = vunpack.c.l.b16 %v312
        %v986 = vunpack.c.h.b16 %v312
        %v987 = vunpack.c.l.b16 %v313
        %v988 = vunpack.c.h.b16 %v313
        %v989 = vunpack.c.l.b16 %v314
        %v990 = vunpack.c.h.b16 %v314
        %v991 = vunpack.c.l.b16 %v315
        %v992 = vunpack.c.h.b16 %v315
        %v993 = vunpack.c.l.b16 %v316
        %v994 = vunpack.c.h.b16 %v316
        %v995 = vunpack.c.l.b16 %v317
        %v996 = vunpack.c.h.b16 %v317
        %v997 = vunpack.c.l.b16 %v318
        %v998 = vunpack.c.h.b16 %v318
        %v999 = vunpack.c.l.b16 %v319
        %v1000 = vunpack.c.h.b16 %v319
        %v1001 = vunpack.c.l.b16 %v320
        %v1002 = vunpack.c.h.b16 %v320
        %v1003 = vunpack.c.l.b16 %v321
        %v1004 = vunpack.c.h.b16 %v321
        %v1005 = vunpack.c.l.b16 %v322
        %v1006 = vunpack.c.h.b16 %v322
        %v1007 = vunpack.c.l.b16 %v323
        %v1008 = vunpack.c.h.b16 %v323
        %v1009 = vunpack.c.l.b16 %v324
        %v1010 = vunpack.c.h.b16 %v324
        %v1011 = vunpack.c.l.b16 %v325
        %v1012 = vunpack.c.h.b16 %v325
        %v1013 = vunpack.c.l.b16 %v326
        %v1014 = vunpack.c.h.b16 %v326
        %v1015 = vunpack.c.l.b16 %v327
        %v1016 = vunpack.c.h.b16 %v327
        %v1017 = vunpack.c.l.b16 %v328
        %v1018 = vunpack.c.h.b16 %v328
        %v1019 = vunpack.c.l.b16 %v329
        %v1020 = vunpack.c.h.b16 %v329
        %v1021 = vunpack.c.l.b16 %v330
        %v1022 = vunpack.c.h.b16 %v330
        %v1023 = vunpack.c.l.b16 %v331
        %v1024 = vunpack.c.h.b16 %v331
        %v1025 = vunpack.c.l.b16 %v332
        %v1026 = vunpack.c.h.b16 %v332
        %v1027 = vunpack.c.l.b16 %v333
        %v1028 = vunpack.c.h.b16 %v333
        %v1029 = vunpack.c.l.b16 %v334
        %v1030 = vunpack.c.h.b16 %v334
        %v1031 = vunpack.c.l.b16 %v335
        %v1032 = vunpack.c.h.b16 %v335
        %v1033 = vunpack.c.l.b16 %v336
        %v1034 = vunpack.c.h.b16 %v336
        %v1035 = vunpack.c.l.b16 %v337
        %v1036 = vunpack.c.h.b16 %v337
        %v1037 = vunpack.c.l.b16 %v338
        %v1038 = vunpack.c.h.b16 %v338
        %v1039 = vunpack.c.l.b16 %v339
        %v1040 = vunpack.c.h.b16 %v339
        %v1041 = vunpack.c.l.b16 %v340
        %v1042 = vunpack.c.h.b16 %v340
        %v1043 = vunpack.c.l.b16 %v341
        %v1044 = vunpack.c.h.b16 %v341
        %v1045 = vunpack.c.l.b16 %v342
        %v1046 = vunpack.c.h.b16 %v342
        %v1047 = vpack.c.b16 %v927, %v919
        %v1048 = vpack.c.b16 %v928, %v920
        %v1049 = vpack.c.b16 %v929, %v921
        %v1050 = vpack.c.b16 %v930, %v922
        %v1051 = vpack.c.b16 %v931, %v923
        %v1052 = vpack.c.b16 %v932, %v924
        %v1053 = vpack.c.b16 %v933, %v925
        %v1054 = vpack.c.b16 %v934, %v926
        %v1055 = vpack.c.b16 %v943, %v935
        %v1056 = vpack.c.b16 %v944, %v936
        %v1057 = vpack.c.b16 %v945, %v937
        %v1058 = vpack.c.b16 %v946, %v938
        %v1059 = vpack.c.b16 %v947, %v939
        %v1060 = vpack.c.b16 %v948, %v940
        %v1061 = vpack.c.b16 %v949, %v941
        %v1062 = vpack.c.b16 %v950, %v942
        %v1063 = vpack.c.b16 %v959, %v951
        %v1064 = vpack.c.b16 %v960, %v952
        %v1065 = vpack.c.b16 %v961, %v953
        %v1066 = vpack.c.b16 %v962, %v954
        %v1067 = vpack.c.b16 %v963, %v955
        %v1068 = vpack.c.b16 %v964, %v956
        %v1069 = vpack.c.b16 %v965, %v957
        %v1070 = vpack.c.b16 %v966, %v958
        %v1071 = vpack.c.b16 %v975, %v967
        %v1072 = vpack.c.b16 %v976, %v968
        %v1073 = vpack.c.b16 %v977, %v969
        %v1074 = vpack.c.b16 %v978, %v970
        %v1075 = vpack.c.b16 %v979, %v971
        %v1076 = vpack.c.b16 %v980, %v972
        %v1077 = vpack.c.b16 %v981, %v973
        %v1078 = vpack.c.b16 %v982, %v974
        %v1079 = vpack.c.b16 %v991, %v983
        %v1080 = vpack.c.b16 %v992, %v984
        %v1081 = vpack.c.b16 %v993, %v985
        %v1082 = vpack.c.b16 %v994, %v986
        %v1083 = vpack.c.b16 %v995, %v987
        %v1084 = vpack.c.b16 %v996, %v988
        %v1085 = vpack.c.b16 %v997, %v989
        %v1086 = vpack.c.b16 %v998, %v990
        %v1087 = vpack.c.b16 %v1007, %v999
        %v1088 = vpack.c.b16 %v1008, %v1000
        %v1089 = vpack.c.b16 %v1009, %v1001
        %v1090 = vpack.c.b16 %v1010, %v1002
        %v1091 = vpack.c.b16 %v1011, %v1003
        %v1092 = vpack.c.b16 %v1012, %v1004
        %v1093 = vpack.c.b16 %v1013, %v1005
        %v1094 = vpack.c.b16 %v1014, %v1006
        %v1095 = vpack.c.b16 %v1023, %v1015
        %v1096 = vpack.c.b16 %v1024, %v1016
        %v1097 = vpack.c.b16 %v1025, %v1017
        %v1098 = vpack.c.b16 %v1026, %v1018
        %v1099 = vpack.c.b16 %v1027, %v1019
        %v1100 = vpack.c.b16 %v1028, %v1020
        %v1101 = vpack.c.b16 %v1029, %v1021
        %v1102 = vpack.c.b16 %v1030, %v1022
        %v1103 = vpack.c.b16 %v1039, %v1031
        %v1104 = vpack.c.b16 %v1040, %v1032
        %v1105 = vpack.c.b16 %v1041, %v1033
        %v1106 = vpack.c.b16 %v1042, %v1034
        %v1107 = vpack.c.b16 %v1043, %v1035
        %v1108 = vpack.c.b16 %v1044, %v1036
        %v1109 = vpack.c.b16 %v1045, %v1037
        %v1110 = vpack.c.b16 %v1046, %v1038
        %v1687 = vunpack.c.l.b16 %v343
        %v1688 = vunpack.c.h.b16 %v343
        %v1689 = vunpack.c.l.b16 %v344
        %v1690 = vunpack.c.h.b16 %v344
        %v1691 = vunpack.c.l.b16 %v345
        %v1692 = vunpack.c.h.b16 %v345
        %v1693 = vunpack.c.l.b16 %v346
        %v1694 = vunpack.c.h.b16 %v346
        %v1695 = vunpack.c.l.b16 %v347
        %v1696 = vunpack.c.h.b16 %v347
        %v1697 = vunpack.c.l.b16 %v348
        %v1698 = vunpack.c.h.b16 %v348
        %v1699 = vunpack.c.l.b16 %v349
        %v1700 = vunpack.c.h.b16 %v349
        %v1701 = vunpack.c.l.b16 %v350
        %v1702 = vunpack.c.h.b16 %v350
        %v1703 = vunpack.c.l.b16 %v351
        %v1704 = vunpack.c.h.b16 %v351
        %v1705 = vunpack.c.l.b16 %v352
        %v1706 = vunpack.c.h.b16 %v352
        %v1707 = vunpack.c.l.b16 %v353
        %v1708 = vunpack.c.h.b16 %v353
        %v1709 = vunpack.c.l.b16 %v354
        %v1710 = vunpack.c.h.b16 %v354
        %v1711 = vunpack.c.l.b16 %v355
        %v1712 = vunpack.c.h.b16 %v355
        %v1713 = vunpack.c.l.b16 %v356
        %v1714 = vunpack.c.h.b16 %v356
        %v1715 = vunpack.c.l.b16 %v357
        %v1716 = vunpack.c.h.b16 %v357
        %v1717 = vunpack.c.l.b16 %v358
        %v1718 = vunpack.c.h.b16 %v358
        %v1719 = vunpack.c.l.b16 %v359
        %v1720 = vunpack.c.h.b16 %v359
        %v1721 = vunpack.c.l.b16 %v360
        %v1722 = vunpack.c.h.b16 %v360
        %v1723 = vunpack.c.l.b16 %v361
        %v1724 = vunpack.c.h.b16 %v361
        %v1725 = vunpack.c.l.b16 %v362
        %v1726 = vunpack.c.h.b16 %v362
        %v1727 = vunpack.c.l.b16 %v363
        %v1728 = vunpack.c.h.b16 %v363
        %v1729 = vunpack.c.l.b16 %v364
        %v1730 = vunpack.c.h.b16 %v364
        %v1731 = vunpack.c.l.b16 %v365
        %v1732 = vunpack.c.h.b16 %v365
        %v1733 = vunpack.c.l.b16 %v366
        %v1734 = vunpack.c.h.b16 %v366
        %v1735 = vunpack.c.l.b16 %v367
        %v1736 = vunpack.c.h.b16 %v367
        %v1737 = vunpack.c.l.b16 %v368
        %v1738 = vunpack.c.h.b16 %v368
        %v1739 = vunpack.c.l.b16 %v369
        %v1740 = vunpack.c.h.b16 %v369
        %v1741 = vunpack.c.l.b16 %v370
        %v1742 = vunpack.c.h.b16 %v370
        %v1743 = vunpack.c.l.b16 %v371
        %v1744 = vunpack.c.h.b16 %v371
        %v1745 = vunpack.c.l.b16 %v372
        %v1746 = vunpack.c.h.b16 %v372
        %v1747 = vunpack.c.l.b16 %v373
        %v1748 = vunpack.c.h.b16 %v373
        %v1749 = vunpack.c.l.b16 %v374
        %v1750 = vunpack.c.h.b16 %v374
        %v1751 = vunpack.c.l.b16 %v375
        %v1752 = vunpack.c.h.b16 %v375
        %v1753 = vunpack.c.l.b16 %v376
        %v1754 = vunpack.c.h.b16 %v376
        %v1755 = vunpack.c.l.b16 %v377
        %v1756 = vunpack.c.h.b16 %v377
        %v1757 = vunpack.c.l.b16 %v378
        %v1758 = vunpack.c.h.b16 %v378
        %v1759 = vunpack.c.l.b16 %v379
        %v1760 = vunpack.c.h.b16 %v379
        %v1761 = vunpack.c.l.b16 %v380
        %v1762 = vunpack.c.h.b16 %v380
        %v1763 = vunpack.c.l.b16 %v381
        %v1764 = vunpack.c.h.b16 %v381
        %v1765 = vunpack.c.l.b16 %v382
        %v1766 = vunpack.c.h.b16 %v382
        %v1767 = vunpack.c.l.b16 %v383
        %v1768 = vunpack.c.h.b16 %v383
        %v1769 = vunpack.c.l.b16 %v384
        %v1770 = vunpack.c.h.b16 %v384
        %v1771 = vunpack.c.l.b16 %v385
        %v1772 = vunpack.c.h.b16 %v385
        %v1773 = vunpack.c.l.b16 %v386
        %v1774 = vunpack.c.h.b16 %v386
        %v1775 = vunpack.c.l.b16 %v387
        %v1776 = vunpack.c.h.b16 %v387
        %v1777 = vunpack.c.l.b16 %v388
        %v1778 = vunpack.c.h.b16 %v388
        %v1779 = vunpack.c.l.b16 %v389
        %v1780 = vunpack.c.h.b16 %v389
        %v1781 = vunpack.c.l.b16 %v390
        %v1782 = vunpack.c.h.b16 %v390
        %v1783 = vunpack.c.l.b16 %v391
        %v1784 = vunpack.c.h.b16 %v391
        %v1785 = vunpack.c.l.b16 %v392
        %v1786 = vunpack.c.h.b16 %v392
        %v1787 = vunpack.c.l.b16 %v393
        %v1788 = vunpack.c.h.b16 %v393
        %v1789 = vunpack.c.l.b16 %v394
        %v1790 = vunpack.c.h.b16 %v394
        %v1791 = vunpack.c.l.b16 %v395
        %v1792 = vunpack.c.h.b16 %v395
        %v1793 = vunpack.c.l.b16 %v396
        %v1794 = vunpack.c.h.b16 %v396
        %v1795 = vunpack.c.l.b16 %v397
        %v1796 = vunpack.c.h.b16 %v397
        %v1797 = vunpack.c.l.b16 %v398
        %v1798 = vunpack.c.h.b16 %v398
        %v1799 = vunpack.c.l.b16 %v399
        %v1800 = vunpack.c.h.b16 %v399
        %v1801 = vunpack.c.l.b16 %v400
        %v1802 = vunpack.c.h.b16 %v400
        %v1803 = vunpack.c.l.b16 %v401
        %v1804 = vunpack.c.h.b16 %v401
        %v1805 = vunpack.c.l.b16 %v402
        %v1806 = vunpack.c.h.b16 %v402
        %v1807 = vunpack.c.l.b16 %v403
        %v1808 = vunpack.c.h.b16 %v403
        %v1809 = vunpack.c.l.b16 %v404
        %v1810 = vunpack.c.h.b16 %v404
        %v1811 = vunpack.c.l.b16 %v405
        %v1812 = vunpack.c.h.b16 %v405
        %v1813 = vunpack.c.l.b16 %v406
        %v1814 = vunpack.c.h.b16 %v406
        %v1815 = vunpack.c.l.b16 %v407
        %v1816 = vunpack.c.h.b16 %v407
        %v1817 = vunpack.c.l.b16 %v408
        %v1818 = vunpack.c.h.b16 %v408
        %v1819 = vunpack.c.l.b16 %v409
        %v1820 = vunpack.c.h.b16 %v409
        %v1821 = vunpack.c.l.b16 %v410
        %v1822 = vunpack.c.h.b16 %v410
        %v1823 = vunpack.c.l.b16 %v411
        %v1824 = vunpack.c.h.b16 %v411
        %v1825 = vunpack.c.l.b16 %v412
        %v1826 = vunpack.c.h.b16 %v412
        %v1827 = vunpack.c.l.b16 %v413
        %v1828 = vunpack.c.h.b16 %v413
        %v1829 = vunpack.c.l.b16 %v414
        %v1830 = vunpack.c.h.b16 %v414
        %v1831 = vunpack.c.l.b16 %v415
        %v1832 = vunpack.c.h.b16 %v415
        %v1833 = vunpack.c.l.b16 %v416
        %v1834 = vunpack.c.h.b16 %v416
        %v1835 = vunpack.c.l.b16 %v417
        %v1836 = vunpack.c.h.b16 %v417
        %v1837 = vunpack.c.l.b16 %v418
        %v1838 = vunpack.c.h.b16 %v418
        %v1839 = vunpack.c.l.b16 %v419
        %v1840 = vunpack.c.h.b16 %v419
        %v1841 = vunpack.c.l.b16 %v420
        %v1842 = vunpack.c.h.b16 %v420
        %v1843 = vunpack.c.l.b16 %v421
        %v1844 = vunpack.c.h.b16 %v421
        %v1845 = vunpack.c.l.b16 %v422
        %v1846 = vunpack.c.h.b16 %v422
        %v1847 = vunpack.c.l.b16 %v423
        %v1848 = vunpack.c.h.b16 %v423
        %v1849 = vunpack.c.l.b16 %v424
        %v1850 = vunpack.c.h.b16 %v424
        %v1851 = vunpack.c.l.b16 %v425
        %v1852 = vunpack.c.h.b16 %v425
        %v1853 = vunpack.c.l.b16 %v426
        %v1854 = vunpack.c.h.b16 %v426
        %v1855 = vunpack.c.l.b16 %v427
        %v1856 = vunpack.c.h.b16 %v427
        %v1857 = vunpack.c.l.b16 %v428
        %v1858 = vunpack.c.h.b16 %v428
        %v1859 = vunpack.c.l.b16 %v429
        %v1860 = vunpack.c.h.b16 %v429
        %v1861 = vunpack.c.l.b16 %v430
        %v1862 = vunpack.c.h.b16 %v430
        %v1863 = vunpack.c.l.b16 %v431
        %v1864 = vunpack.c.h.b16 %v431
        %v1865 = vunpack.c.l.b16 %v432
        %v1866 = vunpack.c.h.b16 %v432
        %v1867 = vunpack.c.l.b16 %v433
        %v1868 = vunpack.c.h.b16 %v433
        %v1869 = vunpack.c.l.b16 %v434
        %v1870 = vunpack.c.h.b16 %v434
        %v1871 = vunpack.c.l.b16 %v435
        %v1872 = vunpack.c.h.b16 %v435
        %v1873 = vunpack.c.l.b16 %v436
        %v1874 = vunpack.c.h.b16 %v436
        %v1875 = vunpack.c.l.b16 %v437
        %v1876 = vunpack.c.h.b16 %v437
        %v1877 = vunpack.c.l.b16 %v438
        %v1878 = vunpack.c.h.b16 %v438
        %v1879 = vunpack.c.l.b16 %v439
        %v1880 = vunpack.c.h.b16 %v439
        %v1881 = vunpack.c.l.b16 %v440
        %v1882 = vunpack.c.h.b16 %v440
        %v1883 = vunpack.c.l.b16 %v441
        %v1884 = vunpack.c.h.b16 %v441
        %v1885 = vunpack.c.l.b16 %v442
        %v1886 = vunpack.c.h.b16 %v442
        %v1887 = vunpack.c.l.b16 %v443
        %v1888 = vunpack.c.h.b16 %v443
        %v1889 = vunpack.c.l.b16 %v444
        %v1890 = vunpack.c.h.b16 %v444
        %v1891 = vunpack.c.l.b16 %v445
        %v1892 = vunpack.c.h.b16 %v445
        %v1893 = vunpack.c.l.b16 %v446
        %v1894 = vunpack.c.h.b16 %v446
        %v1895 = vunpack.c.l.b16 %v447
        %v1896 = vunpack.c.h.b16 %v447
        %v1897 = vunpack.c.l.b16 %v448
        %v1898 = vunpack.c.h.b16 %v448
        %v1899 = vunpack.c.l.b16 %v449
        %v1900 = vunpack.c.h.b16 %v449
        %v1901 = vunpack.c.l.b16 %v450
        %v1902 = vunpack.c.h.b16 %v450
        %v1903 = vunpack.c.l.b16 %v451
        %v1904 = vunpack.c.h.b16 %v451
        %v1905 = vunpack.c.l.b16 %v452
        %v1906 = vunpack.c.h.b16 %v452
        %v1907 = vunpack.c.l.b16 %v453
        %v1908 = vunpack.c.h.b16 %v453
        %v1909 = vunpack.c.l.b16 %v454
        %v1910 = vunpack.c.h.b16 %v454
        %v1911 = vunpack.c.l.b16 %v455
        %v1912 = vunpack.c.h.b16 %v455
        %v1913 = vunpack.c.l.b16 %v456
        %v1914 = vunpack.c.h.b16 %v456
        %v1915 = vunpack.c.l.b16 %v457
        %v1916 = vunpack.c.h.b16 %v457
        %v1917 = vunpack.c.l.b16 %v458
        %v1918 = vunpack.c.h.b16 %v458
        %v1919 = vunpack.c.l.b16 %v459
        %v1920 = vunpack.c.h.b16 %v459
        %v1921 = vunpack.c.l.b16 %v460
        %v1922 = vunpack.c.h.b16 %v460
        %v1923 = vunpack.c.l.b16 %v461
        %v1924 = vunpack.c.h.b16 %v461
        %v1925 = vunpack.c.l.b16 %v462
        %v1926 = vunpack.c.h.b16 %v462
        %v1927 = vunpack.c.l.b16 %v463
        %v1928 = vunpack.c.h.b16 %v463
        %v1929 = vunpack.c.l.b16 %v464
        %v1930 = vunpack.c.h.b16 %v464
        %v1931 = vunpack.c.l.b16 %v465
        %v1932 = vunpack.c.h.b16 %v465
        %v1933 = vunpack.c.l.b16 %v466
        %v1934 = vunpack.c.h.b16 %v466
        %v1935 = vunpack.c.l.b16 %v467
        %v1936 = vunpack.c.h.b16 %v467
        %v1937 = vunpack.c.l.b16 %v468
        %v1938 = vunpack.c.h.b16 %v468
        %v1939 = vunpack.c.l.b16 %v469
        %v1940 = vunpack.c.h.b16 %v469
        %v1941 = vunpack.c.l.b16 %v470
        %v1942 = vunpack.c.h.b16 %v470
        %v1943 = vunpack.c.l.b16 %v471
        %v1944 = vunpack.c.h.b16 %v471
        %v1945 = vunpack.c.l.b16 %v472
        %v1946 = vunpack.c.h.b16 %v472
        %v1947 = vunpack.c.l.b16 %v473
        %v1948 = vunpack.c.h.b16 %v473
        %v1949 = vunpack.c.l.b16 %v474
        %v1950 = vunpack.c.h.b16 %v474
        %v1951 = vunpack.c.l.b16 %v475
        %v1952 = vunpack.c.h.b16 %v475
        %v1953 = vunpack.c.l.b16 %v476
        %v1954 = vunpack.c.h.b16 %v476
        %v1955 = vunpack.c.l.b16 %v477
        %v1956 = vunpack.c.h.b16 %v477
        %v1957 = vunpack.c.l.b16 %v478
        %v1958 = vunpack.c.h.b16 %v478
        %v1959 = vunpack.c.l.b16 %v479
        %v1960 = vunpack.c.h.b16 %v479
        %v1961 = vunpack.c.l.b16 %v480
        %v1962 = vunpack.c.h.b16 %v480
        %v1963 = vunpack.c.l.b16 %v481
        %v1964 = vunpack.c.h.b16 %v481
        %v1965 = vunpack.c.l.b16 %v482
        %v1966 = vunpack.c.h.b16 %v482
        %v1967 = vunpack.c.l.b16 %v483
        %v1968 = vunpack.c.h.b16 %v483
        %v1969 = vunpack.c.l.b16 %v484
        %v1970 = vunpack.c.h.b16 %v484
        %v1971 = vunpack.c.l.b16 %v485
        %v1972 = vunpack.c.h.b16 %v485
        %v1973 = vunpack.c.l.b16 %v486
        %v1974 = vunpack.c.h.b16 %v486
        %v1975 = vunpack.c.l.b16 %v487
        %v1976 = vunpack.c.h.b16 %v487
        %v1977 = vunpack.c.l.b16 %v488
        %v1978 = vunpack.c.h.b16 %v488
        %v1979 = vunpack.c.l.b16 %v489
        %v1980 = vunpack.c.h.b16 %v489
        %v1981 = vunpack.c.l.b16 %v490
        %v1982 = vunpack.c.h.b16 %v490
        %v1983 = vunpack.c.l.b16 %v491
        %v1984 = vunpack.c.h.b16 %v491
        %v1985 = vunpack.c.l.b16 %v492
        %v1986 = vunpack.c.h.b16 %v492
        %v1987 = vunpack.c.l.b16 %v493
        %v1988 = vunpack.c.h.b16 %v493
        %v1989 = vunpack.c.l.b16 %v494
        %v1990 = vunpack.c.h.b16 %v494
        %v1991 = vunpack.c.l.b16 %v495
        %v1992 = vunpack.c.h.b16 %v495
        %v1993 = vunpack.c.l.b16 %v496
        %v1994 = vunpack.c.h.b16 %v496
        %v1995 = vunpack.c.l.b16 %v497
        %v1996 = vunpack.c.h.b16 %v497
        %v1997 = vunpack.c.l.b16 %v498
        %v1998 = vunpack.c.h.b16 %v498
        %v1999 = vunpack.c.l.b16 %v499
        %v2000 = vunpack.c.h.b16 %v499
        %v2001 = vunpack.c.l.b16 %v500
        %v2002 = vunpack.c.h.b16 %v500
        %v2003 = vunpack.c.l.b16 %v501
        %v2004 = vunpack.c.h.b16 %v501
        %v2005 = vunpack.c.l.b16 %v502
        %v2006 = vunpack.c.h.b16 %v502
        %v2007 = vunpack.c.l.b16 %v503
        %v2008 = vunpack.c.h.b16 %v503
        %v2009 = vunpack.c.l.b16 %v504
        %v2010 = vunpack.c.h.b16 %v504
        %v2011 = vunpack.c.l.b16 %v505
        %v2012 = vunpack.c.h.b16 %v505
        %v2013 = vunpack.c.l.b16 %v506
        %v2014 = vunpack.c.h.b16 %v506
        %v2015 = vunpack.c.l.b16 %v507
        %v2016 = vunpack.c.h.b16 %v507
        %v2017 = vunpack.c.l.b16 %v508
        %v2018 = vunpack.c.h.b16 %v508
        %v2019 = vunpack.c.l.b16 %v509
        %v2020 = vunpack.c.h.b16 %v509
        %v2021 = vunpack.c.l.b16 %v510
        %v2022 = vunpack.c.h.b16 %v510
        %v2023 = vunpack.c.l.b16 %v511
        %v2024 = vunpack.c.h.b16 %v511
        %v2025 = vunpack.c.l.b16 %v512
        %v2026 = vunpack.c.h.b16 %v512
        %v2027 = vunpack.c.l.b16 %v513
        %v2028 = vunpack.c.h.b16 %v513
        %v2029 = vunpack.c.l.b16 %v514
        %v2030 = vunpack.c.h.b16 %v514
        %v2031 = vunpack.c.l.b16 %v515
        %v2032 = vunpack.c.h.b16 %v515
        %v2033 = vunpack.c.l.b16 %v516
        %v2034 = vunpack.c.h.b16 %v516
        %v2035 = vunpack.c.l.b16 %v517
        %v2036 = vunpack.c.h.b16 %v517
        %v2037 = vunpack.c.l.b16 %v518
        %v2038 = vunpack.c.h.b16 %v518
        %v2039 = vunpack.c.l.b16 %v519
        %v2040 = vunpack.c.h.b16 %v519
        %v2041 = vunpack.c.l.b16 %v520
        %v2042 = vunpack.c.h.b16 %v520
        %v2043 = vunpack.c.l.b16 %v521
        %v2044 = vunpack.c.h.b16 %v521
        %v2045 = vunpack.c.l.b16 %v522
        %v2046 = vunpack.c.h.b16 %v522
        %v2047 = vunpack.c.l.b16 %v523
        %v2048 = vunpack.c.h.b16 %v523
        %v2049 = vunpack.c.l.b16 %v524
        %v2050 = vunpack.c.h.b16 %v524
        %v2051 = vunpack.c.l.b16 %v525
        %v2052 = vunpack.c.h.b16 %v525
        %v2053 = vunpack.c.l.b16 %v526
        %v2054 = vunpack.c.h.b16 %v526
        %v2055 = vunpack.c.l.b16 %v527
        %v2056 = vunpack.c.h.b16 %v527
        %v2057 = vunpack.c.l.b16 %v528
        %v2058 = vunpack.c.h.b16 %v528
        %v2059 = vunpack.c.l.b16 %v529
        %v2060 = vunpack.c.h.b16 %v529
        %v2061 = vunpack.c.l.b16 %v530
        %v2062 = vunpack.c.h.b16 %v530
        %v2063 = vunpack.c.l.b16 %v531
        %v2064 = vunpack.c.h.b16 %v531
        %v2065 = vunpack.c.l.b16 %v532
        %v2066 = vunpack.c.h.b16 %v532
        %v2067 = vunpack.c.l.b16 %v533
        %v2068 = vunpack.c.h.b16 %v533
        %v2069 = vunpack.c.l.b16 %v534
        %v2070 = vunpack.c.h.b16 %v534
        %v2071 = vunpack.c.l.b16 %v535
        %v2072 = vunpack.c.h.b16 %v535
        %v2073 = vunpack.c.l.b16 %v536
        %v2074 = vunpack.c.h.b16 %v536
        %v2075 = vunpack.c.l.b16 %v537
        %v2076 = vunpack.c.h.b16 %v537
        %v2077 = vunpack.c.l.b16 %v538
        %v2078 = vunpack.c.h.b16 %v538
        %v2079 = vunpack.c.l.b16 %v539
        %v2080 = vunpack.c.h.b16 %v539
        %v2081 = vunpack.c.l.b16 %v540
        %v2082 = vunpack.c.h.b16 %v540
        %v2083 = vunpack.c.l.b16 %v541
        %v2084 = vunpack.c.h.b16 %v541
        %v2085 = vunpack.c.l.b16 %v542
        %v2086 = vunpack.c.h.b16 %v542
        %v2087 = vunpack.c.l.b16 %v543
        %v2088 = vunpack.c.h.b16 %v543
        %v2089 = vunpack.c.l.b16 %v544
        %v2090 = vunpack.c.h.b16 %v544
        %v2091 = vunpack.c.l.b16 %v545
        %v2092 = vunpack.c.h.b16 %v545
        %v2093 = vunpack.c.l.b16 %v546
        %v2094 = vunpack.c.h.b16 %v546
        %v2095 = vunpack.c.l.b16 %v547
        %v2096 = vunpack.c.h.b16 %v547
        %v2097 = vunpack.c.l.b16 %v548
        %v2098 = vunpack.c.h.b16 %v548
        %v2099 = vunpack.c.l.b16 %v549
        %v2100 = vunpack.c.h.b16 %v549
        %v2101 = vunpack.c.l.b16 %v550
        %v2102 = vunpack.c.h.b16 %v550
        %v2103 = vunpack.c.l.b16 %v551
        %v2104 = vunpack.c.h.b16 %v551
        %v2105 = vunpack.c.l.b16 %v552
        %v2106 = vunpack.c.h.b16 %v552
        %v2107 = vunpack.c.l.b16 %v553
        %v2108 = vunpack.c.h.b16 %v553
        %v2109 = vunpack.c.l.b16 %v554
        %v2110 = vunpack.c.h.b16 %v554
        %v2111 = vunpack.c.l.b16 %v555
        %v2112 = vunpack.c.h.b16 %v555
        %v2113 = vunpack.c.l.b16 %v556
        %v2114 = vunpack.c.h.b16 %v556
        %v2115 = vunpack.c.l.b16 %v557
        %v2116 = vunpack.c.h.b16 %v557
        %v2117 = vunpack.c.l.b16 %v558
        %v2118 = vunpack.c.h.b16 %v558
        %v2119 = vunpack.c.l.b16 %v559
        %v2120 = vunpack.c.h.b16 %v559
        %v2121 = vunpack.c.l.b16 %v560
        %v2122 = vunpack.c.h.b16 %v560
        %v2123 = vunpack.c.l.b16 %v561
        %v2124 = vunpack.c.h.b16 %v561
        %v2125 = vunpack.c.l.b16 %v562
        %v2126 = vunpack.c.h.b16 %v562
        %v2127 = vunpack.c.l.b16 %v563
        %v2128 = vunpack.c.h.b16 %v563
        %v2129 = vunpack.c.l.b16 %v564
        %v2130 = vunpack.c.h.b16 %v564
        %v2131 = vunpack.c.l.b16 %v565
        %v2132 = vunpack.c.h.b16 %v565
        %v2133 = vunpack.c.l.b16 %v566
        %v2134 = vunpack.c.h.b16 %v566
        %v2135 = vunpack.c.l.b16 %v567
        %v2136 = vunpack.c.h.b16 %v567
        %v2137 = vunpack.c.l.b16 %v568
        %v2138 = vunpack.c.h.b16 %v568
        %v2139 = vunpack.c.l.b16 %v569
        %v2140 = vunpack.c.h.b16 %v569
        %v2141 = vunpack.c.l.b16 %v570
        %v2142 = vunpack.c.h.b16 %v570
        %v2143 = vunpack.c.l.b16 %v571
        %v2144 = vunpack.c.h.b16 %v571
        %v2145 = vunpack.c.l.b16 %v572
        %v2146 = vunpack.c.h.b16 %v572
        %v2147 = vunpack.c.l.b16 %v573
        %v2148 = vunpack.c.h.b16 %v573
        %v2149 = vunpack.c.l.b16 %v574
        %v2150 = vunpack.c.h.b16 %v574
        %v2151 = vunpack.c.l.b16 %v575
        %v2152 = vunpack.c.h.b16 %v575
        %v2153 = vunpack.c.l.b16 %v576
        %v2154 = vunpack.c.h.b16 %v576
        %v2155 = vunpack.c.l.b16 %v577
        %v2156 = vunpack.c.h.b16 %v577
        %v2157 = vunpack.c.l.b16 %v578
        %v2158 = vunpack.c.h.b16 %v578
        %v2159 = vunpack.c.l.b16 %v579
        %v2160 = vunpack.c.h.b16 %v579
        %v2161 = vunpack.c.l.b16 %v580
        %v2162 = vunpack.c.h.b16 %v580
        %v2163 = vunpack.c.l.b16 %v581
        %v2164 = vunpack.c.h.b16 %v581
        %v2165 = vunpack.c.l.b16 %v582
        %v2166 = vunpack.c.h.b16 %v582
        %v2167 = vunpack.c.l.b16 %v583
        %v2168 = vunpack.c.h.b16 %v583
        %v2169 = vunpack.c.l.b16 %v584
        %v2170 = vunpack.c.h.b16 %v584
        %v2171 = vunpack.c.l.b16 %v585
        %v2172 = vunpack.c.h.b16 %v585
        %v2173 = vunpack.c.l.b16 %v586
        %v2174 = vunpack.c.h.b16 %v586
        %v2175 = vunpack.c.l.b16 %v587
        %v2176 = vunpack.c.h.b16 %v587
        %v2177 = vunpack.c.l.b16 %v588
        %v2178 = vunpack.c.h.b16 %v588
        %v2179 = vunpack.c.l.b16 %v589
        %v2180 = vunpack.c.h.b16 %v589
        %v2181 = vunpack.c.l.b16 %v590
        %v2182 = vunpack.c.h.b16 %v590
        %v2183 = vunpack.c.l.b16 %v591
        %v2184 = vunpack.c.h.b16 %v591
        %v2185 = vunpack.c.l.b16 %v592
        %v2186 = vunpack.c.h.b16 %v592
        %v2187 = vunpack.c.l.b16 %v593
        %v2188 = vunpack.c.h.b16 %v593
        %v2189 = vunpack.c.l.b16 %v594
        %v2190 = vunpack.c.h.b16 %v594
        %v2191 = vunpack.c.l.b16 %v595
        %v2192 = vunpack.c.h.b16 %v595
        %v2193 = vunpack.c.l.b16 %v596
        %v2194 = vunpack.c.h.b16 %v596
        %v2195 = vunpack.c.l.b16 %v597
        %v2196 = vunpack.c.h.b16 %v597
        %v2197 = vunpack.c.l.b16 %v598
        %v2198 = vunpack.c.h.b16 %v598
        %v2199 = vunpack.c.l.b16 %v599
        %v2200 = vunpack.c.h.b16 %v599
        %v2201 = vunpack.c.l.b16 %v600
        %v2202 = vunpack.c.h.b16 %v600
        %v2203 = vunpack.c.l.b16 %v601
        %v2204 = vunpack.c.h.b16 %v601
        %v2205 = vunpack.c.l.b16 %v602
        %v2206 = vunpack.c.h.b16 %v602
        %v2207 = vunpack.c.l.b16 %v603
        %v2208 = vunpack.c.h.b16 %v603
        %v2209 = vunpack.c.l.b16 %v604
        %v2210 = vunpack.c.h.b16 %v604
        %v2211 = vunpack.c.l.b16 %v605
        %v2212 = vunpack.c.h.b16 %v605
        %v2213 = vunpack.c.l.b16 %v606
        %v2214 = vunpack.c.h.b16 %v606
        %v2215 = vunpack.c.l.b16 %v607
        %v2216 = vunpack.c.h.b16 %v607
        %v2217 = vunpack.c.l.b16 %v608
        %v2218 = vunpack.c.h.b16 %v608
        %v2219 = vunpack.c.l.b16 %v609
        %v2220 = vunpack.c.h.b16 %v609
        %v2221 = vunpack.c.l.b16 %v610
        %v2222 = vunpack.c.h.b16 %v610
        %v2223 = vunpack.c.l.b16 %v611
        %v2224 = vunpack.c.h.b16 %v611
        %v2225 = vunpack.c.l.b16 %v612
        %v2226 = vunpack.c.h.b16 %v612
        %v2227 = vunpack.c.l.b16 %v613
        %v2228 = vunpack.c.h.b16 %v613
        %v2229 = vunpack.c.l.b16 %v614
        %v2230 = vunpack.c.h.b16 %v614
        %v2231 = vunpack.c.l.b16 %v615
        %v2232 = vunpack.c.h.b16 %v615
        %v2233 = vunpack.c.l.b16 %v616
        %v2234 = vunpack.c.h.b16 %v616
        %v2235 = vunpack.c.l.b16 %v617
        %v2236 = vunpack.c.h.b16 %v617
        %v2237 = vunpack.c.l.b16 %v618
        %v2238 = vunpack.c.h.b16 %v618
        %v2239 = vunpack.c.l.b16 %v619
        %v2240 = vunpack.c.h.b16 %v619
        %v2241 = vunpack.c.l.b16 %v620
        %v2242 = vunpack.c.h.b16 %v620
        %v2243 = vunpack.c.l.b16 %v621
        %v2244 = vunpack.c.h.b16 %v621
        %v2245 = vunpack.c.l.b16 %v622
        %v2246 = vunpack.c.h.b16 %v622
        %v2247 = vunpack.c.l.b16 %v623
        %v2248 = vunpack.c.h.b16 %v623
        %v2249 = vunpack.c.l.b16 %v624
        %v2250 = vunpack.c.h.b16 %v624
        %v2251 = vunpack.c.l.b16 %v625
        %v2252 = vunpack.c.h.b16 %v625
        %v2253 = vunpack.c.l.b16 %v626
        %v2254 = vunpack.c.h.b16 %v626
        %v2255 = vunpack.c.l.b16 %v627
        %v2256 = vunpack.c.h.b16 %v627
        %v2257 = vunpack.c.l.b16 %v628
        %v2258 = vunpack.c.h.b16 %v628
        %v2259 = vunpack.c.l.b16 %v629
        %v2260 = vunpack.c.h.b16 %v629
        %v2261 = vunpack.c.l.b16 %v630
        %v2262 = vunpack.c.h.b16 %v630
        %v2263 = vunpack.c.l.b16 %v631
        %v2264 = vunpack.c.h.b16 %v631
        %v2265 = vunpack.c.l.b16 %v632
        %v2266 = vunpack.c.h.b16 %v632
        %v2267 = vunpack.c.l.b16 %v633
        %v2268 = vunpack.c.h.b16 %v633
        %v2269 = vunpack.c.l.b16 %v634
        %v2270 = vunpack.c.h.b16 %v634
        %v2271 = vunpack.c.l.b16 %v635
        %v2272 = vunpack.c.h.b16 %v635
        %v2273 = vunpack.c.l.b16 %v636
        %v2274 = vunpack.c.h.b16 %v636
        %v2275 = vunpack.c.l.b16 %v637
        %v2276 = vunpack.c.h.b16 %v637
        %v2277 = vunpack.c.l.b16 %v638
        %v2278 = vunpack.c.h.b16 %v638
        %v2279 = vunpack.c.l.b16 %v639
        %v2280 = vunpack.c.h.b16 %v639
        %v2281 = vunpack.c.l.b16 %v640
        %v2282 = vunpack.c.h.b16 %v640
        %v2283 = vunpack.c.l.b16 %v641
        %v2284 = vunpack.c.h.b16 %v641
        %v2285 = vunpack.c.l.b16 %v642
        %v2286 = vunpack.c.h.b16 %v642
        %v2287 = vunpack.c.l.b16 %v643
        %v2288 = vunpack.c.h.b16 %v643
        %v2289 = vunpack.c.l.b16 %v644
        %v2290 = vunpack.c.h.b16 %v644
        %v2291 = vunpack.c.l.b16 %v645
        %v2292 = vunpack.c.h.b16 %v645
        %v2293 = vunpack.c.l.b16 %v646
        %v2294 = vunpack.c.h.b16 %v646
        %v2295 = vunpack.c.l.b16 %v647
        %v2296 = vunpack.c.h.b16 %v647
        %v2297 = vunpack.c.l.b16 %v648
        %v2298 = vunpack.c.h.b16 %v648
        %v2299 = vunpack.c.l.b16 %v649
        %v2300 = vunpack.c.h.b16 %v649
        %v2301 = vunpack.c.l.b16 %v650
        %v2302 = vunpack.c.h.b16 %v650
        %v2303 = vunpack.c.l.b16 %v651
        %v2304 = vunpack.c.h.b16 %v651
        %v2305 = vunpack.c.l.b16 %v652
        %v2306 = vunpack.c.h.b16 %v652
        %v2307 = vunpack.c.l.b16 %v653
        %v2308 = vunpack.c.h.b16 %v653
        %v2309 = vunpack.c.l.b16 %v654
        %v2310 = vunpack.c.h.b16 %v654
        %v2311 = vunpack.c.l.b16 %v655
        %v2312 = vunpack.c.h.b16 %v655
        %v2313 = vunpack.c.l.b16 %v656
        %v2314 = vunpack.c.h.b16 %v656
        %v2315 = vunpack.c.l.b16 %v657
        %v2316 = vunpack.c.h.b16 %v657
        %v2317 = vunpack.c.l.b16 %v658
        %v2318 = vunpack.c.h.b16 %v658
        %v2319 = vunpack.c.l.b16 %v659
        %v2320 = vunpack.c.h.b16 %v659
        %v2321 = vunpack.c.l.b16 %v660
        %v2322 = vunpack.c.h.b16 %v660
        %v2323 = vunpack.c.l.b16 %v661
        %v2324 = vunpack.c.h.b16 %v661
        %v2325 = vunpack.c.l.b16 %v662
        %v2326 = vunpack.c.h.b16 %v662
        %v2327 = vunpack.c.l.b16 %v663
        %v2328 = vunpack.c.h.b16 %v663
        %v2329 = vunpack.c.l.b16 %v664
        %v2330 = vunpack.c.h.b16 %v664
        %v2331 = vunpack.c.l.b16 %v665
        %v2332 = vunpack.c.h.b16 %v665
        %v2333 = vunpack.c.l.b16 %v666
        %v2334 = vunpack.c.h.b16 %v666
        %v2335 = vunpack.c.l.b16 %v667
        %v2336 = vunpack.c.h.b16 %v667
        %v2337 = vunpack.c.l.b16 %v668
        %v2338 = vunpack.c.h.b16 %v668
        %v2339 = vunpack.c.l.b16 %v669
        %v2340 = vunpack.c.h.b16 %v669
        %v2341 = vunpack.c.l.b16 %v670
        %v2342 = vunpack.c.h.b16 %v670
        %v2343 = vunpack.c.l.b16 %v671
        %v2344 = vunpack.c.h.b16 %v671
        %v2345 = vunpack.c.l.b16 %v672
        %v2346 = vunpack.c.h.b16 %v672
        %v2347 = vunpack.c.l.b16 %v673
        %v2348 = vunpack.c.h.b16 %v673
        %v2349 = vunpack.c.l.b16 %v674
        %v2350 = vunpack.c.h.b16 %v674
        %v2351 = vunpack.c.l.b16 %v675
        %v2352 = vunpack.c.h.b16 %v675
        %v2353 = vunpack.c.l.b16 %v676
        %v2354 = vunpack.c.h.b16 %v676
        %v2355 = vunpack.c.l.b16 %v677
        %v2356 = vunpack.c.h.b16 %v677
        %v2357 = vunpack.c.l.b16 %v678
        %v2358 = vunpack.c.h.b16 %v678
        %v2359 = vunpack.c.l.b16 %v679
        %v2360 = vunpack.c.h.b16 %v679
        %v2361 = vunpack.c.l.b16 %v680
        %v2362 = vunpack.c.h.b16 %v680
        %v2363 = vunpack.c.l.b16 %v681
        %v2364 = vunpack.c.h.b16 %v681
        %v2365 = vunpack.c.l.b16 %v682
        %v2366 = vunpack.c.h.b16 %v682
        %v2367 = vunpack.c.l.b16 %v683
        %v2368 = vunpack.c.h.b16 %v683
        %v2369 = vunpack.c.l.b16 %v684
        %v2370 = vunpack.c.h.b16 %v684
        %v2371 = vunpack.c.l.b16 %v685
        %v2372 = vunpack.c.h.b16 %v685
        %v2373 = vunpack.c.l.b16 %v686
        %v2374 = vunpack.c.h.b16 %v686
        %v2375 = vunpack.c.l.b16 %v687
        %v2376 = vunpack.c.h.b16 %v687
        %v2377 = vunpack.c.l.b16 %v688
        %v2378 = vunpack.c.h.b16 %v688
        %v2379 = vunpack.c.l.b16 %v689
        %v2380 = vunpack.c.h.b16 %v689
        %v2381 = vunpack.c.l.b16 %v690
        %v2382 = vunpack.c.h.b16 %v690
        %v2383 = vunpack.c.l.b16 %v691
        %v2384 = vunpack.c.h.b16 %v691
        %v2385 = vunpack.c.l.b16 %v692
        %v2386 = vunpack.c.h.b16 %v692
        %v2387 = vunpack.c.l.b16 %v693
        %v2388 = vunpack.c.h.b16 %v693
        %v2389 = vunpack.c.l.b16 %v694
        %v2390 = vunpack.c.h.b16 %v694
        %v2391 = vunpack.c.l.b16 %v695
        %v2392 = vunpack.c.h.b16 %v695
        %v2393 = vunpack.c.l.b16 %v696
        %v2394 = vunpack.c.h.b16 %v696
        %v2395 = vunpack.c.l.b16 %v697
        %v2396 = vunpack.c.h.b16 %v697
        %v2397 = vunpack.c.l.b16 %v698
        %v2398 = vunpack.c.h.b16 %v698
        %v2399 = vunpack.c.l.b16 %v699
        %v2400 = vunpack.c.h.b16 %v699
        %v2401 = vunpack.c.l.b16 %v700
        %v2402 = vunpack.c.h.b16 %v700
        %v2403 = vunpack.c.l.b16 %v701
        %v2404 = vunpack.c.h.b16 %v701
        %v2405 = vunpack.c.l.b16 %v702
        %v2406 = vunpack.c.h.b16 %v702
        %v2407 = vunpack.c.l.b16 %v703
        %v2408 = vunpack.c.h.b16 %v703
        %v2409 = vunpack.c.l.b16 %v704
        %v2410 = vunpack.c.h.b16 %v704
        %v2411 = vunpack.c.l.b16 %v705
        %v2412 = vunpack.c.h.b16 %v705
        %v2413 = vunpack.c.l.b16 %v706
        %v2414 = vunpack.c.h.b16 %v706
        %v2415 = vunpack.c.l.b16 %v707
        %v2416 = vunpack.c.h.b16 %v707
        %v2417 = vunpack.c.l.b16 %v708
        %v2418 = vunpack.c.h.b16 %v708
        %v2419 = vunpack.c.l.b16 %v709
        %v2420 = vunpack.c.h.b16 %v709
        %v2421 = vunpack.c.l.b16 %v710
        %v2422 = vunpack.c.h.b16 %v710
        %v2423 = vunpack.c.l.b16 %v711
        %v2424 = vunpack.c.h.b16 %v711
        %v2425 = vunpack.c.l.b16 %v712
        %v2426 = vunpack.c.h.b16 %v712
        %v2427 = vunpack.c.l.b16 %v713
        %v2428 = vunpack.c.h.b16 %v713
        %v2429 = vunpack.c.l.b16 %v714
        %v2430 = vunpack.c.h.b16 %v714
        %v2431 = vunpack.c.l.b16 %v715
        %v2432 = vunpack.c.h.b16 %v715
        %v2433 = vunpack.c.l.b16 %v716
        %v2434 = vunpack.c.h.b16 %v716
        %v2435 = vunpack.c.l.b16 %v717
        %v2436 = vunpack.c.h.b16 %v717
        %v2437 = vunpack.c.l.b16 %v718
        %v2438 = vunpack.c.h.b16 %v718
        %v2439 = vunpack.c.l.b16 %v719
        %v2440 = vunpack.c.h.b16 %v719
        %v2441 = vunpack.c.l.b16 %v720
        %v2442 = vunpack.c.h.b16 %v720
        %v2443 = vunpack.c.l.b16 %v721
        %v2444 = vunpack.c.h.b16 %v721
        %v2445 = vunpack.c.l.b16 %v722
        %v2446 = vunpack.c.h.b16 %v722
        %v2447 = vunpack.c.l.b16 %v723
        %v2448 = vunpack.c.h.b16 %v723
        %v2449 = vunpack.c.l.b16 %v724
        %v2450 = vunpack.c.h.b16 %v724
        %v2451 = vunpack.c.l.b16 %v725
        %v2452 = vunpack.c.h.b16 %v725
        %v2453 = vunpack.c.l.b16 %v726
        %v2454 = vunpack.c.h.b16 %v726
        %v2455 = vunpack.c.l.b16 %v727
        %v2456 = vunpack.c.h.b16 %v727
        %v2457 = vunpack.c.l.b16 %v728
        %v2458 = vunpack.c.h.b16 %v728
        %v2459 = vunpack.c.l.b16 %v729
        %v2460 = vunpack.c.h.b16 %v729
        %v2461 = vunpack.c.l.b16 %v730
        %v2462 = vunpack.c.h.b16 %v730
        %v2463 = vunpack.c.l.b16 %v731
        %v2464 = vunpack.c.h.b16 %v731
        %v2465 = vunpack.c.l.b16 %v732
        %v2466 = vunpack.c.h.b16 %v732
        %v2467 = vunpack.c.l.b16 %v733
        %v2468 = vunpack.c.h.b16 %v733
        %v2469 = vunpack.c.l.b16 %v734
        %v2470 = vunpack.c.h.b16 %v734
        %v2471 = vunpack.c.l.b16 %v735
        %v2472 = vunpack.c.h.b16 %v735
        %v2473 = vunpack.c.l.b16 %v736
        %v2474 = vunpack.c.h.b16 %v736
        %v2475 = vunpack.c.l.b16 %v737
        %v2476 = vunpack.c.h.b16 %v737
        %v2477 = vunpack.c.l.b16 %v738
        %v2478 = vunpack.c.h.b16 %v738
        %v2479 = vunpack.c.l.b16 %v739
        %v2480 = vunpack.c.h.b16 %v739
        %v2481 = vunpack.c.l.b16 %v740
        %v2482 = vunpack.c.h.b16 %v740
        %v2483 = vunpack.c.l.b16 %v741
        %v2484 = vunpack.c.h.b16 %v741
        %v2485 = vunpack.c.l.b16 %v742
        %v2486 = vunpack.c.h.b16 %v742
        %v2487 = vunpack.c.l.b16 %v743
        %v2488 = vunpack.c.h.b16 %v743
        %v2489 = vunpack.c.l.b16 %v744
        %v2490 = vunpack.c.h.b16 %v744
        %v2491 = vunpack.c.l.b16 %v745
        %v2492 = vunpack.c.h.b16 %v745
        %v2493 = vunpack.c.l.b16 %v746
        %v2494 = vunpack.c.h.b16 %v746
        %v2495 = vunpack.c.l.b16 %v747
        %v2496 = vunpack.c.h.b16 %v747
        %v2497 = vunpack.c.l.b16 %v748
        %v2498 = vunpack.c.h.b16 %v748
        %v2499 = vunpack.c.l.b16 %v749
        %v2500 = vunpack.c.h.b16 %v749
        %v2501 = vunpack.c.l.b16 %v750
        %v2502 = vunpack.c.h.b16 %v750
        %v2503 = vunpack.c.l.b16 %v751
        %v2504 = vunpack.c.h.b16 %v751
        %v2505 = vunpack.c.l.b16 %v752
        %v2506 = vunpack.c.h.b16 %v752
        %v2507 = vunpack.c.l.b16 %v753
        %v2508 = vunpack.c.h.b16 %v753
        %v2509 = vunpack.c.l.b16 %v754
        %v2510 = vunpack.c.h.b16 %v754
        %v2511 = vunpack.c.l.b16 %v755
        %v2512 = vunpack.c.h.b16 %v755
        %v2513 = vunpack.c.l.b16 %v756
        %v2514 = vunpack.c.h.b16 %v756
        %v2515 = vunpack.c.l.b16 %v757
        %v2516 = vunpack.c.h.b16 %v757
        %v2517 = vunpack.c.l.b16 %v758
        %v2518 = vunpack.c.h.b16 %v758
        %v2519 = vunpack.c.l.b16 %v759
        %v2520 = vunpack.c.h.b16 %v759
        %v2521 = vunpack.c.l.b16 %v760
        %v2522 = vunpack.c.h.b16 %v760
        %v2523 = vunpack.c.l.b16 %v761
        %v2524 = vunpack.c.h.b16 %v761
        %v2525 = vunpack.c.l.b16 %v762
        %v2526 = vunpack.c.h.b16 %v762
        %v2527 = vunpack.c.l.b16 %v763
        %v2528 = vunpack.c.h.b16 %v763
        %v2529 = vunpack.c.l.b16 %v764
        %v2530 = vunpack.c.h.b16 %v764
        %v2531 = vunpack.c.l.b16 %v765
        %v2532 = vunpack.c.h.b16 %v765
        %v2533 = vunpack.c.l.b16 %v766
        %v2534 = vunpack.c.h.b16 %v766
        %v2535 = vunpack.c.l.b16 %v767
        %v2536 = vunpack.c.h.b16 %v767
        %v2537 = vunpack.c.l.b16 %v768
        %v2538 = vunpack.c.h.b16 %v768
        %v2539 = vunpack.c.l.b16 %v769
        %v2540 = vunpack.c.h.b16 %v769
        %v2541 = vunpack.c.l.b16 %v770
        %v2542 = vunpack.c.h.b16 %v770
        %v2543 = vunpack.c.l.b16 %v771
        %v2544 = vunpack.c.h.b16 %v771
        %v2545 = vunpack.c.l.b16 %v772
        %v2546 = vunpack.c.h.b16 %v772
        %v2547 = vunpack.c.l.b16 %v773
        %v2548 = vunpack.c.h.b16 %v773
        %v2549 = vunpack.c.l.b16 %v774
        %v2550 = vunpack.c.h.b16 %v774
        %v2551 = vunpack.c.l.b16 %v775
        %v2552 = vunpack.c.h.b16 %v775
        %v2553 = vunpack.c.l.b16 %v776
        %v2554 = vunpack.c.h.b16 %v776
        %v2555 = vunpack.c.l.b16 %v777
        %v2556 = vunpack.c.h.b16 %v777
        %v2557 = vunpack.c.l.b16 %v778
        %v2558 = vunpack.c.h.b16 %v778
        %v2559 = vunpack.c.l.b16 %v779
        %v2560 = vunpack.c.h.b16 %v779
        %v2561 = vunpack.c.l.b16 %v780
        %v2562 = vunpack.c.h.b16 %v780
        %v2563 = vunpack.c.l.b16 %v781
        %v2564 = vunpack.c.h.b16 %v781
        %v2565 = vunpack.c.l.b16 %v782
        %v2566 = vunpack.c.h.b16 %v782
        %v2567 = vunpack.c.l.b16 %v783
        %v2568 = vunpack.c.h.b16 %v783
        %v2569 = vunpack.c.l.b16 %v784
        %v2570 = vunpack.c.h.b16 %v784
        %v2571 = vunpack.c.l.b16 %v785
        %v2572 = vunpack.c.h.b16 %v785
        %v2573 = vunpack.c.l.b16 %v786
        %v2574 = vunpack.c.h.b16 %v786
        %v2575 = vunpack.c.l.b16 %v787
        %v2576 = vunpack.c.h.b16 %v787
        %v2577 = vunpack.c.l.b16 %v788
        %v2578 = vunpack.c.h.b16 %v788
        %v2579 = vunpack.c.l.b16 %v789
        %v2580 = vunpack.c.h.b16 %v789
        %v2581 = vunpack.c.l.b16 %v790
        %v2582 = vunpack.c.h.b16 %v790
        %v2583 = vunpack.c.l.b16 %v791
        %v2584 = vunpack.c.h.b16 %v791
        %v2585 = vunpack.c.l.b16 %v792
        %v2586 = vunpack.c.h.b16 %v792
        %v2587 = vunpack.c.l.b16 %v793
        %v2588 = vunpack.c.h.b16 %v793
        %v2589 = vunpack.c.l.b16 %v794
        %v2590 = vunpack.c.h.b16 %v794
        %v2591 = vunpack.c.l.b16 %v795
        %v2592 = vunpack.c.h.b16 %v795
        %v2593 = vunpack.c.l.b16 %v796
        %v2594 = vunpack.c.h.b16 %v796
        %v2595 = vunpack.c.l.b16 %v797
        %v2596 = vunpack.c.h.b16 %v797
        %v2597 = vunpack.c.l.b16 %v798
        %v2598 = vunpack.c.h.b16 %v798
        %v2599 = vunpack.c.l.b16 %v799
        %v2600 = vunpack.c.h.b16 %v799
        %v2601 = vunpack.c.l.b16 %v800
        %v2602 = vunpack.c.h.b16 %v800
        %v2603 = vunpack.c.l.b16 %v801
        %v2604 = vunpack.c.h.b16 %v801
        %v2605 = vunpack.c.l.b16 %v802
        %v2606 = vunpack.c.h.b16 %v802
        %v2607 = vunpack.c.l.b16 %v803
        %v2608 = vunpack.c.h.b16 %v803
        %v2609 = vunpack.c.l.b16 %v804
        %v2610 = vunpack.c.h.b16 %v804
        %v2611 = vunpack.c.l.b16 %v805
        %v2612 = vunpack.c.h.b16 %v805
        %v2613 = vunpack.c.l.b16 %v806
        %v2614 = vunpack.c.h.b16 %v806
        %v2615 = vunpack.c.l.b16 %v807
        %v2616 = vunpack.c.h.b16 %v807
        %v2617 = vunpack.c.l.b16 %v808
        %v2618 = vunpack.c.h.b16 %v808
        %v2619 = vunpack.c.l.b16 %v809
        %v2620 = vunpack.c.h.b16 %v809
        %v2621 = vunpack.c.l.b16 %v810
        %v2622 = vunpack.c.h.b16 %v810
        %v2623 = vunpack.c.l.b16 %v811
        %v2624 = vunpack.c.h.b16 %v811
        %v2625 = vunpack.c.l.b16 %v812
        %v2626 = vunpack.c.h.b16 %v812
        %v2627 = vunpack.c.l.b16 %v813
        %v2628 = vunpack.c.h.b16 %v813
        %v2629 = vunpack.c.l.b16 %v814
        %v2630 = vunpack.c.h.b16 %v814
        %v2631 = vunpack.c.l.b16 %v815
        %v2632 = vunpack.c.h.b16 %v815
        %v2633 = vunpack.c.l.b16 %v816
        %v2634 = vunpack.c.h.b16 %v816
        %v2635 = vunpack.c.l.b16 %v817
        %v2636 = vunpack.c.h.b16 %v817
        %v2637 = vunpack.c.l.b16 %v818
        %v2638 = vunpack.c.h.b16 %v818
        %v2639 = vunpack.c.l.b16 %v819
        %v2640 = vunpack.c.h.b16 %v819
        %v2641 = vunpack.c.l.b16 %v820
        %v2642 = vunpack.c.h.b16 %v820
        %v2643 = vunpack.c.l.b16 %v821
        %v2644 = vunpack.c.h.b16 %v821
        %v2645 = vunpack.c.l.b16 %v822
        %v2646 = vunpack.c.h.b16 %v822
        %v2647 = vunpack.c.l.b16 %v823
        %v2648 = vunpack.c.h.b16 %v823
        %v2649 = vunpack.c.l.b16 %v824
        %v2650 = vunpack.c.h.b16 %v824
        %v2651 = vunpack.c.l.b16 %v825
        %v2652 = vunpack.c.h.b16 %v825
        %v2653 = vunpack.c.l.b16 %v826
        %v2654 = vunpack.c.h.b16 %v826
        %v2655 = vunpack.c.l.b16 %v827
        %v2656 = vunpack.c.h.b16 %v827
        %v2657 = vunpack.c.l.b16 %v828
        %v2658 = vunpack.c.h.b16 %v828
        %v2659 = vunpack.c.l.b16 %v829
        %v2660 = vunpack.c.h.b16 %v829
        %v2661 = vunpack.c.l.b16 %v830
        %v2662 = vunpack.c.h.b16 %v830
        %v2663 = vunpack.c.l.b16 %v831
        %v2664 = vunpack.c.h.b16 %v831
        %v2665 = vunpack.c.l.b16 %v832
        %v2666 = vunpack.c.h.b16 %v832
        %v2667 = vunpack.c.l.b16 %v833
        %v2668 = vunpack.c.h.b16 %v833
        %v2669 = vunpack.c.l.b16 %v834
        %v2670 = vunpack.c.h.b16 %v834
        %v2671 = vunpack.c.l.b16 %v835
        %v2672 = vunpack.c.h.b16 %v835
        %v2673 = vunpack.c.l.b16 %v836
        %v2674 = vunpack.c.h.b16 %v836
        %v2675 = vunpack.c.l.b16 %v837
        %v2676 = vunpack.c.h.b16 %v837
        %v2677 = vunpack.c.l.b16 %v838
        %v2678 = vunpack.c.h.b16 %v838
        %v2679 = vunpack.c.l.b16 %v839
        %v2680 = vunpack.c.h.b16 %v839
        %v2681 = vunpack.c.l.b16 %v840
        %v2682 = vunpack.c.h.b16 %v840
        %v2683 = vunpack.c.l.b16 %v841
        %v2684 = vunpack.c.h.b16 %v841
        %v2685 = vunpack.c.l.b16 %v842
        %v2686 = vunpack.c.h.b16 %v842
        %v2687 = vunpack.c.l.b16 %v843
        %v2688 = vunpack.c.h.b16 %v843
        %v2689 = vunpack.c.l.b16 %v844
        %v2690 = vunpack.c.h.b16 %v844
        %v2691 = vunpack.c.l.b16 %v845
        %v2692 = vunpack.c.h.b16 %v845
        %v2693 = vunpack.c.l.b16 %v846
        %v2694 = vunpack.c.h.b16 %v846
        %v2695 = vunpack.c.l.b16 %v847
        %v2696 = vunpack.c.h.b16 %v847
        %v2697 = vunpack.c.l.b16 %v848
        %v2698 = vunpack.c.h.b16 %v848
        %v2699 = vunpack.c.l.b16 %v849
        %v2700 = vunpack.c.h.b16 %v849
        %v2701 = vunpack.c.l.b16 %v850
        %v2702 = vunpack.c.h.b16 %v850
        %v2703 = vunpack.c.l.b16 %v851
        %v2704 = vunpack.c.h.b16 %v851
        %v2705 = vunpack.c.l.b16 %v852
        %v2706 = vunpack.c.h.b16 %v852
        %v2707 = vunpack.c.l.b16 %v853
        %v2708 = vunpack.c.h.b16 %v853
        %v2709 = vunpack.c.l.b16 %v854
        %v2710 = vunpack.c.h.b16 %v854
        %v2711 = vpack.c.b16 %v1695, %v1687
        %v2712 = vpack.c.b16 %v1696, %v1688
        %v2713 = vpack.c.b16 %v1697, %v1689
        %v2714 = vpack.c.b16 %v1698, %v1690
        %v2715 = vpack.c.b16 %v1699, %v1691
        %v2716 = vpack.c.b16 %v1700, %v1692
        %v2717 = vpack.c.b16 %v1701, %v1693
        %v2718 = vpack.c.b16 %v1702, %v1694
        %v2719 = vpack.c.b16 %v1711, %v1703
        %v2720 = vpack.c.b16 %v1712, %v1704
        %v2721 = vpack.c.b16 %v1713, %v1705
        %v2722 = vpack.c.b16 %v1714, %v1706
        %v2723 = vpack.c.b16 %v1715, %v1707
        %v2724 = vpack.c.b16 %v1716, %v1708
        %v2725 = vpack.c.b16 %v1717, %v1709
        %v2726 = vpack.c.b16 %v1718, %v1710
        %v2727 = vpack.c.b16 %v1727, %v1719
        %v2728 = vpack.c.b16 %v1728, %v1720
        %v2729 = vpack.c.b16 %v1729, %v1721
        %v2730 = vpack.c.b16 %v1730, %v1722
        %v2731 = vpack.c.b16 %v1731, %v1723
        %v2732 = vpack.c.b16 %v1732, %v1724
        %v2733 = vpack.c.b16 %v1733, %v1725
        %v2734 = vpack.c.b16 %v1734, %v1726
        %v2735 = vpack.c.b16 %v1743, %v1735
        %v2736 = vpack.c.b16 %v1744, %v1736
        %v2737 = vpack.c.b16 %v1745, %v1737
        %v2738 = vpack.c.b16 %v1746, %v1738
        %v2739 = vpack.c.b16 %v1747, %v1739
        %v2740 = vpack.c.b16 %v1748, %v1740
        %v2741 = vpack.c.b16 %v1749, %v1741
        %v2742 = vpack.c.b16 %v1750, %v1742
        %v2743 = vpack.c.b16 %v1759, %v1751
        %v2744 = vpack.c.b16 %v1760, %v1752
        %v2745 = vpack.c.b16 %v1761, %v1753
        %v2746 = vpack.c.b16 %v1762, %v1754
        %v2747 = vpack.c.b16 %v1763, %v1755
        %v2748 = vpack.c.b16 %v1764, %v1756
        %v2749 = vpack.c.b16 %v1765, %v1757
        %v2750 = vpack.c.b16 %v1766, %v1758
        %v2751 = vpack.c.b16 %v1775, %v1767
        %v2752 = vpack.c.b16 %v1776, %v1768
        %v2753 = vpack.c.b16 %v1777, %v1769
        %v2754 = vpack.c.b16 %v1778, %v1770
        %v2755 = vpack.c.b16 %v1779, %v1771
        %v2756 = vpack.c.b16 %v1780, %v1772
        %v2757 = vpack.c.b16 %v1781, %v1773
        %v2758 = vpack.c.b16 %v1782, %v1774
        %v2759 = vpack.c.b16 %v1791, %v1783
        %v2760 = vpack.c.b16 %v1792, %v1784
        %v2761 = vpack.c.b16 %v1793, %v1785
        %v2762 = vpack.c.b16 %v1794, %v1786
        %v2763 = vpack.c.b16 %v1795, %v1787
        %v2764 = vpack.c.b16 %v1796, %v1788
        %v2765 = vpack.c.b16 %v1797, %v1789
        %v2766 = vpack.c.b16 %v1798, %v1790
        %v2767 = vpack.c.b16 %v1807, %v1799
        %v2768 = vpack.c.b16 %v1808, %v1800
        %v2769 = vpack.c.b16 %v1809, %v1801
        %v2770 = vpack.c.b16 %v1810, %v1802
        %v2771 = vpack.c.b16 %v1811, %v1803
        %v2772 = vpack.c.b16 %v1812, %v1804
        %v2773 = vpack.c.b16 %v1813, %v1805
        %v2774 = vpack.c.b16 %v1814, %v1806
        %v2775 = vpack.c.b16 %v1823, %v1815
        %v2776 = vpack.c.b16 %v1824, %v1816
        %v2777 = vpack.c.b16 %v1825, %v1817
        %v2778 = vpack.c.b16 %v1826, %v1818
        %v2779 = vpack.c.b16 %v1827, %v1819
        %v2780 = vpack.c.b16 %v1828, %v1820
        %v2781 = vpack.c.b16 %v1829, %v1821
        %v2782 = vpack.c.b16 %v1830, %v1822
        %v2783 = vpack.c.b16 %v1839, %v1831
        %v2784 = vpack.c.b16 %v1840, %v1832
        %v2785 = vpack.c.b16 %v1841, %v1833
        %v2786 = vpack.c.b16 %v1842, %v1834
        %v2787 = vpack.c.b16 %v1843, %v1835
        %v2788 = vpack.c.b16 %v1844, %v1836
        %v2789 = vpack.c.b16 %v1845, %v1837
        %v2790 = vpack.c.b16 %v1846, %v1838
        %v2791 = vpack.c.b16 %v1855, %v1847
        %v2792 = vpack.c.b16 %v1856, %v1848
        %v2793 = vpack.c.b16 %v1857, %v1849
        %v2794 = vpack.c.b16 %v1858, %v1850
        %v2795 = vpack.c.b16 %v1859, %v1851
        %v2796 = vpack.c.b16 %v1860, %v1852
        %v2797 = vpack.c.b16 %v1861, %v1853
        %v2798 = vpack.c.b16 %v1862, %v1854
        %v2799 = vpack.c.b16 %v1871, %v1863
        %v2800 = vpack.c.b16 %v1872, %v1864
        %v2801 = vpack.c.b16 %v1873, %v1865
        %v2802 = vpack.c.b16 %v1874, %v1866
        %v2803 = vpack.c.b16 %v1875, %v1867
        %v2804 = vpack.c.b16 %v1876, %v1868
        %v2805 = vpack.c.b16 %v1877, %v1869
        %v2806 = vpack.c.b16 %v1878, %v1870
        %v2807 = vpack.c.b16 %v1887, %v1879
        %v2808 = vpack.c.b16 %v1888, %v1880
        %v2809 = vpack.c.b16 %v1889, %v1881
        %v2810 = vpack.c.b16 %v1890, %v1882
        %v2811 = vpack.c.b16 %v1891, %v1883
        %v2812 = vpack.c.b16 %v1892, %v1884
        %v2813 = vpack.c.b16 %v1893, %v1885
        %v2814 = vpack.c.b16 %v1894, %v1886
        %v2815 = vpack.c.b16 %v1903, %v1895
        %v2816 = vpack.c.b16 %v1904, %v1896
        %v2817 = vpack.c.b16 %v1905, %v1897
        %v2818 = vpack.c.b16 %v1906, %v1898
        %v2819 = vpack.c.b16 %v1907, %v1899
        %v2820 = vpack.c.b16 %v1908, %v1900
        %v2821 = vpack.c.b16 %v1909, %v1901
        %v2822 = vpack.c.b16 %v1910, %v1902
        %v2823 = vpack.c.b16 %v1919, %v1911
        %v2824 = vpack.c.b16 %v1920, %v1912
        %v2825 = vpack.c.b16 %v1921, %v1913
        %v2826 = vpack.c.b16 %v1922, %v1914
        %v2827 = vpack.c.b16 %v1923, %v1915
        %v2828 = vpack.c.b16 %v1924, %v1916
        %v2829 = vpack.c.b16 %v1925, %v1917
        %v2830 = vpack.c.b16 %v1926, %v1918
        %v2831 = vpack.c.b16 %v1935, %v1927
        %v2832 = vpack.c.b16 %v1936, %v1928
        %v2833 = vpack.c.b16 %v1937, %v1929
        %v2834 = vpack.c.b16 %v1938, %v1930
        %v2835 = vpack.c.b16 %v1939, %v1931
        %v2836 = vpack.c.b16 %v1940, %v1932
        %v2837 = vpack.c.b16 %v1941, %v1933
        %v2838 = vpack.c.b16 %v1942, %v1934
        %v2839 = vpack.c.b16 %v1951, %v1943
        %v2840 = vpack.c.b16 %v1952, %v1944
        %v2841 = vpack.c.b16 %v1953, %v1945
        %v2842 = vpack.c.b16 %v1954, %v1946
        %v2843 = vpack.c.b16 %v1955, %v1947
        %v2844 = vpack.c.b16 %v1956, %v1948
        %v2845 = vpack.c.b16 %v1957, %v1949
        %v2846 = vpack.c.b16 %v1958, %v1950
        %v2847 = vpack.c.b16 %v1967, %v1959
        %v2848 = vpack.c.b16 %v1968, %v1960
        %v2849 = vpack.c.b16 %v1969, %v1961
        %v2850 = vpack.c.b16 %v1970, %v1962
        %v2851 = vpack.c.b16 %v1971, %v1963
        %v2852 = vpack.c.b16 %v1972, %v1964
        %v2853 = vpack.c.b16 %v1973, %v1965
        %v2854 = vpack.c.b16 %v1974, %v1966
        %v2855 = vpack.c.b16 %v1983, %v1975
        %v2856 = vpack.c.b16 %v1984, %v1976
        %v2857 = vpack.c.b16 %v1985, %v1977
        %v2858 = vpack.c.b16 %v1986, %v1978
        %v2859 = vpack.c.b16 %v1987, %v1979
        %v2860 = vpack.c.b16 %v1988, %v1980
        %v2861 = vpack.c.b16 %v1989, %v1981
        %v2862 = vpack.c.b16 %v1990, %v1982
        %v2863 = vpack.c.b16 %v1999, %v1991
        %v2864 = vpack.c.b16 %v2000, %v1992
        %v2865 = vpack.c.b16 %v2001, %v1993
        %v2866 = vpack.c.b16 %v2002, %v1994
        %v2867 = vpack.c.b16 %v2003, %v1995
        %v2868 = vpack.c.b16 %v2004, %v1996
        %v2869 = vpack.c.b16 %v2005, %v1997
        %v2870 = vpack.c.b16 %v2006, %v1998
        %v2871 = vpack.c.b16 %v2015, %v2007
        %v2872 = vpack.c.b16 %v2016, %v2008
        %v2873 = vpack.c.b16 %v2017, %v2009
        %v2874 = vpack.c.b16 %v2018, %v2010
        %v2875 = vpack.c.b16 %v2019, %v2011
        %v2876 = vpack.c.b16 %v2020, %v2012
        %v2877 = vpack.c.b16 %v2021, %v2013
        %v2878 = vpack.c.b16 %v2022, %v2014
        %v2879 = vpack.c.b16 %v2031, %v2023
        %v2880 = vpack.c.b16 %v2032, %v2024
        %v2881 = vpack.c.b16 %v2033, %v2025
        %v2882 = vpack.c.b16 %v2034, %v2026
        %v2883 = vpack.c.b16 %v2035, %v2027
        %v2884 = vpack.c.b16 %v2036, %v2028
        %v2885 = vpack.c.b16 %v2037, %v2029
        %v2886 = vpack.c.b16 %v2038, %v2030
        %v2887 = vpack.c.b16 %v2047, %v2039
        %v2888 = vpack.c.b16 %v2048, %v2040
        %v2889 = vpack.c.b16 %v2049, %v2041
        %v2890 = vpack.c.b16 %v2050, %v2042
        %v2891 = vpack.c.b16 %v2051, %v2043
        %v2892 = vpack.c.b16 %v2052, %v2044
        %v2893 = vpack.c.b16 %v2053, %v2045
        %v2894 = vpack.c.b16 %v2054, %v2046
        %v2895 = vpack.c.b16 %v2063, %v2055
        %v2896 = vpack.c.b16 %v2064, %v2056
        %v2897 = vpack.c.b16 %v2065, %v2057
        %v2898 = vpack.c.b16 %v2066, %v2058
        %v2899 = vpack.c.b16 %v2067, %v2059
        %v2900 = vpack.c.b16 %v2068, %v2060
        %v2901 = vpack.c.b16 %v2069, %v2061
        %v2902 = vpack.c.b16 %v2070, %v2062
        %v2903 = vpack.c.b16 %v2079, %v2071
        %v2904 = vpack.c.b16 %v2080, %v2072
        %v2905 = vpack.c.b16 %v2081, %v2073
        %v2906 = vpack.c.b16 %v2082, %v2074
        %v2907 = vpack.c.b16 %v2083, %v2075
        %v2908 = vpack.c.b16 %v2084, %v2076
        %v2909 = vpack.c.b16 %v2085, %v2077
        %v2910 = vpack.c.b16 %v2086, %v2078
        %v2911 = vpack.c.b16 %v2095, %v2087
        %v2912 = vpack.c.b16 %v2096, %v2088
        %v2913 = vpack.c.b16 %v2097, %v2089
        %v2914 = vpack.c.b16 %v2098, %v2090
        %v2915 = vpack.c.b16 %v2099, %v2091
        %v2916 = vpack.c.b16 %v2100, %v2092
        %v2917 = vpack.c.b16 %v2101, %v2093
        %v2918 = vpack.c.b16 %v2102, %v2094
        %v2919 = vpack.c.b16 %v2111, %v2103
        %v2920 = vpack.c.b16 %v2112, %v2104
        %v2921 = vpack.c.b16 %v2113, %v2105
        %v2922 = vpack.c.b16 %v2114, %v2106
        %v2923 = vpack.c.b16 %v2115, %v2107
        %v2924 = vpack.c.b16 %v2116, %v2108
        %v2925 = vpack.c.b16 %v2117, %v2109
        %v2926 = vpack.c.b16 %v2118, %v2110
        %v2927 = vpack.c.b16 %v2127, %v2119
        %v2928 = vpack.c.b16 %v2128, %v2120
        %v2929 = vpack.c.b16 %v2129, %v2121
        %v2930 = vpack.c.b16 %v2130, %v2122
        %v2931 = vpack.c.b16 %v2131, %v2123
        %v2932 = vpack.c.b16 %v2132, %v2124
        %v2933 = vpack.c.b16 %v2133, %v2125
        %v2934 = vpack.c.b16 %v2134, %v2126
        %v2935 = vpack.c.b16 %v2143, %v2135
        %v2936 = vpack.c.b16 %v2144, %v2136
        %v2937 = vpack.c.b16 %v2145, %v2137
        %v2938 = vpack.c.b16 %v2146, %v2138
        %v2939 = vpack.c.b16 %v2147, %v2139
        %v2940 = vpack.c.b16 %v2148, %v2140
        %v2941 = vpack.c.b16 %v2149, %v2141
        %v2942 = vpack.c.b16 %v2150, %v2142
        %v2943 = vpack.c.b16 %v2159, %v2151
        %v2944 = vpack.c.b16 %v2160, %v2152
        %v2945 = vpack.c.b16 %v2161, %v2153
        %v2946 = vpack.c.b16 %v2162, %v2154
        %v2947 = vpack.c.b16 %v2163, %v2155
        %v2948 = vpack.c.b16 %v2164, %v2156
        %v2949 = vpack.c.b16 %v2165, %v2157
        %v2950 = vpack.c.b16 %v2166, %v2158
        %v2951 = vpack.c.b16 %v2175, %v2167
        %v2952 = vpack.c.b16 %v2176, %v2168
        %v2953 = vpack.c.b16 %v2177, %v2169
        %v2954 = vpack.c.b16 %v2178, %v2170
        %v2955 = vpack.c.b16 %v2179, %v2171
        %v2956 = vpack.c.b16 %v2180, %v2172
        %v2957 = vpack.c.b16 %v2181, %v2173
        %v2958 = vpack.c.b16 %v2182, %v2174
        %v2959 = vpack.c.b16 %v2191, %v2183
        %v2960 = vpack.c.b16 %v2192, %v2184
        %v2961 = vpack.c.b16 %v2193, %v2185
        %v2962 = vpack.c.b16 %v2194, %v2186
        %v2963 = vpack.c.b16 %v2195, %v2187
        %v2964 = vpack.c.b16 %v2196, %v2188
        %v2965 = vpack.c.b16 %v2197, %v2189
        %v2966 = vpack.c.b16 %v2198, %v2190
        %v2967 = vpack.c.b16 %v2207, %v2199
        %v2968 = vpack.c.b16 %v2208, %v2200
        %v2969 = vpack.c.b16 %v2209, %v2201
        %v2970 = vpack.c.b16 %v2210, %v2202
        %v2971 = vpack.c.b16 %v2211, %v2203
        %v2972 = vpack.c.b16 %v2212, %v2204
        %v2973 = vpack.c.b16 %v2213, %v2205
        %v2974 = vpack.c.b16 %v2214, %v2206
        %v2975 = vpack.c.b16 %v2223, %v2215
        %v2976 = vpack.c.b16 %v2224, %v2216
        %v2977 = vpack.c.b16 %v2225, %v2217
        %v2978 = vpack.c.b16 %v2226, %v2218
        %v2979 = vpack.c.b16 %v2227, %v2219
        %v2980 = vpack.c.b16 %v2228, %v2220
        %v2981 = vpack.c.b16 %v2229, %v2221
        %v2982 = vpack.c.b16 %v2230, %v2222
        %v2983 = vpack.c.b16 %v2239, %v2231
        %v2984 = vpack.c.b16 %v2240, %v2232
        %v2985 = vpack.c.b16 %v2241, %v2233
        %v2986 = vpack.c.b16 %v2242, %v2234
        %v2987 = vpack.c.b16 %v2243, %v2235
        %v2988 = vpack.c.b16 %v2244, %v2236
        %v2989 = vpack.c.b16 %v2245, %v2237
        %v2990 = vpack.c.b16 %v2246, %v2238
        %v2991 = vpack.c.b16 %v2255, %v2247
        %v2992 = vpack.c.b16 %v2256, %v2248
        %v2993 = vpack.c.b16 %v2257, %v2249
        %v2994 = vpack.c.b16 %v2258, %v2250
        %v2995 = vpack.c.b16 %v2259, %v2251
        %v2996 = vpack.c.b16 %v2260, %v2252
        %v2997 = vpack.c.b16 %v2261, %v2253
        %v2998 = vpack.c.b16 %v2262, %v2254
        %v2999 = vpack.c.b16 %v2271, %v2263
        %v3000 = vpack.c.b16 %v2272, %v2264
        %v3001 = vpack.c.b16 %v2273, %v2265
        %v3002 = vpack.c.b16 %v2274, %v2266
        %v3003 = vpack.c.b16 %v2275, %v2267
        %v3004 = vpack.c.b16 %v2276, %v2268
        %v3005 = vpack.c.b16 %v2277, %v2269
        %v3006 = vpack.c.b16 %v2278, %v2270
        %v3007 = vpack.c.b16 %v2287, %v2279
        %v3008 = vpack.c.b16 %v2288, %v2280
        %v3009 = vpack.c.b16 %v2289, %v2281
        %v3010 = vpack.c.b16 %v2290, %v2282
        %v3011 = vpack.c.b16 %v2291, %v2283
        %v3012 = vpack.c.b16 %v2292, %v2284
        %v3013 = vpack.c.b16 %v2293, %v2285
        %v3014 = vpack.c.b16 %v2294, %v2286
        %v3015 = vpack.c.b16 %v2303, %v2295
        %v3016 = vpack.c.b16 %v2304, %v2296
        %v3017 = vpack.c.b16 %v2305, %v2297
        %v3018 = vpack.c.b16 %v2306, %v2298
        %v3019 = vpack.c.b16 %v2307, %v2299
        %v3020 = vpack.c.b16 %v2308, %v2300
        %v3021 = vpack.c.b16 %v2309, %v2301
        %v3022 = vpack.c.b16 %v2310, %v2302
        %v3023 = vpack.c.b16 %v2319, %v2311
        %v3024 = vpack.c.b16 %v2320, %v2312
        %v3025 = vpack.c.b16 %v2321, %v2313
        %v3026 = vpack.c.b16 %v2322, %v2314
        %v3027 = vpack.c.b16 %v2323, %v2315
        %v3028 = vpack.c.b16 %v2324, %v2316
        %v3029 = vpack.c.b16 %v2325, %v2317
        %v3030 = vpack.c.b16 %v2326, %v2318
        %v3031 = vpack.c.b16 %v2335, %v2327
        %v3032 = vpack.c.b16 %v2336, %v2328
        %v3033 = vpack.c.b16 %v2337, %v2329
        %v3034 = vpack.c.b16 %v2338, %v2330
        %v3035 = vpack.c.b16 %v2339, %v2331
        %v3036 = vpack.c.b16 %v2340, %v2332
        %v3037 = vpack.c.b16 %v2341, %v2333
        %v3038 = vpack.c.b16 %v2342, %v2334
        %v3039 = vpack.c.b16 %v2351, %v2343
        %v3040 = vpack.c.b16 %v2352, %v2344
        %v3041 = vpack.c.b16 %v2353, %v2345
        %v3042 = vpack.c.b16 %v2354, %v2346
        %v3043 = vpack.c.b16 %v2355, %v2347
        %v3044 = vpack.c.b16 %v2356, %v2348
        %v3045 = vpack.c.b16 %v2357, %v2349
        %v3046 = vpack.c.b16 %v2358, %v2350
        %v3047 = vpack.c.b16 %v2367, %v2359
        %v3048 = vpack.c.b16 %v2368, %v2360
        %v3049 = vpack.c.b16 %v2369, %v2361
        %v3050 = vpack.c.b16 %v2370, %v2362
        %v3051 = vpack.c.b16 %v2371, %v2363
        %v3052 = vpack.c.b16 %v2372, %v2364
        %v3053 = vpack.c.b16 %v2373, %v2365
        %v3054 = vpack.c.b16 %v2374, %v2366
        %v3055 = vpack.c.b16 %v2383, %v2375
        %v3056 = vpack.c.b16 %v2384, %v2376
        %v3057 = vpack.c.b16 %v2385, %v2377
        %v3058 = vpack.c.b16 %v2386, %v2378
        %v3059 = vpack.c.b16 %v2387, %v2379
        %v3060 = vpack.c.b16 %v2388, %v2380
        %v3061 = vpack.c.b16 %v2389, %v2381
        %v3062 = vpack.c.b16 %v2390, %v2382
        %v3063 = vpack.c.b16 %v2399, %v2391
        %v3064 = vpack.c.b16 %v2400, %v2392
        %v3065 = vpack.c.b16 %v2401, %v2393
        %v3066 = vpack.c.b16 %v2402, %v2394
        %v3067 = vpack.c.b16 %v2403, %v2395
        %v3068 = vpack.c.b16 %v2404, %v2396
        %v3069 = vpack.c.b16 %v2405, %v2397
        %v3070 = vpack.c.b16 %v2406, %v2398
        %v3071 = vpack.c.b16 %v2415, %v2407
        %v3072 = vpack.c.b16 %v2416, %v2408
        %v3073 = vpack.c.b16 %v2417, %v2409
        %v3074 = vpack.c.b16 %v2418, %v2410
        %v3075 = vpack.c.b16 %v2419, %v2411
        %v3076 = vpack.c.b16 %v2420, %v2412
        %v3077 = vpack.c.b16 %v2421, %v2413
        %v3078 = vpack.c.b16 %v2422, %v2414
        %v3079 = vpack.c.b16 %v2431, %v2423
        %v3080 = vpack.c.b16 %v2432, %v2424
        %v3081 = vpack.c.b16 %v2433, %v2425
        %v3082 = vpack.c.b16 %v2434, %v2426
        %v3083 = vpack.c.b16 %v2435, %v2427
        %v3084 = vpack.c.b16 %v2436, %v2428
        %v3085 = vpack.c.b16 %v2437, %v2429
        %v3086 = vpack.c.b16 %v2438, %v2430
        %v3087 = vpack.c.b16 %v2447, %v2439
        %v3088 = vpack.c.b16 %v2448, %v2440
        %v3089 = vpack.c.b16 %v2449, %v2441
        %v3090 = vpack.c.b16 %v2450, %v2442
        %v3091 = vpack.c.b16 %v2451, %v2443
        %v3092 = vpack.c.b16 %v2452, %v2444
        %v3093 = vpack.c.b16 %v2453, %v2445
        %v3094 = vpack.c.b16 %v2454, %v2446
        %v3095 = vpack.c.b16 %v2463, %v2455
        %v3096 = vpack.c.b16 %v2464, %v2456
        %v3097 = vpack.c.b16 %v2465, %v2457
        %v3098 = vpack.c.b16 %v2466, %v2458
        %v3099 = vpack.c.b16 %v2467, %v2459
        %v3100 = vpack.c.b16 %v2468, %v2460
        %v3101 = vpack.c.b16 %v2469, %v2461
        %v3102 = vpack.c.b16 %v2470, %v2462
        %v3103 = vpack.c.b16 %v2479, %v2471
        %v3104 = vpack.c.b16 %v2480, %v2472
        %v3105 = vpack.c.b16 %v2481, %v2473
        %v3106 = vpack.c.b16 %v2482, %v2474
        %v3107 = vpack.c.b16 %v2483, %v2475
        %v3108 = vpack.c.b16 %v2484, %v2476
        %v3109 = vpack.c.b16 %v2485, %v2477
        %v3110 = vpack.c.b16 %v2486, %v2478
        %v3111 = vpack.c.b16 %v2495, %v2487
        %v3112 = vpack.c.b16 %v2496, %v2488
        %v3113 = vpack.c.b16 %v2497, %v2489
        %v3114 = vpack.c.b16 %v2498, %v2490
        %v3115 = vpack.c.b16 %v2499, %v2491
        %v3116 = vpack.c.b16 %v2500, %v2492
        %v3117 = vpack.c.b16 %v2501, %v2493
        %v3118 = vpack.c.b16 %v2502, %v2494
        %v3119 = vpack.c.b16 %v2511, %v2503
        %v3120 = vpack.c.b16 %v2512, %v2504
        %v3121 = vpack.c.b16 %v2513, %v2505
        %v3122 = vpack.c.b16 %v2514, %v2506
        %v3123 = vpack.c.b16 %v2515, %v2507
        %v3124 = vpack.c.b16 %v2516, %v2508
        %v3125 = vpack.c.b16 %v2517, %v2509
        %v3126 = vpack.c.b16 %v2518, %v2510
        %v3127 = vpack.c.b16 %v2527, %v2519
        %v3128 = vpack.c.b16 %v2528, %v2520
        %v3129 = vpack.c.b16 %v2529, %v2521
        %v3130 = vpack.c.b16 %v2530, %v2522
        %v3131 = vpack.c.b16 %v2531, %v2523
        %v3132 = vpack.c.b16 %v2532, %v2524
        %v3133 = vpack.c.b16 %v2533, %v2525
        %v3134 = vpack.c.b16 %v2534, %v2526
        %v3135 = vpack.c.b16 %v2543, %v2535
        %v3136 = vpack.c.b16 %v2544, %v2536
        %v3137 = vpack.c.b16 %v2545, %v2537
        %v3138 = vpack.c.b16 %v2546, %v2538
        %v3139 = vpack.c.b16 %v2547, %v2539
        %v3140 = vpack.c.b16 %v2548, %v2540
        %v3141 = vpack.c.b16 %v2549, %v2541
        %v3142 = vpack.c.b16 %v2550, %v2542
        %v3143 = vpack.c.b16 %v2559, %v2551
        %v3144 = vpack.c.b16 %v2560, %v2552
        %v3145 = vpack.c.b16 %v2561, %v2553
        %v3146 = vpack.c.b16 %v2562, %v2554
        %v3147 = vpack.c.b16 %v2563, %v2555
        %v3148 = vpack.c.b16 %v2564, %v2556
        %v3149 = vpack.c.b16 %v2565, %v2557
        %v3150 = vpack.c.b16 %v2566, %v2558
        %v3151 = vpack.c.b16 %v2575, %v2567
        %v3152 = vpack.c.b16 %v2576, %v2568
        %v3153 = vpack.c.b16 %v2577, %v2569
        %v3154 = vpack.c.b16 %v2578, %v2570
        %v3155 = vpack.c.b16 %v2579, %v2571
        %v3156 = vpack.c.b16 %v2580, %v2572
        %v3157 = vpack.c.b16 %v2581, %v2573
        %v3158 = vpack.c.b16 %v2582, %v2574
        %v3159 = vpack.c.b16 %v2591, %v2583
        %v3160 = vpack.c.b16 %v2592, %v2584
        %v3161 = vpack.c.b16 %v2593, %v2585
        %v3162 = vpack.c.b16 %v2594, %v2586
        %v3163 = vpack.c.b16 %v2595, %v2587
        %v3164 = vpack.c.b16 %v2596, %v2588
        %v3165 = vpack.c.b16 %v2597, %v2589
        %v3166 = vpack.c.b16 %v2598, %v2590
        %v3167 = vpack.c.b16 %v2607, %v2599
        %v3168 = vpack.c.b16 %v2608, %v2600
        %v3169 = vpack.c.b16 %v2609, %v2601
        %v3170 = vpack.c.b16 %v2610, %v2602
        %v3171 = vpack.c.b16 %v2611, %v2603
        %v3172 = vpack.c.b16 %v2612, %v2604
        %v3173 = vpack.c.b16 %v2613, %v2605
        %v3174 = vpack.c.b16 %v2614, %v2606
        %v3175 = vpack.c.b16 %v2623, %v2615
        %v3176 = vpack.c.b16 %v2624, %v2616
        %v3177 = vpack.c.b16 %v2625, %v2617
        %v3178 = vpack.c.b16 %v2626, %v2618
        %v3179 = vpack.c.b16 %v2627, %v2619
        %v3180 = vpack.c.b16 %v2628, %v2620
        %v3181 = vpack.c.b16 %v2629, %v2621
        %v3182 = vpack.c.b16 %v2630, %v2622
        %v3183 = vpack.c.b16 %v2639, %v2631
        %v3184 = vpack.c.b16 %v2640, %v2632
        %v3185 = vpack.c.b16 %v2641, %v2633
        %v3186 = vpack.c.b16 %v2642, %v2634
        %v3187 = vpack.c.b16 %v2643, %v2635
        %v3188 = vpack.c.b16 %v2644, %v2636
        %v3189 = vpack.c.b16 %v2645, %v2637
        %v3190 = vpack.c.b16 %v2646, %v2638
        %v3191 = vpack.c.b16 %v2655, %v2647
        %v3192 = vpack.c.b16 %v2656, %v2648
        %v3193 = vpack.c.b16 %v2657, %v2649
        %v3194 = vpack.c.b16 %v2658, %v2650
        %v3195 = vpack.c.b16 %v2659, %v2651
        %v3196 = vpack.c.b16 %v2660, %v2652
        %v3197 = vpack.c.b16 %v2661, %v2653
        %v3198 = vpack.c.b16 %v2662, %v2654
        %v3199 = vpack.c.b16 %v2671, %v2663
        %v3200 = vpack.c.b16 %v2672, %v2664
        %v3201 = vpack.c.b16 %v2673, %v2665
        %v3202 = vpack.c.b16 %v2674, %v2666
        %v3203 = vpack.c.b16 %v2675, %v2667
        %v3204 = vpack.c.b16 %v2676, %v2668
        %v3205 = vpack.c.b16 %v2677, %v2669
        %v3206 = vpack.c.b16 %v2678, %v2670
        %v3207 = vpack.c.b16 %v2687, %v2679
        %v3208 = vpack.c.b16 %v2688, %v2680
        %v3209 = vpack.c.b16 %v2689, %v2681
        %v3210 = vpack.c.b16 %v2690, %v2682
        %v3211 = vpack.c.b16 %v2691, %v2683
        %v3212 = vpack.c.b16 %v2692, %v2684
        %v3213 = vpack.c.b16 %v2693, %v2685
        %v3214 = vpack.c.b16 %v2694, %v2686
        %v3215 = vpack.c.b16 %v2703, %v2695
        %v3216 = vpack.c.b16 %v2704, %v2696
        %v3217 = vpack.c.b16 %v2705, %v2697
        %v3218 = vpack.c.b16 %v2706, %v2698
        %v3219 = vpack.c.b16 %v2707, %v2699
        %v3220 = vpack.c.b16 %v2708, %v2700
        %v3221 = vpack.c.b16 %v2709, %v2701
        %v3222 = vpack.c.b16 %v2710, %v2702
        %3735 = vmatprep.subr.bf16.mxu0 %v2712
        %3736 = vmatpush1.bf16.msra.mxu0 %v2711
        %3737 = vmatprep.subr.bf16.mxu0 %v2720
        %3738 = vmatpush1.bf16.msra.mxu0 %v2719
        %3739 = vmatprep.subr.bf16.mxu0 %v2728
        %3740 = vmatpush1.bf16.msra.mxu0 %v2727
        %3741 = vmatprep.subr.bf16.mxu0 %v2736
        %3742 = vmatpush1.bf16.msra.mxu0 %v2735
        %3743 = vmatprep.subr.bf16.mxu0 %v2744
        %3744 = vmatpush1.bf16.msra.mxu0 %v2743
        %3745 = vmatprep.subr.bf16.mxu0 %v2752
        %3746 = vmatpush1.bf16.msra.mxu0 %v2751
        %3747 = vmatprep.subr.bf16.mxu0 %v2760
        %3748 = vmatpush1.bf16.msra.mxu0 %v2759
        %3749 = vmatprep.subr.bf16.mxu0 %v2768
        %3750 = vmatpush1.bf16.msra.mxu0 %v2767
        %3751 = vmatprep.subr.bf16.mxu0 %v2776
        %3752 = vmatpush1.bf16.msra.mxu0 %v2775
        %3753 = vmatprep.subr.bf16.mxu0 %v2784
        %3754 = vmatpush1.bf16.msra.mxu0 %v2783
        %3755 = vmatprep.subr.bf16.mxu0 %v2792
        %3756 = vmatpush1.bf16.msra.mxu0 %v2791
        %3757 = vmatprep.subr.bf16.mxu0 %v2800
        %3758 = vmatpush1.bf16.msra.mxu0 %v2799
        %3759 = vmatprep.subr.bf16.mxu0 %v2808
        %3760 = vmatpush1.bf16.msra.mxu0 %v2807
        %3761 = vmatprep.subr.bf16.mxu0 %v2816
        %3762 = vmatpush1.bf16.msra.mxu0 %v2815
        %3763 = vmatprep.subr.bf16.mxu0 %v2824
        %3764 = vmatpush1.bf16.msra.mxu0 %v2823
        %3765 = vmatprep.subr.bf16.mxu0 %v2832
        %3766 = vmatpush1.bf16.msra.mxu0 %v2831
        %3767 = vmatprep.mubr.bf16.mxu0 %v1048
        %3768 = vmatmul.mubr.bf16.gmra.mrb[0].mxu0 %v1047
        %v3769 = vpop.f32.mrb[0].mxu0
        %v3770 = vadd.f32 0.0, %v3769
        %v3771 = vpop.f32.mrb[0].mxu0
        %v3772 = vadd.f32 0.0, %v3771
        %v3773 = vpop.f32.mrb[0].mxu0
        %v3774 = vadd.f32 0.0, %v3773
        %v3775 = vpop.f32.mrb[0].mxu0
        %v3776 = vadd.f32 0.0, %v3775
        %3777 = vmatprep.mubr.bf16.mxu0 %v1056
        %3778 = vmatmul.mubr.bf16.gmra.mrb[0].mxu0 %v1055
        %v3779 = vpop.f32.mrb[0].mxu0
        %v3780 = vadd.f32 0.0, %v3779
        %v3781 = vpop.f32.mrb[0].mxu0
        %v3782 = vadd.f32 0.0, %v3781
        %v3783 = vpop.f32.mrb[0].mxu0
        %v3784 = vadd.f32 0.0, %v3783
        %v3785 = vpop.f32.mrb[0].mxu0
        %v3786 = vadd.f32 0.0, %v3785
        %3787 = vmatprep.mubr.bf16.mxu0 %v1064
        %3788 = vmatmul.mubr.bf16.gmra.mrb[0].mxu0 %v1063
        %v3789 = vpop.f32.mrb[0].mxu0
        %v3790 = vadd.f32 0.0, %v3789
        %v3791 = vpop.f32.mrb[0].mxu0
        %v3792 = vadd.f32 0.0, %v3791
        %v3793 = vpop.f32.mrb[0].mxu0
        %v3794 = vadd.f32 0.0, %v3793
        %v3795 = vpop.f32.mrb[0].mxu0
        %v3796 = vadd.f32 0.0, %v3795
        %3797 = vmatprep.mubr.bf16.mxu0 %v1072
        %3798 = vmatmul.mubr.bf16.gmra.mrb[0].mxu0 %v1071
        %v3799 = vpop.f32.mrb[0].mxu0
        %v3800 = vadd.f32 0.0, %v3799
        %v3801 = vpop.f32.mrb[0].mxu0
        %v3802 = vadd.f32 0.0, %v3801
        %v3803 = vpop.f32.mrb[0].mxu0
        %v3804 = vadd.f32 0.0, %v3803
        %v3805 = vpop.f32.mrb[0].mxu0
        %v3806 = vadd.f32 0.0, %v3805
        %3807 = vmatprep.mubr.bf16.mxu0 %v1080
        %3808 = vmatmul.mubr.bf16.gmra.mrb[0].mxu0 %v1079
        %v3809 = vpop.f32.mrb[0].mxu0
        %v3810 = vadd.f32 0.0, %v3809
        %v3811 = vpop.f32.mrb[0].mxu0
        %v3812 = vadd.f32 0.0, %v3811
        %v3813 = vpop.f32.mrb[0].mxu0
        %v3814 = vadd.f32 0.0, %v3813
        %v3815 = vpop.f32.mrb[0].mxu0
        %v3816 = vadd.f32 0.0, %v3815
        %3817 = vmatprep.mubr.bf16.mxu0 %v1088
        %3818 = vmatmul.mubr.bf16.gmra.mrb[0].mxu0 %v1087
        %v3819 = vpop.f32.mrb[0].mxu0
        %v3820 = vadd.f32 0.0, %v3819
        %v3821 = vpop.f32.mrb[0].mxu0
        %v3822 = vadd.f32 0.0, %v3821
        %v3823 = vpop.f32.mrb[0].mxu0
        %v3824 = vadd.f32 0.0, %v3823
        %v3825 = vpop.f32.mrb[0].mxu0
        %v3826 = vadd.f32 0.0, %v3825
        %3827 = vmatprep.mubr.bf16.mxu0 %v1096
        %3828 = vmatmul.mubr.bf16.gmra.mrb[0].mxu0 %v1095
        %v3829 = vpop.f32.mrb[0].mxu0
        %v3830 = vadd.f32 0.0, %v3829
        %v3831 = vpop.f32.mrb[0].mxu0
        %v3832 = vadd.f32 0.0, %v3831
        %v3833 = vpop.f32.mrb[0].mxu0
        %v3834 = vadd.f32 0.0, %v3833
        %v3835 = vpop.f32.mrb[0].mxu0
        %v3836 = vadd.f32 0.0, %v3835
        %3837 = vmatprep.mubr.bf16.mxu0 %v1104
        %3838 = vmatmul.mubr.bf16.gmra.mrb[0].mxu0 %v1103
        %v3839 = vpop.f32.mrb[0].mxu0
        %v3840 = vadd.f32 0.0, %v3839
        %v3841 = vpop.f32.mrb[0].mxu0
        %v3842 = vadd.f32 0.0, %v3841
        %v3843 = vpop.f32.mrb[0].mxu0
        %v3844 = vadd.f32 0.0, %v3843
        %v3845 = vpop.f32.mrb[0].mxu0
        %v3846 = vadd.f32 0.0, %v3845
        %3847 = vdwg.mxu0
        %3848 = vmatprep.subr.bf16.mxu0 %v2840
        %3849 = vmatpush1.bf16.msra.mxu0 %v2839
        %3850 = vmatprep.subr.bf16.mxu0 %v2848
        %3851 = vmatpush1.bf16.msra.mxu0 %v2847
        %3852 = vmatprep.subr.bf16.mxu0 %v2856
        %3853 = vmatpush1.bf16.msra.mxu0 %v2855
        %3854 = vmatprep.subr.bf16.mxu0 %v2864
        %3855 = vmatpush1.bf16.msra.mxu0 %v2863
        %3856 = vmatprep.subr.bf16.mxu0 %v2872
        %3857 = vmatpush1.bf16.msra.mxu0 %v2871
        %3858 = vmatprep.subr.bf16.mxu0 %v2880
        %3859 = vmatpush1.bf16.msra.mxu0 %v2879
        %3860 = vmatprep.subr.bf16.mxu0 %v2888
        %3861 = vmatpush1.bf16.msra.mxu0 %v2887
        %3862 = vmatprep.subr.bf16.mxu0 %v2896
        %3863 = vmatpush1.bf16.msra.mxu0 %v2895
        %3864 = vmatprep.subr.bf16.mxu0 %v2904
        %3865 = vmatpush1.bf16.msra.mxu0 %v2903
        %3866 = vmatprep.subr.bf16.mxu0 %v2912
        %3867 = vmatpush1.bf16.msra.mxu0 %v2911
        %3868 = vmatprep.subr.bf16.mxu0 %v2920
        %3869 = vmatpush1.bf16.msra.mxu0 %v2919
        %3870 = vmatprep.subr.bf16.mxu0 %v2928
        %3871 = vmatpush1.bf16.msra.mxu0 %v2927
        %3872 = vmatprep.subr.bf16.mxu0 %v2936
        %3873 = vmatpush1.bf16.msra.mxu0 %v2935
        %3874 = vmatprep.subr.bf16.mxu0 %v2944
        %3875 = vmatpush1.bf16.msra.mxu0 %v2943
        %3876 = vmatprep.subr.bf16.mxu0 %v2952
        %3877 = vmatpush1.bf16.msra.mxu0 %v2951
        %3878 = vmatprep.subr.bf16.mxu0 %v2960
        %3879 = vmatpush1.bf16.msra.mxu0 %v2959
        %3880 = vmatprep.mubr.bf16.mxu0 %v1050
        %3881 = vmatmul.mubr.bf16.gmra.mrb[0].mxu0 %v1049
        %v3882 = vpop.f32.mrb[0].mxu0
        %v3883 = vadd.f32 %v3770, %v3882
        %v3884 = vpop.f32.mrb[0].mxu0
        %v3885 = vadd.f32 %v3772, %v3884
        %v3886 = vpop.f32.mrb[0].mxu0
        %v3887 = vadd.f32 %v3774, %v3886
        %v3888 = vpop.f32.mrb[0].mxu0
        %v3889 = vadd.f32 %v3776, %v3888
        %3890 = vmatprep.mubr.bf16.mxu0 %v1058
        %3891 = vmatmul.mubr.bf16.gmra.mrb[0].mxu0 %v1057
        %v3892 = vpop.f32.mrb[0].mxu0
        %v3893 = vadd.f32 %v3780, %v3892
        %v3894 = vpop.f32.mrb[0].mxu0
        %v3895 = vadd.f32 %v3782, %v3894
        %v3896 = vpop.f32.mrb[0].mxu0
        %v3897 = vadd.f32 %v3784, %v3896
        %v3898 = vpop.f32.mrb[0].mxu0
        %v3899 = vadd.f32 %v3786, %v3898
        %3900 = vmatprep.mubr.bf16.mxu0 %v1066
        %3901 = vmatmul.mubr.bf16.gmra.mrb[0].mxu0 %v1065
        %v3902 = vpop.f32.mrb[0].mxu0
        %v3903 = vadd.f32 %v3790, %v3902
        %v3904 = vpop.f32.mrb[0].mxu0
        %v3905 = vadd.f32 %v3792, %v3904
        %v3906 = vpop.f32.mrb[0].mxu0
        %v3907 = vadd.f32 %v3794, %v3906
        %v3908 = vpop.f32.mrb[0].mxu0
        %v3909 = vadd.f32 %v3796, %v3908
        %3910 = vmatprep.mubr.bf16.mxu0 %v1074
        %3911 = vmatmul.mubr.bf16.gmra.mrb[0].mxu0 %v1073
        %v3912 = vpop.f32.mrb[0].mxu0
        %v3913 = vadd.f32 %v3800, %v3912
        %v3914 = vpop.f32.mrb[0].mxu0
        %v3915 = vadd.f32 %v3802, %v3914
        %v3916 = vpop.f32.mrb[0].mxu0
        %v3917 = vadd.f32 %v3804, %v3916
        %v3918 = vpop.f32.mrb[0].mxu0
        %v3919 = vadd.f32 %v3806, %v3918
        %3920 = vmatprep.mubr.bf16.mxu0 %v1082
        %3921 = vmatmul.mubr.bf16.gmra.mrb[0].mxu0 %v1081
        %v3922 = vpop.f32.mrb[0].mxu0
        %v3923 = vadd.f32 %v3810, %v3922
        %v3924 = vpop.f32.mrb[0].mxu0
        %v3925 = vadd.f32 %v3812, %v3924
        %v3926 = vpop.f32.mrb[0].mxu0
        %v3927 = vadd.f32 %v3814, %v3926
        %v3928 = vpop.f32.mrb[0].mxu0
        %v3929 = vadd.f32 %v3816, %v3928
        %3930 = vmatprep.mubr.bf16.mxu0 %v1090
        %3931 = vmatmul.mubr.bf16.gmra.mrb[0].mxu0 %v1089
        %v3932 = vpop.f32.mrb[0].mxu0
        %v3933 = vadd.f32 %v3820, %v3932
        %v3934 = vpop.f32.mrb[0].mxu0
        %v3935 = vadd.f32 %v3822, %v3934
        %v3936 = vpop.f32.mrb[0].mxu0
        %v3937 = vadd.f32 %v3824, %v3936
        %v3938 = vpop.f32.mrb[0].mxu0
        %v3939 = vadd.f32 %v3826, %v3938
        %3940 = vmatprep.mubr.bf16.mxu0 %v1098
        %3941 = vmatmul.mubr.bf16.gmra.mrb[0].mxu0 %v1097
        %v3942 = vpop.f32.mrb[0].mxu0
        %v3943 = vadd.f32 %v3830, %v3942
        %v3944 = vpop.f32.mrb[0].mxu0
        %v3945 = vadd.f32 %v3832, %v3944
        %v3946 = vpop.f32.mrb[0].mxu0
        %v3947 = vadd.f32 %v3834, %v3946
        %v3948 = vpop.f32.mrb[0].mxu0
        %v3949 = vadd.f32 %v3836, %v3948
        %3950 = vmatprep.mubr.bf16.mxu0 %v1106
        %3951 = vmatmul.mubr.bf16.gmra.mrb[0].mxu0 %v1105
        %v3952 = vpop.f32.mrb[0].mxu0
        %v3953 = vadd.f32 %v3840, %v3952
        %v3954 = vpop.f32.mrb[0].mxu0
        %v3955 = vadd.f32 %v3842, %v3954
        %v3956 = vpop.f32.mrb[0].mxu0
        %v3957 = vadd.f32 %v3844, %v3956
        %v3958 = vpop.f32.mrb[0].mxu0
        %v3959 = vadd.f32 %v3846, %v3958
        %3960 = vdwg.mxu0
        %3961 = vmatprep.subr.bf16.mxu0 %v2968
        %3962 = vmatpush1.bf16.msra.mxu0 %v2967
        %3963 = vmatprep.subr.bf16.mxu0 %v2976
        %3964 = vmatpush1.bf16.msra.mxu0 %v2975
        %3965 = vmatprep.subr.bf16.mxu0 %v2984
        %3966 = vmatpush1.bf16.msra.mxu0 %v2983
        %3967 = vmatprep.subr.bf16.mxu0 %v2992
        %3968 = vmatpush1.bf16.msra.mxu0 %v2991
        %3969 = vmatprep.subr.bf16.mxu0 %v3000
        %3970 = vmatpush1.bf16.msra.mxu0 %v2999
        %3971 = vmatprep.subr.bf16.mxu0 %v3008
        %3972 = vmatpush1.bf16.msra.mxu0 %v3007
        %3973 = vmatprep.subr.bf16.mxu0 %v3016
        %3974 = vmatpush1.bf16.msra.mxu0 %v3015
        %3975 = vmatprep.subr.bf16.mxu0 %v3024
        %3976 = vmatpush1.bf16.msra.mxu0 %v3023
        %3977 = vmatprep.subr.bf16.mxu0 %v3032
        %3978 = vmatpush1.bf16.msra.mxu0 %v3031
        %3979 = vmatprep.subr.bf16.mxu0 %v3040
        %3980 = vmatpush1.bf16.msra.mxu0 %v3039
        %3981 = vmatprep.subr.bf16.mxu0 %v3048
        %3982 = vmatpush1.bf16.msra.mxu0 %v3047
        %3983 = vmatprep.subr.bf16.mxu0 %v3056
        %3984 = vmatpush1.bf16.msra.mxu0 %v3055
        %3985 = vmatprep.subr.bf16.mxu0 %v3064
        %3986 = vmatpush1.bf16.msra.mxu0 %v3063
        %3987 = vmatprep.subr.bf16.mxu0 %v3072
        %3988 = vmatpush1.bf16.msra.mxu0 %v3071
        %3989 = vmatprep.subr.bf16.mxu0 %v3080
        %3990 = vmatpush1.bf16.msra.mxu0 %v3079
        %3991 = vmatprep.subr.bf16.mxu0 %v3088
        %3992 = vmatpush1.bf16.msra.mxu0 %v3087
        %3993 = vmatprep.mubr.bf16.mxu0 %v1052
        %3994 = vmatmul.mubr.bf16.gmra.mrb[0].mxu0 %v1051
        %v3995 = vpop.f32.mrb[0].mxu0
        %v3996 = vadd.f32 %v3883, %v3995
        %v3997 = vpop.f32.mrb[0].mxu0
        %v3998 = vadd.f32 %v3885, %v3997
        %v3999 = vpop.f32.mrb[0].mxu0
        %v4000 = vadd.f32 %v3887, %v3999
        %v4001 = vpop.f32.mrb[0].mxu0
        %v4002 = vadd.f32 %v3889, %v4001
        %4003 = vmatprep.mubr.bf16.mxu0 %v1060
        %4004 = vmatmul.mubr.bf16.gmra.mrb[0].mxu0 %v1059
        %v4005 = vpop.f32.mrb[0].mxu0
        %v4006 = vadd.f32 %v3893, %v4005
        %v4007 = vpop.f32.mrb[0].mxu0
        %v4008 = vadd.f32 %v3895, %v4007
        %v4009 = vpop.f32.mrb[0].mxu0
        %v4010 = vadd.f32 %v3897, %v4009
        %v4011 = vpop.f32.mrb[0].mxu0
        %v4012 = vadd.f32 %v3899, %v4011
        %4013 = vmatprep.mubr.bf16.mxu0 %v1068
        %4014 = vmatmul.mubr.bf16.gmra.mrb[0].mxu0 %v1067
        %v4015 = vpop.f32.mrb[0].mxu0
        %v4016 = vadd.f32 %v3903, %v4015
        %v4017 = vpop.f32.mrb[0].mxu0
        %v4018 = vadd.f32 %v3905, %v4017
        %v4019 = vpop.f32.mrb[0].mxu0
        %v4020 = vadd.f32 %v3907, %v4019
        %v4021 = vpop.f32.mrb[0].mxu0
        %v4022 = vadd.f32 %v3909, %v4021
        %4023 = vmatprep.mubr.bf16.mxu0 %v1076
        %4024 = vmatmul.mubr.bf16.gmra.mrb[0].mxu0 %v1075
        %v4025 = vpop.f32.mrb[0].mxu0
        %v4026 = vadd.f32 %v3913, %v4025
        %v4027 = vpop.f32.mrb[0].mxu0
        %v4028 = vadd.f32 %v3915, %v4027
        %v4029 = vpop.f32.mrb[0].mxu0
        %v4030 = vadd.f32 %v3917, %v4029
        %v4031 = vpop.f32.mrb[0].mxu0
        %v4032 = vadd.f32 %v3919, %v4031
        %4033 = vmatprep.mubr.bf16.mxu0 %v1084
        %4034 = vmatmul.mubr.bf16.gmra.mrb[0].mxu0 %v1083
        %v4035 = vpop.f32.mrb[0].mxu0
        %v4036 = vadd.f32 %v3923, %v4035
        %v4037 = vpop.f32.mrb[0].mxu0
        %v4038 = vadd.f32 %v3925, %v4037
        %v4039 = vpop.f32.mrb[0].mxu0
        %v4040 = vadd.f32 %v3927, %v4039
        %v4041 = vpop.f32.mrb[0].mxu0
        %v4042 = vadd.f32 %v3929, %v4041
        %4043 = vmatprep.mubr.bf16.mxu0 %v1092
        %4044 = vmatmul.mubr.bf16.gmra.mrb[0].mxu0 %v1091
        %v4045 = vpop.f32.mrb[0].mxu0
        %v4046 = vadd.f32 %v3933, %v4045
        %v4047 = vpop.f32.mrb[0].mxu0
        %v4048 = vadd.f32 %v3935, %v4047
        %v4049 = vpop.f32.mrb[0].mxu0
        %v4050 = vadd.f32 %v3937, %v4049
        %v4051 = vpop.f32.mrb[0].mxu0
        %v4052 = vadd.f32 %v3939, %v4051
        %4053 = vmatprep.mubr.bf16.mxu0 %v1100
        %4054 = vmatmul.mubr.bf16.gmra.mrb[0].mxu0 %v1099
        %v4055 = vpop.f32.mrb[0].mxu0
        %v4056 = vadd.f32 %v3943, %v4055
        %v4057 = vpop.f32.mrb[0].mxu0
        %v4058 = vadd.f32 %v3945, %v4057
        %v4059 = vpop.f32.mrb[0].mxu0
        %v4060 = vadd.f32 %v3947, %v4059
        %v4061 = vpop.f32.mrb[0].mxu0
        %v4062 = vadd.f32 %v3949, %v4061
        %4063 = vmatprep.mubr.bf16.mxu0 %v1108
        %4064 = vmatmul.mubr.bf16.gmra.mrb[0].mxu0 %v1107
        %v4065 = vpop.f32.mrb[0].mxu0
        %v4066 = vadd.f32 %v3953, %v4065
        %v4067 = vpop.f32.mrb[0].mxu0
        %v4068 = vadd.f32 %v3955, %v4067
        %v4069 = vpop.f32.mrb[0].mxu0
        %v4070 = vadd.f32 %v3957, %v4069
        %v4071 = vpop.f32.mrb[0].mxu0
        %v4072 = vadd.f32 %v3959, %v4071
        %4073 = vdwg.mxu0
        %4074 = vmatprep.subr.bf16.mxu0 %v3096
        %4075 = vmatpush1.bf16.msra.mxu0 %v3095
        %4076 = vmatprep.subr.bf16.mxu0 %v3104
        %4077 = vmatpush1.bf16.msra.mxu0 %v3103
        %4078 = vmatprep.subr.bf16.mxu0 %v3112
        %4079 = vmatpush1.bf16.msra.mxu0 %v3111
        %4080 = vmatprep.subr.bf16.mxu0 %v3120
        %4081 = vmatpush1.bf16.msra.mxu0 %v3119
        %4082 = vmatprep.subr.bf16.mxu0 %v3128
        %4083 = vmatpush1.bf16.msra.mxu0 %v3127
        %4084 = vmatprep.subr.bf16.mxu0 %v3136
        %4085 = vmatpush1.bf16.msra.mxu0 %v3135
        %4086 = vmatprep.subr.bf16.mxu0 %v3144
        %4087 = vmatpush1.bf16.msra.mxu0 %v3143
        %4088 = vmatprep.subr.bf16.mxu0 %v3152
        %4089 = vmatpush1.bf16.msra.mxu0 %v3151
        %4090 = vmatprep.subr.bf16.mxu0 %v3160
        %4091 = vmatpush1.bf16.msra.mxu0 %v3159
        %4092 = vmatprep.subr.bf16.mxu0 %v3168
        %4093 = vmatpush1.bf16.msra.mxu0 %v3167
        %4094 = vmatprep.subr.bf16.mxu0 %v3176
        %4095 = vmatpush1.bf16.msra.mxu0 %v3175
        %4096 = vmatprep.subr.bf16.mxu0 %v3184
        %4097 = vmatpush1.bf16.msra.mxu0 %v3183
        %4098 = vmatprep.subr.bf16.mxu0 %v3192
        %4099 = vmatpush1.bf16.msra.mxu0 %v3191
        %4100 = vmatprep.subr.bf16.mxu0 %v3200
        %4101 = vmatpush1.bf16.msra.mxu0 %v3199
        %4102 = vmatprep.subr.bf16.mxu0 %v3208
        %4103 = vmatpush1.bf16.msra.mxu0 %v3207
        %4104 = vmatprep.subr.bf16.mxu0 %v3216
        %4105 = vmatpush1.bf16.msra.mxu0 %v3215
        %4106 = vmatprep.mubr.bf16.mxu0 %v1054
        %4107 = vmatmul.mubr.bf16.gmra.mrb[0].mxu0 %v1053
        %v4108 = vpop.f32.mrb[0].mxu0
        %v4109 = vadd.f32 %v3996, %v4108
        %v4110 = vpop.f32.mrb[0].mxu0
        %v4111 = vadd.f32 %v3998, %v4110
        %v4112 = vpop.f32.mrb[0].mxu0
        %v4113 = vadd.f32 %v4000, %v4112
        %v4114 = vpop.f32.mrb[0].mxu0
        %v4115 = vadd.f32 %v4002, %v4114
        %4116 = vmatprep.mubr.bf16.mxu0 %v1062
        %4117 = vmatmul.mubr.bf16.gmra.mrb[0].mxu0 %v1061
        %v4118 = vpop.f32.mrb[0].mxu0
        %v4119 = vadd.f32 %v4006, %v4118
        %v4120 = vpop.f32.mrb[0].mxu0
        %v4121 = vadd.f32 %v4008, %v4120
        %v4122 = vpop.f32.mrb[0].mxu0
        %v4123 = vadd.f32 %v4010, %v4122
        %v4124 = vpop.f32.mrb[0].mxu0
        %v4125 = vadd.f32 %v4012, %v4124
        %4126 = vmatprep.mubr.bf16.mxu0 %v1070
        %4127 = vmatmul.mubr.bf16.gmra.mrb[0].mxu0 %v1069
        %v4128 = vpop.f32.mrb[0].mxu0
        %v4129 = vadd.f32 %v4016, %v4128
        %v4130 = vpop.f32.mrb[0].mxu0
        %v4131 = vadd.f32 %v4018, %v4130
        %v4132 = vpop.f32.mrb[0].mxu0
        %v4133 = vadd.f32 %v4020, %v4132
        %v4134 = vpop.f32.mrb[0].mxu0
        %v4135 = vadd.f32 %v4022, %v4134
        %4136 = vmatprep.mubr.bf16.mxu0 %v1078
        %4137 = vmatmul.mubr.bf16.gmra.mrb[0].mxu0 %v1077
        %v4138 = vpop.f32.mrb[0].mxu0
        %v4139 = vadd.f32 %v4026, %v4138
        %v4140 = vpop.f32.mrb[0].mxu0
        %v4141 = vadd.f32 %v4028, %v4140
        %v4142 = vpop.f32.mrb[0].mxu0
        %v4143 = vadd.f32 %v4030, %v4142
        %v4144 = vpop.f32.mrb[0].mxu0
        %v4145 = vadd.f32 %v4032, %v4144
        %4146 = vmatprep.mubr.bf16.mxu0 %v1086
        %4147 = vmatmul.mubr.bf16.gmra.mrb[0].mxu0 %v1085
        %v4148 = vpop.f32.mrb[0].mxu0
        %v4149 = vadd.f32 %v4036, %v4148
        %v4150 = vpop.f32.mrb[0].mxu0
        %v4151 = vadd.f32 %v4038, %v4150
        %v4152 = vpop.f32.mrb[0].mxu0
        %v4153 = vadd.f32 %v4040, %v4152
        %v4154 = vpop.f32.mrb[0].mxu0
        %v4155 = vadd.f32 %v4042, %v4154
        %4156 = vmatprep.mubr.bf16.mxu0 %v1094
        %4157 = vmatmul.mubr.bf16.gmra.mrb[0].mxu0 %v1093
        %v4158 = vpop.f32.mrb[0].mxu0
        %v4159 = vadd.f32 %v4046, %v4158
        %v4160 = vpop.f32.mrb[0].mxu0
        %v4161 = vadd.f32 %v4048, %v4160
        %v4162 = vpop.f32.mrb[0].mxu0
        %v4163 = vadd.f32 %v4050, %v4162
        %v4164 = vpop.f32.mrb[0].mxu0
        %v4165 = vadd.f32 %v4052, %v4164
        %4166 = vmatprep.mubr.bf16.mxu0 %v1102
        %4167 = vmatmul.mubr.bf16.gmra.mrb[0].mxu0 %v1101
        %v4168 = vpop.f32.mrb[0].mxu0
        %v4169 = vadd.f32 %v4056, %v4168
        %v4170 = vpop.f32.mrb[0].mxu0
        %v4171 = vadd.f32 %v4058, %v4170
        %v4172 = vpop.f32.mrb[0].mxu0
        %v4173 = vadd.f32 %v4060, %v4172
        %v4174 = vpop.f32.mrb[0].mxu0
        %v4175 = vadd.f32 %v4062, %v4174
        %4176 = vmatprep.mubr.bf16.mxu0 %v1110
        %4177 = vmatmul.mubr.bf16.gmra.mrb[0].mxu0 %v1109
        %v4178 = vpop.f32.mrb[0].mxu0
        %v4179 = vadd.f32 %v4066, %v4178
        %v4180 = vpop.f32.mrb[0].mxu0
        %v4181 = vadd.f32 %v4068, %v4180
        %v4182 = vpop.f32.mrb[0].mxu0
        %v4183 = vadd.f32 %v4070, %v4182
        %v4184 = vpop.f32.mrb[0].mxu0
        %v4185 = vadd.f32 %v4072, %v4184
        %4186 = vdwg.mxu0
        %4187 = vmatprep.subr.bf16.mxu0 %v2714
        %4188 = vmatpush1.bf16.msra.mxu0 %v2713
        %4189 = vmatprep.subr.bf16.mxu0 %v2722
        %4190 = vmatpush1.bf16.msra.mxu0 %v2721
        %4191 = vmatprep.subr.bf16.mxu0 %v2730
        %4192 = vmatpush1.bf16.msra.mxu0 %v2729
        %4193 = vmatprep.subr.bf16.mxu0 %v2738
        %4194 = vmatpush1.bf16.msra.mxu0 %v2737
        %4195 = vmatprep.subr.bf16.mxu0 %v2746
        %4196 = vmatpush1.bf16.msra.mxu0 %v2745
        %4197 = vmatprep.subr.bf16.mxu0 %v2754
        %4198 = vmatpush1.bf16.msra.mxu0 %v2753
        %4199 = vmatprep.subr.bf16.mxu0 %v2762
        %4200 = vmatpush1.bf16.msra.mxu0 %v2761
        %4201 = vmatprep.subr.bf16.mxu0 %v2770
        %4202 = vmatpush1.bf16.msra.mxu0 %v2769
        %4203 = vmatprep.subr.bf16.mxu0 %v2778
        %4204 = vmatpush1.bf16.msra.mxu0 %v2777
        %4205 = vmatprep.subr.bf16.mxu0 %v2786
        %4206 = vmatpush1.bf16.msra.mxu0 %v2785
        %4207 = vmatprep.subr.bf16.mxu0 %v2794
        %4208 = vmatpush1.bf16.msra.mxu0 %v2793
        %4209 = vmatprep.subr.bf16.mxu0 %v2802
        %4210 = vmatpush1.bf16.msra.mxu0 %v2801
        %4211 = vmatprep.subr.bf16.mxu0 %v2810
        %4212 = vmatpush1.bf16.msra.mxu0 %v2809
        %4213 = vmatprep.subr.bf16.mxu0 %v2818
        %4214 = vmatpush1.bf16.msra.mxu0 %v2817
        %4215 = vmatprep.subr.bf16.mxu0 %v2826
        %4216 = vmatpush1.bf16.msra.mxu0 %v2825
        %4217 = vmatprep.subr.bf16.mxu0 %v2834
        %4218 = vmatpush1.bf16.msra.mxu0 %v2833
        %4219 = vmatprep.mubr.bf16.mxu0 %v1048
        %4220 = vmatmul.mubr.bf16.gmra.mrb[0].mxu0 %v1047
        %v4221 = vpop.f32.mrb[0].mxu0
        %v4222 = vadd.f32 0.0, %v4221
        %v4223 = vpop.f32.mrb[0].mxu0
        %v4224 = vadd.f32 0.0, %v4223
        %v4225 = vpop.f32.mrb[0].mxu0
        %v4226 = vadd.f32 0.0, %v4225
        %v4227 = vpop.f32.mrb[0].mxu0
        %v4228 = vadd.f32 0.0, %v4227
        %4229 = vmatprep.mubr.bf16.mxu0 %v1056
        %4230 = vmatmul.mubr.bf16.gmra.mrb[0].mxu0 %v1055
        %v4231 = vpop.f32.mrb[0].mxu0
        %v4232 = vadd.f32 0.0, %v4231
        %v4233 = vpop.f32.mrb[0].mxu0
        %v4234 = vadd.f32 0.0, %v4233
        %v4235 = vpop.f32.mrb[0].mxu0
        %v4236 = vadd.f32 0.0, %v4235
        %v4237 = vpop.f32.mrb[0].mxu0
        %v4238 = vadd.f32 0.0, %v4237
        %4239 = vmatprep.mubr.bf16.mxu0 %v1064
        %4240 = vmatmul.mubr.bf16.gmra.mrb[0].mxu0 %v1063
        %v4241 = vpop.f32.mrb[0].mxu0
        %v4242 = vadd.f32 0.0, %v4241
        %v4243 = vpop.f32.mrb[0].mxu0
        %v4244 = vadd.f32 0.0, %v4243
        %v4245 = vpop.f32.mrb[0].mxu0
        %v4246 = vadd.f32 0.0, %v4245
        %v4247 = vpop.f32.mrb[0].mxu0
        %v4248 = vadd.f32 0.0, %v4247
        %4249 = vmatprep.mubr.bf16.mxu0 %v1072
        %4250 = vmatmul.mubr.bf16.gmra.mrb[0].mxu0 %v1071
        %v4251 = vpop.f32.mrb[0].mxu0
        %v4252 = vadd.f32 0.0, %v4251
        %v4253 = vpop.f32.mrb[0].mxu0
        %v4254 = vadd.f32 0.0, %v4253
        %v4255 = vpop.f32.mrb[0].mxu0
        %v4256 = vadd.f32 0.0, %v4255
        %v4257 = vpop.f32.mrb[0].mxu0
        %v4258 = vadd.f32 0.0, %v4257
        %4259 = vmatprep.mubr.bf16.mxu0 %v1080
        %4260 = vmatmul.mubr.bf16.gmra.mrb[0].mxu0 %v1079
        %v4261 = vpop.f32.mrb[0].mxu0
        %v4262 = vadd.f32 0.0, %v4261
        %v4263 = vpop.f32.mrb[0].mxu0
        %v4264 = vadd.f32 0.0, %v4263
        %v4265 = vpop.f32.mrb[0].mxu0
        %v4266 = vadd.f32 0.0, %v4265
        %v4267 = vpop.f32.mrb[0].mxu0
        %v4268 = vadd.f32 0.0, %v4267
        %4269 = vmatprep.mubr.bf16.mxu0 %v1088
        %4270 = vmatmul.mubr.bf16.gmra.mrb[0].mxu0 %v1087
        %v4271 = vpop.f32.mrb[0].mxu0
        %v4272 = vadd.f32 0.0, %v4271
        %v4273 = vpop.f32.mrb[0].mxu0
        %v4274 = vadd.f32 0.0, %v4273
        %v4275 = vpop.f32.mrb[0].mxu0
        %v4276 = vadd.f32 0.0, %v4275
        %v4277 = vpop.f32.mrb[0].mxu0
        %v4278 = vadd.f32 0.0, %v4277
        %4279 = vmatprep.mubr.bf16.mxu0 %v1096
        %4280 = vmatmul.mubr.bf16.gmra.mrb[0].mxu0 %v1095
        %v4281 = vpop.f32.mrb[0].mxu0
        %v4282 = vadd.f32 0.0, %v4281
        %v4283 = vpop.f32.mrb[0].mxu0
        %v4284 = vadd.f32 0.0, %v4283
        %v4285 = vpop.f32.mrb[0].mxu0
        %v4286 = vadd.f32 0.0, %v4285
        %v4287 = vpop.f32.mrb[0].mxu0
        %v4288 = vadd.f32 0.0, %v4287
        %4289 = vmatprep.mubr.bf16.mxu0 %v1104
        %4290 = vmatmul.mubr.bf16.gmra.mrb[0].mxu0 %v1103
        %v4291 = vpop.f32.mrb[0].mxu0
        %v4292 = vadd.f32 0.0, %v4291
        %v4293 = vpop.f32.mrb[0].mxu0
        %v4294 = vadd.f32 0.0, %v4293
        %v4295 = vpop.f32.mrb[0].mxu0
        %v4296 = vadd.f32 0.0, %v4295
        %v4297 = vpop.f32.mrb[0].mxu0
        %v4298 = vadd.f32 0.0, %v4297
        %4299 = vdwg.mxu0
        %4300 = vmatprep.subr.bf16.mxu0 %v2842
        %4301 = vmatpush1.bf16.msra.mxu0 %v2841
        %4302 = vmatprep.subr.bf16.mxu0 %v2850
        %4303 = vmatpush1.bf16.msra.mxu0 %v2849
        %4304 = vmatprep.subr.bf16.mxu0 %v2858
        %4305 = vmatpush1.bf16.msra.mxu0 %v2857
        %4306 = vmatprep.subr.bf16.mxu0 %v2866
        %4307 = vmatpush1.bf16.msra.mxu0 %v2865
        %4308 = vmatprep.subr.bf16.mxu0 %v2874
        %4309 = vmatpush1.bf16.msra.mxu0 %v2873
        %4310 = vmatprep.subr.bf16.mxu0 %v2882
        %4311 = vmatpush1.bf16.msra.mxu0 %v2881
        %4312 = vmatprep.subr.bf16.mxu0 %v2890
        %4313 = vmatpush1.bf16.msra.mxu0 %v2889
        %4314 = vmatprep.subr.bf16.mxu0 %v2898
        %4315 = vmatpush1.bf16.msra.mxu0 %v2897
        %4316 = vmatprep.subr.bf16.mxu0 %v2906
        %4317 = vmatpush1.bf16.msra.mxu0 %v2905
        %4318 = vmatprep.subr.bf16.mxu0 %v2914
        %4319 = vmatpush1.bf16.msra.mxu0 %v2913
        %4320 = vmatprep.subr.bf16.mxu0 %v2922
        %4321 = vmatpush1.bf16.msra.mxu0 %v2921
        %4322 = vmatprep.subr.bf16.mxu0 %v2930
        %4323 = vmatpush1.bf16.msra.mxu0 %v2929
        %4324 = vmatprep.subr.bf16.mxu0 %v2938
        %4325 = vmatpush1.bf16.msra.mxu0 %v2937
        %4326 = vmatprep.subr.bf16.mxu0 %v2946
        %4327 = vmatpush1.bf16.msra.mxu0 %v2945
        %4328 = vmatprep.subr.bf16.mxu0 %v2954
        %4329 = vmatpush1.bf16.msra.mxu0 %v2953
        %4330 = vmatprep.subr.bf16.mxu0 %v2962
        %4331 = vmatpush1.bf16.msra.mxu0 %v2961
        %4332 = vmatprep.mubr.bf16.mxu0 %v1050
        %4333 = vmatmul.mubr.bf16.gmra.mrb[0].mxu0 %v1049
        %v4334 = vpop.f32.mrb[0].mxu0
        %v4335 = vadd.f32 %v4222, %v4334
        %v4336 = vpop.f32.mrb[0].mxu0
        %v4337 = vadd.f32 %v4224, %v4336
        %v4338 = vpop.f32.mrb[0].mxu0
        %v4339 = vadd.f32 %v4226, %v4338
        %v4340 = vpop.f32.mrb[0].mxu0
        %v4341 = vadd.f32 %v4228, %v4340
        %4342 = vmatprep.mubr.bf16.mxu0 %v1058
        %4343 = vmatmul.mubr.bf16.gmra.mrb[0].mxu0 %v1057
        %v4344 = vpop.f32.mrb[0].mxu0
        %v4345 = vadd.f32 %v4232, %v4344
        %v4346 = vpop.f32.mrb[0].mxu0
        %v4347 = vadd.f32 %v4234, %v4346
        %v4348 = vpop.f32.mrb[0].mxu0
        %v4349 = vadd.f32 %v4236, %v4348
        %v4350 = vpop.f32.mrb[0].mxu0
        %v4351 = vadd.f32 %v4238, %v4350
        %4352 = vmatprep.mubr.bf16.mxu0 %v1066
        %4353 = vmatmul.mubr.bf16.gmra.mrb[0].mxu0 %v1065
        %v4354 = vpop.f32.mrb[0].mxu0
        %v4355 = vadd.f32 %v4242, %v4354
        %v4356 = vpop.f32.mrb[0].mxu0
        %v4357 = vadd.f32 %v4244, %v4356
        %v4358 = vpop.f32.mrb[0].mxu0
        %v4359 = vadd.f32 %v4246, %v4358
        %v4360 = vpop.f32.mrb[0].mxu0
        %v4361 = vadd.f32 %v4248, %v4360
        %4362 = vmatprep.mubr.bf16.mxu0 %v1074
        %4363 = vmatmul.mubr.bf16.gmra.mrb[0].mxu0 %v1073
        %v4364 = vpop.f32.mrb[0].mxu0
        %v4365 = vadd.f32 %v4252, %v4364
        %v4366 = vpop.f32.mrb[0].mxu0
        %v4367 = vadd.f32 %v4254, %v4366
        %v4368 = vpop.f32.mrb[0].mxu0
        %v4369 = vadd.f32 %v4256, %v4368
        %v4370 = vpop.f32.mrb[0].mxu0
        %v4371 = vadd.f32 %v4258, %v4370
        %4372 = vmatprep.mubr.bf16.mxu0 %v1082
        %4373 = vmatmul.mubr.bf16.gmra.mrb[0].mxu0 %v1081
        %v4374 = vpop.f32.mrb[0].mxu0
        %v4375 = vadd.f32 %v4262, %v4374
        %v4376 = vpop.f32.mrb[0].mxu0
        %v4377 = vadd.f32 %v4264, %v4376
        %v4378 = vpop.f32.mrb[0].mxu0
        %v4379 = vadd.f32 %v4266, %v4378
        %v4380 = vpop.f32.mrb[0].mxu0
        %v4381 = vadd.f32 %v4268, %v4380
        %4382 = vmatprep.mubr.bf16.mxu0 %v1090
        %4383 = vmatmul.mubr.bf16.gmra.mrb[0].mxu0 %v1089
        %v4384 = vpop.f32.mrb[0].mxu0
        %v4385 = vadd.f32 %v4272, %v4384
        %v4386 = vpop.f32.mrb[0].mxu0
        %v4387 = vadd.f32 %v4274, %v4386
        %v4388 = vpop.f32.mrb[0].mxu0
        %v4389 = vadd.f32 %v4276, %v4388
        %v4390 = vpop.f32.mrb[0].mxu0
        %v4391 = vadd.f32 %v4278, %v4390
        %4392 = vmatprep.mubr.bf16.mxu0 %v1098
        %4393 = vmatmul.mubr.bf16.gmra.mrb[0].mxu0 %v1097
        %v4394 = vpop.f32.mrb[0].mxu0
        %v4395 = vadd.f32 %v4282, %v4394
        %v4396 = vpop.f32.mrb[0].mxu0
        %v4397 = vadd.f32 %v4284, %v4396
        %v4398 = vpop.f32.mrb[0].mxu0
        %v4399 = vadd.f32 %v4286, %v4398
        %v4400 = vpop.f32.mrb[0].mxu0
        %v4401 = vadd.f32 %v4288, %v4400
        %4402 = vmatprep.mubr.bf16.mxu0 %v1106
        %4403 = vmatmul.mubr.bf16.gmra.mrb[0].mxu0 %v1105
        %v4404 = vpop.f32.mrb[0].mxu0
        %v4405 = vadd.f32 %v4292, %v4404
        %v4406 = vpop.f32.mrb[0].mxu0
        %v4407 = vadd.f32 %v4294, %v4406
        %v4408 = vpop.f32.mrb[0].mxu0
        %v4409 = vadd.f32 %v4296, %v4408
        %v4410 = vpop.f32.mrb[0].mxu0
        %v4411 = vadd.f32 %v4298, %v4410
        %4412 = vdwg.mxu0
        %4413 = vmatprep.subr.bf16.mxu0 %v2970
        %4414 = vmatpush1.bf16.msra.mxu0 %v2969
        %4415 = vmatprep.subr.bf16.mxu0 %v2978
        %4416 = vmatpush1.bf16.msra.mxu0 %v2977
        %4417 = vmatprep.subr.bf16.mxu0 %v2986
        %4418 = vmatpush1.bf16.msra.mxu0 %v2985
        %4419 = vmatprep.subr.bf16.mxu0 %v2994
        %4420 = vmatpush1.bf16.msra.mxu0 %v2993
        %4421 = vmatprep.subr.bf16.mxu0 %v3002
        %4422 = vmatpush1.bf16.msra.mxu0 %v3001
        %4423 = vmatprep.subr.bf16.mxu0 %v3010
        %4424 = vmatpush1.bf16.msra.mxu0 %v3009
        %4425 = vmatprep.subr.bf16.mxu0 %v3018
        %4426 = vmatpush1.bf16.msra.mxu0 %v3017
        %4427 = vmatprep.subr.bf16.mxu0 %v3026
        %4428 = vmatpush1.bf16.msra.mxu0 %v3025
        %4429 = vmatprep.subr.bf16.mxu0 %v3034
        %4430 = vmatpush1.bf16.msra.mxu0 %v3033
        %4431 = vmatprep.subr.bf16.mxu0 %v3042
        %4432 = vmatpush1.bf16.msra.mxu0 %v3041
        %4433 = vmatprep.subr.bf16.mxu0 %v3050
        %4434 = vmatpush1.bf16.msra.mxu0 %v3049
        %4435 = vmatprep.subr.bf16.mxu0 %v3058
        %4436 = vmatpush1.bf16.msra.mxu0 %v3057
        %4437 = vmatprep.subr.bf16.mxu0 %v3066
        %4438 = vmatpush1.bf16.msra.mxu0 %v3065
        %4439 = vmatprep.subr.bf16.mxu0 %v3074
        %4440 = vmatpush1.bf16.msra.mxu0 %v3073
        %4441 = vmatprep.subr.bf16.mxu0 %v3082
        %4442 = vmatpush1.bf16.msra.mxu0 %v3081
        %4443 = vmatprep.subr.bf16.mxu0 %v3090
        %4444 = vmatpush1.bf16.msra.mxu0 %v3089
        %4445 = vmatprep.mubr.bf16.mxu0 %v1052
        %4446 = vmatmul.mubr.bf16.gmra.mrb[0].mxu0 %v1051
        %v4447 = vpop.f32.mrb[0].mxu0
        %v4448 = vadd.f32 %v4335, %v4447
        %v4449 = vpop.f32.mrb[0].mxu0
        %v4450 = vadd.f32 %v4337, %v4449
        %v4451 = vpop.f32.mrb[0].mxu0
        %v4452 = vadd.f32 %v4339, %v4451
        %v4453 = vpop.f32.mrb[0].mxu0
        %v4454 = vadd.f32 %v4341, %v4453
        %4455 = vmatprep.mubr.bf16.mxu0 %v1060
        %4456 = vmatmul.mubr.bf16.gmra.mrb[0].mxu0 %v1059
        %v4457 = vpop.f32.mrb[0].mxu0
        %v4458 = vadd.f32 %v4345, %v4457
        %v4459 = vpop.f32.mrb[0].mxu0
        %v4460 = vadd.f32 %v4347, %v4459
        %v4461 = vpop.f32.mrb[0].mxu0
        %v4462 = vadd.f32 %v4349, %v4461
        %v4463 = vpop.f32.mrb[0].mxu0
        %v4464 = vadd.f32 %v4351, %v4463
        %4465 = vmatprep.mubr.bf16.mxu0 %v1068
        %4466 = vmatmul.mubr.bf16.gmra.mrb[0].mxu0 %v1067
        %v4467 = vpop.f32.mrb[0].mxu0
        %v4468 = vadd.f32 %v4355, %v4467
        %v4469 = vpop.f32.mrb[0].mxu0
        %v4470 = vadd.f32 %v4357, %v4469
        %v4471 = vpop.f32.mrb[0].mxu0
        %v4472 = vadd.f32 %v4359, %v4471
        %v4473 = vpop.f32.mrb[0].mxu0
        %v4474 = vadd.f32 %v4361, %v4473
        %4475 = vmatprep.mubr.bf16.mxu0 %v1076
        %4476 = vmatmul.mubr.bf16.gmra.mrb[0].mxu0 %v1075
        %v4477 = vpop.f32.mrb[0].mxu0
        %v4478 = vadd.f32 %v4365, %v4477
        %v4479 = vpop.f32.mrb[0].mxu0
        %v4480 = vadd.f32 %v4367, %v4479
        %v4481 = vpop.f32.mrb[0].mxu0
        %v4482 = vadd.f32 %v4369, %v4481
        %v4483 = vpop.f32.mrb[0].mxu0
        %v4484 = vadd.f32 %v4371, %v4483
        %4485 = vmatprep.mubr.bf16.mxu0 %v1084
        %4486 = vmatmul.mubr.bf16.gmra.mrb[0].mxu0 %v1083
        %v4487 = vpop.f32.mrb[0].mxu0
        %v4488 = vadd.f32 %v4375, %v4487
        %v4489 = vpop.f32.mrb[0].mxu0
        %v4490 = vadd.f32 %v4377, %v4489
        %v4491 = vpop.f32.mrb[0].mxu0
        %v4492 = vadd.f32 %v4379, %v4491
        %v4493 = vpop.f32.mrb[0].mxu0
        %v4494 = vadd.f32 %v4381, %v4493
        %4495 = vmatprep.mubr.bf16.mxu0 %v1092
        %4496 = vmatmul.mubr.bf16.gmra.mrb[0].mxu0 %v1091
        %v4497 = vpop.f32.mrb[0].mxu0
        %v4498 = vadd.f32 %v4385, %v4497
        %v4499 = vpop.f32.mrb[0].mxu0
        %v4500 = vadd.f32 %v4387, %v4499
        %v4501 = vpop.f32.mrb[0].mxu0
        %v4502 = vadd.f32 %v4389, %v4501
        %v4503 = vpop.f32.mrb[0].mxu0
        %v4504 = vadd.f32 %v4391, %v4503
        %4505 = vmatprep.mubr.bf16.mxu0 %v1100
        %4506 = vmatmul.mubr.bf16.gmra.mrb[0].mxu0 %v1099
        %v4507 = vpop.f32.mrb[0].mxu0
        %v4508 = vadd.f32 %v4395, %v4507
        %v4509 = vpop.f32.mrb[0].mxu0
        %v4510 = vadd.f32 %v4397, %v4509
        %v4511 = vpop.f32.mrb[0].mxu0
        %v4512 = vadd.f32 %v4399, %v4511
        %v4513 = vpop.f32.mrb[0].mxu0
        %v4514 = vadd.f32 %v4401, %v4513
        %4515 = vmatprep.mubr.bf16.mxu0 %v1108
        %4516 = vmatmul.mubr.bf16.gmra.mrb[0].mxu0 %v1107
        %v4517 = vpop.f32.mrb[0].mxu0
        %v4518 = vadd.f32 %v4405, %v4517
        %v4519 = vpop.f32.mrb[0].mxu0
        %v4520 = vadd.f32 %v4407, %v4519
        %v4521 = vpop.f32.mrb[0].mxu0
        %v4522 = vadd.f32 %v4409, %v4521
        %v4523 = vpop.f32.mrb[0].mxu0
        %v4524 = vadd.f32 %v4411, %v4523
        %4525 = vdwg.mxu0
        %4526 = vmatprep.subr.bf16.mxu0 %v3098
        %4527 = vmatpush1.bf16.msra.mxu0 %v3097
        %4528 = vmatprep.subr.bf16.mxu0 %v3106
        %4529 = vmatpush1.bf16.msra.mxu0 %v3105
        %4530 = vmatprep.subr.bf16.mxu0 %v3114
        %4531 = vmatpush1.bf16.msra.mxu0 %v3113
        %4532 = vmatprep.subr.bf16.mxu0 %v3122
        %4533 = vmatpush1.bf16.msra.mxu0 %v3121
        %4534 = vmatprep.subr.bf16.mxu0 %v3130
        %4535 = vmatpush1.bf16.msra.mxu0 %v3129
        %4536 = vmatprep.subr.bf16.mxu0 %v3138
        %4537 = vmatpush1.bf16.msra.mxu0 %v3137
        %4538 = vmatprep.subr.bf16.mxu0 %v3146
        %4539 = vmatpush1.bf16.msra.mxu0 %v3145
        %4540 = vmatprep.subr.bf16.mxu0 %v3154
        %4541 = vmatpush1.bf16.msra.mxu0 %v3153
        %4542 = vmatprep.subr.bf16.mxu0 %v3162
        %4543 = vmatpush1.bf16.msra.mxu0 %v3161
        %4544 = vmatprep.subr.bf16.mxu0 %v3170
        %4545 = vmatpush1.bf16.msra.mxu0 %v3169
        %4546 = vmatprep.subr.bf16.mxu0 %v3178
        %4547 = vmatpush1.bf16.msra.mxu0 %v3177
        %4548 = vmatprep.subr.bf16.mxu0 %v3186
        %4549 = vmatpush1.bf16.msra.mxu0 %v3185
        %4550 = vmatprep.subr.bf16.mxu0 %v3194
        %4551 = vmatpush1.bf16.msra.mxu0 %v3193
        %4552 = vmatprep.subr.bf16.mxu0 %v3202
        %4553 = vmatpush1.bf16.msra.mxu0 %v3201
        %4554 = vmatprep.subr.bf16.mxu0 %v3210
        %4555 = vmatpush1.bf16.msra.mxu0 %v3209
        %4556 = vmatprep.subr.bf16.mxu0 %v3218
        %4557 = vmatpush1.bf16.msra.mxu0 %v3217
        %4558 = vmatprep.mubr.bf16.mxu0 %v1054
        %4559 = vmatmul.mubr.bf16.gmra.mrb[0].mxu0 %v1053
        %v4560 = vpop.f32.mrb[0].mxu0
        %v4561 = vadd.f32 %v4448, %v4560
        %v4562 = vpop.f32.mrb[0].mxu0
        %v4563 = vadd.f32 %v4450, %v4562
        %v4564 = vpop.f32.mrb[0].mxu0
        %v4565 = vadd.f32 %v4452, %v4564
        %v4566 = vpop.f32.mrb[0].mxu0
        %v4567 = vadd.f32 %v4454, %v4566
        %4568 = vmatprep.mubr.bf16.mxu0 %v1062
        %4569 = vmatmul.mubr.bf16.gmra.mrb[0].mxu0 %v1061
        %v4570 = vpop.f32.mrb[0].mxu0
        %v4571 = vadd.f32 %v4458, %v4570
        %v4572 = vpop.f32.mrb[0].mxu0
        %v4573 = vadd.f32 %v4460, %v4572
        %v4574 = vpop.f32.mrb[0].mxu0
        %v4575 = vadd.f32 %v4462, %v4574
        %v4576 = vpop.f32.mrb[0].mxu0
        %v4577 = vadd.f32 %v4464, %v4576
        %4578 = vmatprep.mubr.bf16.mxu0 %v1070
        %4579 = vmatmul.mubr.bf16.gmra.mrb[0].mxu0 %v1069
        %v4580 = vpop.f32.mrb[0].mxu0
        %v4581 = vadd.f32 %v4468, %v4580
        %v4582 = vpop.f32.mrb[0].mxu0
        %v4583 = vadd.f32 %v4470, %v4582
        %v4584 = vpop.f32.mrb[0].mxu0
        %v4585 = vadd.f32 %v4472, %v4584
        %v4586 = vpop.f32.mrb[0].mxu0
        %v4587 = vadd.f32 %v4474, %v4586
        %4588 = vmatprep.mubr.bf16.mxu0 %v1078
        %4589 = vmatmul.mubr.bf16.gmra.mrb[0].mxu0 %v1077
        %v4590 = vpop.f32.mrb[0].mxu0
        %v4591 = vadd.f32 %v4478, %v4590
        %v4592 = vpop.f32.mrb[0].mxu0
        %v4593 = vadd.f32 %v4480, %v4592
        %v4594 = vpop.f32.mrb[0].mxu0
        %v4595 = vadd.f32 %v4482, %v4594
        %v4596 = vpop.f32.mrb[0].mxu0
        %v4597 = vadd.f32 %v4484, %v4596
        %4598 = vmatprep.mubr.bf16.mxu0 %v1086
        %4599 = vmatmul.mubr.bf16.gmra.mrb[0].mxu0 %v1085
        %v4600 = vpop.f32.mrb[0].mxu0
        %v4601 = vadd.f32 %v4488, %v4600
        %v4602 = vpop.f32.mrb[0].mxu0
        %v4603 = vadd.f32 %v4490, %v4602
        %v4604 = vpop.f32.mrb[0].mxu0
        %v4605 = vadd.f32 %v4492, %v4604
        %v4606 = vpop.f32.mrb[0].mxu0
        %v4607 = vadd.f32 %v4494, %v4606
        %4608 = vmatprep.mubr.bf16.mxu0 %v1094
        %4609 = vmatmul.mubr.bf16.gmra.mrb[0].mxu0 %v1093
        %v4610 = vpop.f32.mrb[0].mxu0
        %v4611 = vadd.f32 %v4498, %v4610
        %v4612 = vpop.f32.mrb[0].mxu0
        %v4613 = vadd.f32 %v4500, %v4612
        %v4614 = vpop.f32.mrb[0].mxu0
        %v4615 = vadd.f32 %v4502, %v4614
        %v4616 = vpop.f32.mrb[0].mxu0
        %v4617 = vadd.f32 %v4504, %v4616
        %4618 = vmatprep.mubr.bf16.mxu0 %v1102
        %4619 = vmatmul.mubr.bf16.gmra.mrb[0].mxu0 %v1101
        %v4620 = vpop.f32.mrb[0].mxu0
        %v4621 = vadd.f32 %v4508, %v4620
        %v4622 = vpop.f32.mrb[0].mxu0
        %v4623 = vadd.f32 %v4510, %v4622
        %v4624 = vpop.f32.mrb[0].mxu0
        %v4625 = vadd.f32 %v4512, %v4624
        %v4626 = vpop.f32.mrb[0].mxu0
        %v4627 = vadd.f32 %v4514, %v4626
        %4628 = vmatprep.mubr.bf16.mxu0 %v1110
        %4629 = vmatmul.mubr.bf16.gmra.mrb[0].mxu0 %v1109
        %v4630 = vpop.f32.mrb[0].mxu0
        %v4631 = vadd.f32 %v4518, %v4630
        %v4632 = vpop.f32.mrb[0].mxu0
        %v4633 = vadd.f32 %v4520, %v4632
        %v4634 = vpop.f32.mrb[0].mxu0
        %v4635 = vadd.f32 %v4522, %v4634
        %v4636 = vpop.f32.mrb[0].mxu0
        %v4637 = vadd.f32 %v4524, %v4636
        %4638 = vdwg.mxu0
        %4639 = vmatprep.subr.bf16.mxu0 %v2716
        %4640 = vmatpush1.bf16.msra.mxu0 %v2715
        %4641 = vmatprep.subr.bf16.mxu0 %v2724
        %4642 = vmatpush1.bf16.msra.mxu0 %v2723
        %4643 = vmatprep.subr.bf16.mxu0 %v2732
        %4644 = vmatpush1.bf16.msra.mxu0 %v2731
        %4645 = vmatprep.subr.bf16.mxu0 %v2740
        %4646 = vmatpush1.bf16.msra.mxu0 %v2739
        %4647 = vmatprep.subr.bf16.mxu0 %v2748
        %4648 = vmatpush1.bf16.msra.mxu0 %v2747
        %4649 = vmatprep.subr.bf16.mxu0 %v2756
        %4650 = vmatpush1.bf16.msra.mxu0 %v2755
        %4651 = vmatprep.subr.bf16.mxu0 %v2764
        %4652 = vmatpush1.bf16.msra.mxu0 %v2763
        %4653 = vmatprep.subr.bf16.mxu0 %v2772
        %4654 = vmatpush1.bf16.msra.mxu0 %v2771
        %4655 = vmatprep.subr.bf16.mxu0 %v2780
        %4656 = vmatpush1.bf16.msra.mxu0 %v2779
        %4657 = vmatprep.subr.bf16.mxu0 %v2788
        %4658 = vmatpush1.bf16.msra.mxu0 %v2787
        %4659 = vmatprep.subr.bf16.mxu0 %v2796
        %4660 = vmatpush1.bf16.msra.mxu0 %v2795
        %4661 = vmatprep.subr.bf16.mxu0 %v2804
        %4662 = vmatpush1.bf16.msra.mxu0 %v2803
        %4663 = vmatprep.subr.bf16.mxu0 %v2812
        %4664 = vmatpush1.bf16.msra.mxu0 %v2811
        %4665 = vmatprep.subr.bf16.mxu0 %v2820
        %4666 = vmatpush1.bf16.msra.mxu0 %v2819
        %4667 = vmatprep.subr.bf16.mxu0 %v2828
        %4668 = vmatpush1.bf16.msra.mxu0 %v2827
        %4669 = vmatprep.subr.bf16.mxu0 %v2836
        %4670 = vmatpush1.bf16.msra.mxu0 %v2835
        %4671 = vmatprep.mubr.bf16.mxu0 %v1048
        %4672 = vmatmul.mubr.bf16.gmra.mrb[0].mxu0 %v1047
        %v4673 = vpop.f32.mrb[0].mxu0
        %v4674 = vadd.f32 0.0, %v4673
        %v4675 = vpop.f32.mrb[0].mxu0
        %v4676 = vadd.f32 0.0, %v4675
        %v4677 = vpop.f32.mrb[0].mxu0
        %v4678 = vadd.f32 0.0, %v4677
        %v4679 = vpop.f32.mrb[0].mxu0
        %v4680 = vadd.f32 0.0, %v4679
        %4681 = vmatprep.mubr.bf16.mxu0 %v1056
        %4682 = vmatmul.mubr.bf16.gmra.mrb[0].mxu0 %v1055
        %v4683 = vpop.f32.mrb[0].mxu0
        %v4684 = vadd.f32 0.0, %v4683
        %v4685 = vpop.f32.mrb[0].mxu0
        %v4686 = vadd.f32 0.0, %v4685
        %v4687 = vpop.f32.mrb[0].mxu0
        %v4688 = vadd.f32 0.0, %v4687
        %v4689 = vpop.f32.mrb[0].mxu0
        %v4690 = vadd.f32 0.0, %v4689
        %4691 = vmatprep.mubr.bf16.mxu0 %v1064
        %4692 = vmatmul.mubr.bf16.gmra.mrb[0].mxu0 %v1063
        %v4693 = vpop.f32.mrb[0].mxu0
        %v4694 = vadd.f32 0.0, %v4693
        %v4695 = vpop.f32.mrb[0].mxu0
        %v4696 = vadd.f32 0.0, %v4695
        %v4697 = vpop.f32.mrb[0].mxu0
        %v4698 = vadd.f32 0.0, %v4697
        %v4699 = vpop.f32.mrb[0].mxu0
        %v4700 = vadd.f32 0.0, %v4699
        %4701 = vmatprep.mubr.bf16.mxu0 %v1072
        %4702 = vmatmul.mubr.bf16.gmra.mrb[0].mxu0 %v1071
        %v4703 = vpop.f32.mrb[0].mxu0
        %v4704 = vadd.f32 0.0, %v4703
        %v4705 = vpop.f32.mrb[0].mxu0
        %v4706 = vadd.f32 0.0, %v4705
        %v4707 = vpop.f32.mrb[0].mxu0
        %v4708 = vadd.f32 0.0, %v4707
        %v4709 = vpop.f32.mrb[0].mxu0
        %v4710 = vadd.f32 0.0, %v4709
        %4711 = vmatprep.mubr.bf16.mxu0 %v1080
        %4712 = vmatmul.mubr.bf16.gmra.mrb[0].mxu0 %v1079
        %v4713 = vpop.f32.mrb[0].mxu0
        %v4714 = vadd.f32 0.0, %v4713
        %v4715 = vpop.f32.mrb[0].mxu0
        %v4716 = vadd.f32 0.0, %v4715
        %v4717 = vpop.f32.mrb[0].mxu0
        %v4718 = vadd.f32 0.0, %v4717
        %v4719 = vpop.f32.mrb[0].mxu0
        %v4720 = vadd.f32 0.0, %v4719
        %4721 = vmatprep.mubr.bf16.mxu0 %v1088
        %4722 = vmatmul.mubr.bf16.gmra.mrb[0].mxu0 %v1087
        %v4723 = vpop.f32.mrb[0].mxu0
        %v4724 = vadd.f32 0.0, %v4723
        %v4725 = vpop.f32.mrb[0].mxu0
        %v4726 = vadd.f32 0.0, %v4725
        %v4727 = vpop.f32.mrb[0].mxu0
        %v4728 = vadd.f32 0.0, %v4727
        %v4729 = vpop.f32.mrb[0].mxu0
        %v4730 = vadd.f32 0.0, %v4729
        %4731 = vmatprep.mubr.bf16.mxu0 %v1096
        %4732 = vmatmul.mubr.bf16.gmra.mrb[0].mxu0 %v1095
        %v4733 = vpop.f32.mrb[0].mxu0
        %v4734 = vadd.f32 0.0, %v4733
        %v4735 = vpop.f32.mrb[0].mxu0
        %v4736 = vadd.f32 0.0, %v4735
        %v4737 = vpop.f32.mrb[0].mxu0
        %v4738 = vadd.f32 0.0, %v4737
        %v4739 = vpop.f32.mrb[0].mxu0
        %v4740 = vadd.f32 0.0, %v4739
        %4741 = vmatprep.mubr.bf16.mxu0 %v1104
        %4742 = vmatmul.mubr.bf16.gmra.mrb[0].mxu0 %v1103
        %v4743 = vpop.f32.mrb[0].mxu0
        %v4744 = vadd.f32 0.0, %v4743
        %v4745 = vpop.f32.mrb[0].mxu0
        %v4746 = vadd.f32 0.0, %v4745
        %v4747 = vpop.f32.mrb[0].mxu0
        %v4748 = vadd.f32 0.0, %v4747
        %v4749 = vpop.f32.mrb[0].mxu0
        %v4750 = vadd.f32 0.0, %v4749
        %4751 = vdwg.mxu0
        %4752 = vmatprep.subr.bf16.mxu0 %v2844
        %4753 = vmatpush1.bf16.msra.mxu0 %v2843
        %4754 = vmatprep.subr.bf16.mxu0 %v2852
        %4755 = vmatpush1.bf16.msra.mxu0 %v2851
        %4756 = vmatprep.subr.bf16.mxu0 %v2860
        %4757 = vmatpush1.bf16.msra.mxu0 %v2859
        %4758 = vmatprep.subr.bf16.mxu0 %v2868
        %4759 = vmatpush1.bf16.msra.mxu0 %v2867
        %4760 = vmatprep.subr.bf16.mxu0 %v2876
        %4761 = vmatpush1.bf16.msra.mxu0 %v2875
        %4762 = vmatprep.subr.bf16.mxu0 %v2884
        %4763 = vmatpush1.bf16.msra.mxu0 %v2883
        %4764 = vmatprep.subr.bf16.mxu0 %v2892
        %4765 = vmatpush1.bf16.msra.mxu0 %v2891
        %4766 = vmatprep.subr.bf16.mxu0 %v2900
        %4767 = vmatpush1.bf16.msra.mxu0 %v2899
        %4768 = vmatprep.subr.bf16.mxu0 %v2908
        %4769 = vmatpush1.bf16.msra.mxu0 %v2907
        %4770 = vmatprep.subr.bf16.mxu0 %v2916
        %4771 = vmatpush1.bf16.msra.mxu0 %v2915
        %4772 = vmatprep.subr.bf16.mxu0 %v2924
        %4773 = vmatpush1.bf16.msra.mxu0 %v2923
        %4774 = vmatprep.subr.bf16.mxu0 %v2932
        %4775 = vmatpush1.bf16.msra.mxu0 %v2931
        %4776 = vmatprep.subr.bf16.mxu0 %v2940
        %4777 = vmatpush1.bf16.msra.mxu0 %v2939
        %4778 = vmatprep.subr.bf16.mxu0 %v2948
        %4779 = vmatpush1.bf16.msra.mxu0 %v2947
        %4780 = vmatprep.subr.bf16.mxu0 %v2956
        %4781 = vmatpush1.bf16.msra.mxu0 %v2955
        %4782 = vmatprep.subr.bf16.mxu0 %v2964
        %4783 = vmatpush1.bf16.msra.mxu0 %v2963
        %4784 = vmatprep.mubr.bf16.mxu0 %v1050
        %4785 = vmatmul.mubr.bf16.gmra.mrb[0].mxu0 %v1049
        %v4786 = vpop.f32.mrb[0].mxu0
        %v4787 = vadd.f32 %v4674, %v4786
        %v4788 = vpop.f32.mrb[0].mxu0
        %v4789 = vadd.f32 %v4676, %v4788
        %v4790 = vpop.f32.mrb[0].mxu0
        %v4791 = vadd.f32 %v4678, %v4790
        %v4792 = vpop.f32.mrb[0].mxu0
        %v4793 = vadd.f32 %v4680, %v4792
        %4794 = vmatprep.mubr.bf16.mxu0 %v1058
        %4795 = vmatmul.mubr.bf16.gmra.mrb[0].mxu0 %v1057
        %v4796 = vpop.f32.mrb[0].mxu0
        %v4797 = vadd.f32 %v4684, %v4796
        %v4798 = vpop.f32.mrb[0].mxu0
        %v4799 = vadd.f32 %v4686, %v4798
        %v4800 = vpop.f32.mrb[0].mxu0
        %v4801 = vadd.f32 %v4688, %v4800
        %v4802 = vpop.f32.mrb[0].mxu0
        %v4803 = vadd.f32 %v4690, %v4802
        %4804 = vmatprep.mubr.bf16.mxu0 %v1066
        %4805 = vmatmul.mubr.bf16.gmra.mrb[0].mxu0 %v1065
        %v4806 = vpop.f32.mrb[0].mxu0
        %v4807 = vadd.f32 %v4694, %v4806
        %v4808 = vpop.f32.mrb[0].mxu0
        %v4809 = vadd.f32 %v4696, %v4808
        %v4810 = vpop.f32.mrb[0].mxu0
        %v4811 = vadd.f32 %v4698, %v4810
        %v4812 = vpop.f32.mrb[0].mxu0
        %v4813 = vadd.f32 %v4700, %v4812
        %4814 = vmatprep.mubr.bf16.mxu0 %v1074
        %4815 = vmatmul.mubr.bf16.gmra.mrb[0].mxu0 %v1073
        %v4816 = vpop.f32.mrb[0].mxu0
        %v4817 = vadd.f32 %v4704, %v4816
        %v4818 = vpop.f32.mrb[0].mxu0
        %v4819 = vadd.f32 %v4706, %v4818
        %v4820 = vpop.f32.mrb[0].mxu0
        %v4821 = vadd.f32 %v4708, %v4820
        %v4822 = vpop.f32.mrb[0].mxu0
        %v4823 = vadd.f32 %v4710, %v4822
        %4824 = vmatprep.mubr.bf16.mxu0 %v1082
        %4825 = vmatmul.mubr.bf16.gmra.mrb[0].mxu0 %v1081
        %v4826 = vpop.f32.mrb[0].mxu0
        %v4827 = vadd.f32 %v4714, %v4826
        %v4828 = vpop.f32.mrb[0].mxu0
        %v4829 = vadd.f32 %v4716, %v4828
        %v4830 = vpop.f32.mrb[0].mxu0
        %v4831 = vadd.f32 %v4718, %v4830
        %v4832 = vpop.f32.mrb[0].mxu0
        %v4833 = vadd.f32 %v4720, %v4832
        %4834 = vmatprep.mubr.bf16.mxu0 %v1090
        %4835 = vmatmul.mubr.bf16.gmra.mrb[0].mxu0 %v1089
        %v4836 = vpop.f32.mrb[0].mxu0
        %v4837 = vadd.f32 %v4724, %v4836
        %v4838 = vpop.f32.mrb[0].mxu0
        %v4839 = vadd.f32 %v4726, %v4838
        %v4840 = vpop.f32.mrb[0].mxu0
        %v4841 = vadd.f32 %v4728, %v4840
        %v4842 = vpop.f32.mrb[0].mxu0
        %v4843 = vadd.f32 %v4730, %v4842
        %4844 = vmatprep.mubr.bf16.mxu0 %v1098
        %4845 = vmatmul.mubr.bf16.gmra.mrb[0].mxu0 %v1097
        %v4846 = vpop.f32.mrb[0].mxu0
        %v4847 = vadd.f32 %v4734, %v4846
        %v4848 = vpop.f32.mrb[0].mxu0
        %v4849 = vadd.f32 %v4736, %v4848
        %v4850 = vpop.f32.mrb[0].mxu0
        %v4851 = vadd.f32 %v4738, %v4850
        %v4852 = vpop.f32.mrb[0].mxu0
        %v4853 = vadd.f32 %v4740, %v4852
        %4854 = vmatprep.mubr.bf16.mxu0 %v1106
        %4855 = vmatmul.mubr.bf16.gmra.mrb[0].mxu0 %v1105
        %v4856 = vpop.f32.mrb[0].mxu0
        %v4857 = vadd.f32 %v4744, %v4856
        %v4858 = vpop.f32.mrb[0].mxu0
        %v4859 = vadd.f32 %v4746, %v4858
        %v4860 = vpop.f32.mrb[0].mxu0
        %v4861 = vadd.f32 %v4748, %v4860
        %v4862 = vpop.f32.mrb[0].mxu0
        %v4863 = vadd.f32 %v4750, %v4862
        %4864 = vdwg.mxu0
        %4865 = vmatprep.subr.bf16.mxu0 %v2972
        %4866 = vmatpush1.bf16.msra.mxu0 %v2971
        %4867 = vmatprep.subr.bf16.mxu0 %v2980
        %4868 = vmatpush1.bf16.msra.mxu0 %v2979
        %4869 = vmatprep.subr.bf16.mxu0 %v2988
        %4870 = vmatpush1.bf16.msra.mxu0 %v2987
        %4871 = vmatprep.subr.bf16.mxu0 %v2996
        %4872 = vmatpush1.bf16.msra.mxu0 %v2995
        %4873 = vmatprep.subr.bf16.mxu0 %v3004
        %4874 = vmatpush1.bf16.msra.mxu0 %v3003
        %4875 = vmatprep.subr.bf16.mxu0 %v3012
        %4876 = vmatpush1.bf16.msra.mxu0 %v3011
        %4877 = vmatprep.subr.bf16.mxu0 %v3020
        %4878 = vmatpush1.bf16.msra.mxu0 %v3019
        %4879 = vmatprep.subr.bf16.mxu0 %v3028
        %4880 = vmatpush1.bf16.msra.mxu0 %v3027
        %4881 = vmatprep.subr.bf16.mxu0 %v3036
        %4882 = vmatpush1.bf16.msra.mxu0 %v3035
        %4883 = vmatprep.subr.bf16.mxu0 %v3044
        %4884 = vmatpush1.bf16.msra.mxu0 %v3043
        %4885 = vmatprep.subr.bf16.mxu0 %v3052
        %4886 = vmatpush1.bf16.msra.mxu0 %v3051
        %4887 = vmatprep.subr.bf16.mxu0 %v3060
        %4888 = vmatpush1.bf16.msra.mxu0 %v3059
        %4889 = vmatprep.subr.bf16.mxu0 %v3068
        %4890 = vmatpush1.bf16.msra.mxu0 %v3067
        %4891 = vmatprep.subr.bf16.mxu0 %v3076
        %4892 = vmatpush1.bf16.msra.mxu0 %v3075
        %4893 = vmatprep.subr.bf16.mxu0 %v3084
        %4894 = vmatpush1.bf16.msra.mxu0 %v3083
        %4895 = vmatprep.subr.bf16.mxu0 %v3092
        %4896 = vmatpush1.bf16.msra.mxu0 %v3091
        %4897 = vmatprep.mubr.bf16.mxu0 %v1052
        %4898 = vmatmul.mubr.bf16.gmra.mrb[0].mxu0 %v1051
        %v4899 = vpop.f32.mrb[0].mxu0
        %v4900 = vadd.f32 %v4787, %v4899
        %v4901 = vpop.f32.mrb[0].mxu0
        %v4902 = vadd.f32 %v4789, %v4901
        %v4903 = vpop.f32.mrb[0].mxu0
        %v4904 = vadd.f32 %v4791, %v4903
        %v4905 = vpop.f32.mrb[0].mxu0
        %v4906 = vadd.f32 %v4793, %v4905
        %4907 = vmatprep.mubr.bf16.mxu0 %v1060
        %4908 = vmatmul.mubr.bf16.gmra.mrb[0].mxu0 %v1059
        %v4909 = vpop.f32.mrb[0].mxu0
        %v4910 = vadd.f32 %v4797, %v4909
        %v4911 = vpop.f32.mrb[0].mxu0
        %v4912 = vadd.f32 %v4799, %v4911
        %v4913 = vpop.f32.mrb[0].mxu0
        %v4914 = vadd.f32 %v4801, %v4913
        %v4915 = vpop.f32.mrb[0].mxu0
        %v4916 = vadd.f32 %v4803, %v4915
        %4917 = vmatprep.mubr.bf16.mxu0 %v1068
        %4918 = vmatmul.mubr.bf16.gmra.mrb[0].mxu0 %v1067
        %v4919 = vpop.f32.mrb[0].mxu0
        %v4920 = vadd.f32 %v4807, %v4919
        %v4921 = vpop.f32.mrb[0].mxu0
        %v4922 = vadd.f32 %v4809, %v4921
        %v4923 = vpop.f32.mrb[0].mxu0
        %v4924 = vadd.f32 %v4811, %v4923
        %v4925 = vpop.f32.mrb[0].mxu0
        %v4926 = vadd.f32 %v4813, %v4925
        %4927 = vmatprep.mubr.bf16.mxu0 %v1076
        %4928 = vmatmul.mubr.bf16.gmra.mrb[0].mxu0 %v1075
        %v4929 = vpop.f32.mrb[0].mxu0
        %v4930 = vadd.f32 %v4817, %v4929
        %v4931 = vpop.f32.mrb[0].mxu0
        %v4932 = vadd.f32 %v4819, %v4931
        %v4933 = vpop.f32.mrb[0].mxu0
        %v4934 = vadd.f32 %v4821, %v4933
        %v4935 = vpop.f32.mrb[0].mxu0
        %v4936 = vadd.f32 %v4823, %v4935
        %4937 = vmatprep.mubr.bf16.mxu0 %v1084
        %4938 = vmatmul.mubr.bf16.gmra.mrb[0].mxu0 %v1083
        %v4939 = vpop.f32.mrb[0].mxu0
        %v4940 = vadd.f32 %v4827, %v4939
        %v4941 = vpop.f32.mrb[0].mxu0
        %v4942 = vadd.f32 %v4829, %v4941
        %v4943 = vpop.f32.mrb[0].mxu0
        %v4944 = vadd.f32 %v4831, %v4943
        %v4945 = vpop.f32.mrb[0].mxu0
        %v4946 = vadd.f32 %v4833, %v4945
        %4947 = vmatprep.mubr.bf16.mxu0 %v1092
        %4948 = vmatmul.mubr.bf16.gmra.mrb[0].mxu0 %v1091
        %v4949 = vpop.f32.mrb[0].mxu0
        %v4950 = vadd.f32 %v4837, %v4949
        %v4951 = vpop.f32.mrb[0].mxu0
        %v4952 = vadd.f32 %v4839, %v4951
        %v4953 = vpop.f32.mrb[0].mxu0
        %v4954 = vadd.f32 %v4841, %v4953
        %v4955 = vpop.f32.mrb[0].mxu0
        %v4956 = vadd.f32 %v4843, %v4955
        %4957 = vmatprep.mubr.bf16.mxu0 %v1100
        %4958 = vmatmul.mubr.bf16.gmra.mrb[0].mxu0 %v1099
        %v4959 = vpop.f32.mrb[0].mxu0
        %v4960 = vadd.f32 %v4847, %v4959
        %v4961 = vpop.f32.mrb[0].mxu0
        %v4962 = vadd.f32 %v4849, %v4961
        %v4963 = vpop.f32.mrb[0].mxu0
        %v4964 = vadd.f32 %v4851, %v4963
        %v4965 = vpop.f32.mrb[0].mxu0
        %v4966 = vadd.f32 %v4853, %v4965
        %4967 = vmatprep.mubr.bf16.mxu0 %v1108
        %4968 = vmatmul.mubr.bf16.gmra.mrb[0].mxu0 %v1107
        %v4969 = vpop.f32.mrb[0].mxu0
        %v4970 = vadd.f32 %v4857, %v4969
        %v4971 = vpop.f32.mrb[0].mxu0
        %v4972 = vadd.f32 %v4859, %v4971
        %v4973 = vpop.f32.mrb[0].mxu0
        %v4974 = vadd.f32 %v4861, %v4973
        %v4975 = vpop.f32.mrb[0].mxu0
        %v4976 = vadd.f32 %v4863, %v4975
        %4977 = vdwg.mxu0
        %4978 = vmatprep.subr.bf16.mxu0 %v3100
        %4979 = vmatpush1.bf16.msra.mxu0 %v3099
        %4980 = vmatprep.subr.bf16.mxu0 %v3108
        %4981 = vmatpush1.bf16.msra.mxu0 %v3107
        %4982 = vmatprep.subr.bf16.mxu0 %v3116
        %4983 = vmatpush1.bf16.msra.mxu0 %v3115
        %4984 = vmatprep.subr.bf16.mxu0 %v3124
        %4985 = vmatpush1.bf16.msra.mxu0 %v3123
        %4986 = vmatprep.subr.bf16.mxu0 %v3132
        %4987 = vmatpush1.bf16.msra.mxu0 %v3131
        %4988 = vmatprep.subr.bf16.mxu0 %v3140
        %4989 = vmatpush1.bf16.msra.mxu0 %v3139
        %4990 = vmatprep.subr.bf16.mxu0 %v3148
        %4991 = vmatpush1.bf16.msra.mxu0 %v3147
        %4992 = vmatprep.subr.bf16.mxu0 %v3156
        %4993 = vmatpush1.bf16.msra.mxu0 %v3155
        %4994 = vmatprep.subr.bf16.mxu0 %v3164
        %4995 = vmatpush1.bf16.msra.mxu0 %v3163
        %4996 = vmatprep.subr.bf16.mxu0 %v3172
        %4997 = vmatpush1.bf16.msra.mxu0 %v3171
        %4998 = vmatprep.subr.bf16.mxu0 %v3180
        %4999 = vmatpush1.bf16.msra.mxu0 %v3179
        %5000 = vmatprep.subr.bf16.mxu0 %v3188
        %5001 = vmatpush1.bf16.msra.mxu0 %v3187
        %5002 = vmatprep.subr.bf16.mxu0 %v3196
        %5003 = vmatpush1.bf16.msra.mxu0 %v3195
        %5004 = vmatprep.subr.bf16.mxu0 %v3204
        %5005 = vmatpush1.bf16.msra.mxu0 %v3203
        %5006 = vmatprep.subr.bf16.mxu0 %v3212
        %5007 = vmatpush1.bf16.msra.mxu0 %v3211
        %5008 = vmatprep.subr.bf16.mxu0 %v3220
        %5009 = vmatpush1.bf16.msra.mxu0 %v3219
        %5010 = vmatprep.mubr.bf16.mxu0 %v1054
        %5011 = vmatmul.mubr.bf16.gmra.mrb[0].mxu0 %v1053
        %v5012 = vpop.f32.mrb[0].mxu0
        %v5013 = vadd.f32 %v4900, %v5012
        %v5014 = vpop.f32.mrb[0].mxu0
        %v5015 = vadd.f32 %v4902, %v5014
        %v5016 = vpop.f32.mrb[0].mxu0
        %v5017 = vadd.f32 %v4904, %v5016
        %v5018 = vpop.f32.mrb[0].mxu0
        %v5019 = vadd.f32 %v4906, %v5018
        %5020 = vmatprep.mubr.bf16.mxu0 %v1062
        %5021 = vmatmul.mubr.bf16.gmra.mrb[0].mxu0 %v1061
        %v5022 = vpop.f32.mrb[0].mxu0
        %v5023 = vadd.f32 %v4910, %v5022
        %v5024 = vpop.f32.mrb[0].mxu0
        %v5025 = vadd.f32 %v4912, %v5024
        %v5026 = vpop.f32.mrb[0].mxu0
        %v5027 = vadd.f32 %v4914, %v5026
        %v5028 = vpop.f32.mrb[0].mxu0
        %v5029 = vadd.f32 %v4916, %v5028
        %5030 = vmatprep.mubr.bf16.mxu0 %v1070
        %5031 = vmatmul.mubr.bf16.gmra.mrb[0].mxu0 %v1069
        %v5032 = vpop.f32.mrb[0].mxu0
        %v5033 = vadd.f32 %v4920, %v5032
        %v5034 = vpop.f32.mrb[0].mxu0
        %v5035 = vadd.f32 %v4922, %v5034
        %v5036 = vpop.f32.mrb[0].mxu0
        %v5037 = vadd.f32 %v4924, %v5036
        %v5038 = vpop.f32.mrb[0].mxu0
        %v5039 = vadd.f32 %v4926, %v5038
        %5040 = vmatprep.mubr.bf16.mxu0 %v1078
        %5041 = vmatmul.mubr.bf16.gmra.mrb[0].mxu0 %v1077
        %v5042 = vpop.f32.mrb[0].mxu0
        %v5043 = vadd.f32 %v4930, %v5042
        %v5044 = vpop.f32.mrb[0].mxu0
        %v5045 = vadd.f32 %v4932, %v5044
        %v5046 = vpop.f32.mrb[0].mxu0
        %v5047 = vadd.f32 %v4934, %v5046
        %v5048 = vpop.f32.mrb[0].mxu0
        %v5049 = vadd.f32 %v4936, %v5048
        %5050 = vmatprep.mubr.bf16.mxu0 %v1086
        %5051 = vmatmul.mubr.bf16.gmra.mrb[0].mxu0 %v1085
        %v5052 = vpop.f32.mrb[0].mxu0
        %v5053 = vadd.f32 %v4940, %v5052
        %v5054 = vpop.f32.mrb[0].mxu0
        %v5055 = vadd.f32 %v4942, %v5054
        %v5056 = vpop.f32.mrb[0].mxu0
        %v5057 = vadd.f32 %v4944, %v5056
        %v5058 = vpop.f32.mrb[0].mxu0
        %v5059 = vadd.f32 %v4946, %v5058
        %5060 = vmatprep.mubr.bf16.mxu0 %v1094
        %5061 = vmatmul.mubr.bf16.gmra.mrb[0].mxu0 %v1093
        %v5062 = vpop.f32.mrb[0].mxu0
        %v5063 = vadd.f32 %v4950, %v5062
        %v5064 = vpop.f32.mrb[0].mxu0
        %v5065 = vadd.f32 %v4952, %v5064
        %v5066 = vpop.f32.mrb[0].mxu0
        %v5067 = vadd.f32 %v4954, %v5066
        %v5068 = vpop.f32.mrb[0].mxu0
        %v5069 = vadd.f32 %v4956, %v5068
        %5070 = vmatprep.mubr.bf16.mxu0 %v1102
        %5071 = vmatmul.mubr.bf16.gmra.mrb[0].mxu0 %v1101
        %v5072 = vpop.f32.mrb[0].mxu0
        %v5073 = vadd.f32 %v4960, %v5072
        %v5074 = vpop.f32.mrb[0].mxu0
        %v5075 = vadd.f32 %v4962, %v5074
        %v5076 = vpop.f32.mrb[0].mxu0
        %v5077 = vadd.f32 %v4964, %v5076
        %v5078 = vpop.f32.mrb[0].mxu0
        %v5079 = vadd.f32 %v4966, %v5078
        %5080 = vmatprep.mubr.bf16.mxu0 %v1110
        %5081 = vmatmul.mubr.bf16.gmra.mrb[0].mxu0 %v1109
        %v5082 = vpop.f32.mrb[0].mxu0
        %v5083 = vadd.f32 %v4970, %v5082
        %v5084 = vpop.f32.mrb[0].mxu0
        %v5085 = vadd.f32 %v4972, %v5084
        %v5086 = vpop.f32.mrb[0].mxu0
        %v5087 = vadd.f32 %v4974, %v5086
        %v5088 = vpop.f32.mrb[0].mxu0
        %v5089 = vadd.f32 %v4976, %v5088
        %5090 = vdwg.mxu0
        %5091 = vmatprep.subr.bf16.mxu0 %v2718
        %5092 = vmatpush1.bf16.msra.mxu0 %v2717
        %5093 = vmatprep.subr.bf16.mxu0 %v2726
        %5094 = vmatpush1.bf16.msra.mxu0 %v2725
        %5095 = vmatprep.subr.bf16.mxu0 %v2734
        %5096 = vmatpush1.bf16.msra.mxu0 %v2733
        %5097 = vmatprep.subr.bf16.mxu0 %v2742
        %5098 = vmatpush1.bf16.msra.mxu0 %v2741
        %5099 = vmatprep.subr.bf16.mxu0 %v2750
        %5100 = vmatpush1.bf16.msra.mxu0 %v2749
        %5101 = vmatprep.subr.bf16.mxu0 %v2758
        %5102 = vmatpush1.bf16.msra.mxu0 %v2757
        %5103 = vmatprep.subr.bf16.mxu0 %v2766
        %5104 = vmatpush1.bf16.msra.mxu0 %v2765
        %5105 = vmatprep.subr.bf16.mxu0 %v2774
        %5106 = vmatpush1.bf16.msra.mxu0 %v2773
        %5107 = vmatprep.subr.bf16.mxu0 %v2782
        %5108 = vmatpush1.bf16.msra.mxu0 %v2781
        %5109 = vmatprep.subr.bf16.mxu0 %v2790
        %5110 = vmatpush1.bf16.msra.mxu0 %v2789
        %5111 = vmatprep.subr.bf16.mxu0 %v2798
        %5112 = vmatpush1.bf16.msra.mxu0 %v2797
        %5113 = vmatprep.subr.bf16.mxu0 %v2806
        %5114 = vmatpush1.bf16.msra.mxu0 %v2805
        %5115 = vmatprep.subr.bf16.mxu0 %v2814
        %5116 = vmatpush1.bf16.msra.mxu0 %v2813
        %5117 = vmatprep.subr.bf16.mxu0 %v2822
        %5118 = vmatpush1.bf16.msra.mxu0 %v2821
        %5119 = vmatprep.subr.bf16.mxu0 %v2830
        %5120 = vmatpush1.bf16.msra.mxu0 %v2829
        %5121 = vmatprep.subr.bf16.mxu0 %v2838
        %5122 = vmatpush1.bf16.msra.mxu0 %v2837
        %5123 = vmatprep.mubr.bf16.mxu0 %v1048
        %5124 = vmatmul.mubr.bf16.gmra.mrb[0].mxu0 %v1047
        %v5125 = vpop.f32.mrb[0].mxu0
        %v5126 = vadd.f32 0.0, %v5125
        %v5127 = vpop.f32.mrb[0].mxu0
        %v5128 = vadd.f32 0.0, %v5127
        %v5129 = vpop.f32.mrb[0].mxu0
        %v5130 = vadd.f32 0.0, %v5129
        %v5131 = vpop.f32.mrb[0].mxu0
        %v5132 = vadd.f32 0.0, %v5131
        %5133 = vmatprep.mubr.bf16.mxu0 %v1056
        %5134 = vmatmul.mubr.bf16.gmra.mrb[0].mxu0 %v1055
        %v5135 = vpop.f32.mrb[0].mxu0
        %v5136 = vadd.f32 0.0, %v5135
        %v5137 = vpop.f32.mrb[0].mxu0
        %v5138 = vadd.f32 0.0, %v5137
        %v5139 = vpop.f32.mrb[0].mxu0
        %v5140 = vadd.f32 0.0, %v5139
        %v5141 = vpop.f32.mrb[0].mxu0
        %v5142 = vadd.f32 0.0, %v5141
        %5143 = vmatprep.mubr.bf16.mxu0 %v1064
        %5144 = vmatmul.mubr.bf16.gmra.mrb[0].mxu0 %v1063
        %v5145 = vpop.f32.mrb[0].mxu0
        %v5146 = vadd.f32 0.0, %v5145
        %v5147 = vpop.f32.mrb[0].mxu0
        %v5148 = vadd.f32 0.0, %v5147
        %v5149 = vpop.f32.mrb[0].mxu0
        %v5150 = vadd.f32 0.0, %v5149
        %v5151 = vpop.f32.mrb[0].mxu0
        %v5152 = vadd.f32 0.0, %v5151
        %5153 = vmatprep.mubr.bf16.mxu0 %v1072
        %5154 = vmatmul.mubr.bf16.gmra.mrb[0].mxu0 %v1071
        %v5155 = vpop.f32.mrb[0].mxu0
        %v5156 = vadd.f32 0.0, %v5155
        %v5157 = vpop.f32.mrb[0].mxu0
        %v5158 = vadd.f32 0.0, %v5157
        %v5159 = vpop.f32.mrb[0].mxu0
        %v5160 = vadd.f32 0.0, %v5159
        %v5161 = vpop.f32.mrb[0].mxu0
        %v5162 = vadd.f32 0.0, %v5161
        %5163 = vmatprep.mubr.bf16.mxu0 %v1080
        %5164 = vmatmul.mubr.bf16.gmra.mrb[0].mxu0 %v1079
        %v5165 = vpop.f32.mrb[0].mxu0
        %v5166 = vadd.f32 0.0, %v5165
        %v5167 = vpop.f32.mrb[0].mxu0
        %v5168 = vadd.f32 0.0, %v5167
        %v5169 = vpop.f32.mrb[0].mxu0
        %v5170 = vadd.f32 0.0, %v5169
        %v5171 = vpop.f32.mrb[0].mxu0
        %v5172 = vadd.f32 0.0, %v5171
        %5173 = vmatprep.mubr.bf16.mxu0 %v1088
        %5174 = vmatmul.mubr.bf16.gmra.mrb[0].mxu0 %v1087
        %v5175 = vpop.f32.mrb[0].mxu0
        %v5176 = vadd.f32 0.0, %v5175
        %v5177 = vpop.f32.mrb[0].mxu0
        %v5178 = vadd.f32 0.0, %v5177
        %v5179 = vpop.f32.mrb[0].mxu0
        %v5180 = vadd.f32 0.0, %v5179
        %v5181 = vpop.f32.mrb[0].mxu0
        %v5182 = vadd.f32 0.0, %v5181
        %5183 = vmatprep.mubr.bf16.mxu0 %v1096
        %5184 = vmatmul.mubr.bf16.gmra.mrb[0].mxu0 %v1095
        %v5185 = vpop.f32.mrb[0].mxu0
        %v5186 = vadd.f32 0.0, %v5185
        %v5187 = vpop.f32.mrb[0].mxu0
        %v5188 = vadd.f32 0.0, %v5187
        %v5189 = vpop.f32.mrb[0].mxu0
        %v5190 = vadd.f32 0.0, %v5189
        %v5191 = vpop.f32.mrb[0].mxu0
        %v5192 = vadd.f32 0.0, %v5191
        %5193 = vmatprep.mubr.bf16.mxu0 %v1104
        %5194 = vmatmul.mubr.bf16.gmra.mrb[0].mxu0 %v1103
        %v5195 = vpop.f32.mrb[0].mxu0
        %v5196 = vadd.f32 0.0, %v5195
        %v5197 = vpop.f32.mrb[0].mxu0
        %v5198 = vadd.f32 0.0, %v5197
        %v5199 = vpop.f32.mrb[0].mxu0
        %v5200 = vadd.f32 0.0, %v5199
        %v5201 = vpop.f32.mrb[0].mxu0
        %v5202 = vadd.f32 0.0, %v5201
        %5203 = vdwg.mxu0
        %5204 = vmatprep.subr.bf16.mxu0 %v2846
        %5205 = vmatpush1.bf16.msra.mxu0 %v2845
        %5206 = vmatprep.subr.bf16.mxu0 %v2854
        %5207 = vmatpush1.bf16.msra.mxu0 %v2853
        %5208 = vmatprep.subr.bf16.mxu0 %v2862
        %5209 = vmatpush1.bf16.msra.mxu0 %v2861
        %5210 = vmatprep.subr.bf16.mxu0 %v2870
        %5211 = vmatpush1.bf16.msra.mxu0 %v2869
        %5212 = vmatprep.subr.bf16.mxu0 %v2878
        %5213 = vmatpush1.bf16.msra.mxu0 %v2877
        %5214 = vmatprep.subr.bf16.mxu0 %v2886
        %5215 = vmatpush1.bf16.msra.mxu0 %v2885
        %5216 = vmatprep.subr.bf16.mxu0 %v2894
        %5217 = vmatpush1.bf16.msra.mxu0 %v2893
        %5218 = vmatprep.subr.bf16.mxu0 %v2902
        %5219 = vmatpush1.bf16.msra.mxu0 %v2901
        %5220 = vmatprep.subr.bf16.mxu0 %v2910
        %5221 = vmatpush1.bf16.msra.mxu0 %v2909
        %5222 = vmatprep.subr.bf16.mxu0 %v2918
        %5223 = vmatpush1.bf16.msra.mxu0 %v2917
        %5224 = vmatprep.subr.bf16.mxu0 %v2926
        %5225 = vmatpush1.bf16.msra.mxu0 %v2925
        %5226 = vmatprep.subr.bf16.mxu0 %v2934
        %5227 = vmatpush1.bf16.msra.mxu0 %v2933
        %5228 = vmatprep.subr.bf16.mxu0 %v2942
        %5229 = vmatpush1.bf16.msra.mxu0 %v2941
        %5230 = vmatprep.subr.bf16.mxu0 %v2950
        %5231 = vmatpush1.bf16.msra.mxu0 %v2949
        %5232 = vmatprep.subr.bf16.mxu0 %v2958
        %5233 = vmatpush1.bf16.msra.mxu0 %v2957
        %5234 = vmatprep.subr.bf16.mxu0 %v2966
        %5235 = vmatpush1.bf16.msra.mxu0 %v2965
        %5236 = vmatprep.mubr.bf16.mxu0 %v1050
        %5237 = vmatmul.mubr.bf16.gmra.mrb[0].mxu0 %v1049
        %v5238 = vpop.f32.mrb[0].mxu0
        %v5239 = vadd.f32 %v5126, %v5238
        %v5240 = vpop.f32.mrb[0].mxu0
        %v5241 = vadd.f32 %v5128, %v5240
        %v5242 = vpop.f32.mrb[0].mxu0
        %v5243 = vadd.f32 %v5130, %v5242
        %v5244 = vpop.f32.mrb[0].mxu0
        %v5245 = vadd.f32 %v5132, %v5244
        %5246 = vmatprep.mubr.bf16.mxu0 %v1058
        %5247 = vmatmul.mubr.bf16.gmra.mrb[0].mxu0 %v1057
        %v5248 = vpop.f32.mrb[0].mxu0
        %v5249 = vadd.f32 %v5136, %v5248
        %v5250 = vpop.f32.mrb[0].mxu0
        %v5251 = vadd.f32 %v5138, %v5250
        %v5252 = vpop.f32.mrb[0].mxu0
        %v5253 = vadd.f32 %v5140, %v5252
        %v5254 = vpop.f32.mrb[0].mxu0
        %v5255 = vadd.f32 %v5142, %v5254
        %5256 = vmatprep.mubr.bf16.mxu0 %v1066
        %5257 = vmatmul.mubr.bf16.gmra.mrb[0].mxu0 %v1065
        %v5258 = vpop.f32.mrb[0].mxu0
        %v5259 = vadd.f32 %v5146, %v5258
        %v5260 = vpop.f32.mrb[0].mxu0
        %v5261 = vadd.f32 %v5148, %v5260
        %v5262 = vpop.f32.mrb[0].mxu0
        %v5263 = vadd.f32 %v5150, %v5262
        %v5264 = vpop.f32.mrb[0].mxu0
        %v5265 = vadd.f32 %v5152, %v5264
        %5266 = vmatprep.mubr.bf16.mxu0 %v1074
        %5267 = vmatmul.mubr.bf16.gmra.mrb[0].mxu0 %v1073
        %v5268 = vpop.f32.mrb[0].mxu0
        %v5269 = vadd.f32 %v5156, %v5268
        %v5270 = vpop.f32.mrb[0].mxu0
        %v5271 = vadd.f32 %v5158, %v5270
        %v5272 = vpop.f32.mrb[0].mxu0
        %v5273 = vadd.f32 %v5160, %v5272
        %v5274 = vpop.f32.mrb[0].mxu0
        %v5275 = vadd.f32 %v5162, %v5274
        %5276 = vmatprep.mubr.bf16.mxu0 %v1082
        %5277 = vmatmul.mubr.bf16.gmra.mrb[0].mxu0 %v1081
        %v5278 = vpop.f32.mrb[0].mxu0
        %v5279 = vadd.f32 %v5166, %v5278
        %v5280 = vpop.f32.mrb[0].mxu0
        %v5281 = vadd.f32 %v5168, %v5280
        %v5282 = vpop.f32.mrb[0].mxu0
        %v5283 = vadd.f32 %v5170, %v5282
        %v5284 = vpop.f32.mrb[0].mxu0
        %v5285 = vadd.f32 %v5172, %v5284
        %5286 = vmatprep.mubr.bf16.mxu0 %v1090
        %5287 = vmatmul.mubr.bf16.gmra.mrb[0].mxu0 %v1089
        %v5288 = vpop.f32.mrb[0].mxu0
        %v5289 = vadd.f32 %v5176, %v5288
        %v5290 = vpop.f32.mrb[0].mxu0
        %v5291 = vadd.f32 %v5178, %v5290
        %v5292 = vpop.f32.mrb[0].mxu0
        %v5293 = vadd.f32 %v5180, %v5292
        %v5294 = vpop.f32.mrb[0].mxu0
        %v5295 = vadd.f32 %v5182, %v5294
        %5296 = vmatprep.mubr.bf16.mxu0 %v1098
        %5297 = vmatmul.mubr.bf16.gmra.mrb[0].mxu0 %v1097
        %v5298 = vpop.f32.mrb[0].mxu0
        %v5299 = vadd.f32 %v5186, %v5298
        %v5300 = vpop.f32.mrb[0].mxu0
        %v5301 = vadd.f32 %v5188, %v5300
        %v5302 = vpop.f32.mrb[0].mxu0
        %v5303 = vadd.f32 %v5190, %v5302
        %v5304 = vpop.f32.mrb[0].mxu0
        %v5305 = vadd.f32 %v5192, %v5304
        %5306 = vmatprep.mubr.bf16.mxu0 %v1106
        %5307 = vmatmul.mubr.bf16.gmra.mrb[0].mxu0 %v1105
        %v5308 = vpop.f32.mrb[0].mxu0
        %v5309 = vadd.f32 %v5196, %v5308
        %v5310 = vpop.f32.mrb[0].mxu0
        %v5311 = vadd.f32 %v5198, %v5310
        %v5312 = vpop.f32.mrb[0].mxu0
        %v5313 = vadd.f32 %v5200, %v5312
        %v5314 = vpop.f32.mrb[0].mxu0
        %v5315 = vadd.f32 %v5202, %v5314
        %5316 = vdwg.mxu0
        %5317 = vmatprep.subr.bf16.mxu0 %v2974
        %5318 = vmatpush1.bf16.msra.mxu0 %v2973
        %5319 = vmatprep.subr.bf16.mxu0 %v2982
        %5320 = vmatpush1.bf16.msra.mxu0 %v2981
        %5321 = vmatprep.subr.bf16.mxu0 %v2990
        %5322 = vmatpush1.bf16.msra.mxu0 %v2989
        %5323 = vmatprep.subr.bf16.mxu0 %v2998
        %5324 = vmatpush1.bf16.msra.mxu0 %v2997
        %5325 = vmatprep.subr.bf16.mxu0 %v3006
        %5326 = vmatpush1.bf16.msra.mxu0 %v3005
        %5327 = vmatprep.subr.bf16.mxu0 %v3014
        %5328 = vmatpush1.bf16.msra.mxu0 %v3013
        %5329 = vmatprep.subr.bf16.mxu0 %v3022
        %5330 = vmatpush1.bf16.msra.mxu0 %v3021
        %5331 = vmatprep.subr.bf16.mxu0 %v3030
        %5332 = vmatpush1.bf16.msra.mxu0 %v3029
        %5333 = vmatprep.subr.bf16.mxu0 %v3038
        %5334 = vmatpush1.bf16.msra.mxu0 %v3037
        %5335 = vmatprep.subr.bf16.mxu0 %v3046
        %5336 = vmatpush1.bf16.msra.mxu0 %v3045
        %5337 = vmatprep.subr.bf16.mxu0 %v3054
        %5338 = vmatpush1.bf16.msra.mxu0 %v3053
        %5339 = vmatprep.subr.bf16.mxu0 %v3062
        %5340 = vmatpush1.bf16.msra.mxu0 %v3061
        %5341 = vmatprep.subr.bf16.mxu0 %v3070
        %5342 = vmatpush1.bf16.msra.mxu0 %v3069
        %5343 = vmatprep.subr.bf16.mxu0 %v3078
        %5344 = vmatpush1.bf16.msra.mxu0 %v3077
        %5345 = vmatprep.subr.bf16.mxu0 %v3086
        %5346 = vmatpush1.bf16.msra.mxu0 %v3085
        %5347 = vmatprep.subr.bf16.mxu0 %v3094
        %5348 = vmatpush1.bf16.msra.mxu0 %v3093
        %5349 = vmatprep.mubr.bf16.mxu0 %v1052
        %5350 = vmatmul.mubr.bf16.gmra.mrb[0].mxu0 %v1051
        %v5351 = vpop.f32.mrb[0].mxu0
        %v5352 = vadd.f32 %v5239, %v5351
        %v5353 = vpop.f32.mrb[0].mxu0
        %v5354 = vadd.f32 %v5241, %v5353
        %v5355 = vpop.f32.mrb[0].mxu0
        %v5356 = vadd.f32 %v5243, %v5355
        %v5357 = vpop.f32.mrb[0].mxu0
        %v5358 = vadd.f32 %v5245, %v5357
        %5359 = vmatprep.mubr.bf16.mxu0 %v1060
        %5360 = vmatmul.mubr.bf16.gmra.mrb[0].mxu0 %v1059
        %v5361 = vpop.f32.mrb[0].mxu0
        %v5362 = vadd.f32 %v5249, %v5361
        %v5363 = vpop.f32.mrb[0].mxu0
        %v5364 = vadd.f32 %v5251, %v5363
        %v5365 = vpop.f32.mrb[0].mxu0
        %v5366 = vadd.f32 %v5253, %v5365
        %v5367 = vpop.f32.mrb[0].mxu0
        %v5368 = vadd.f32 %v5255, %v5367
        %5369 = vmatprep.mubr.bf16.mxu0 %v1068
        %5370 = vmatmul.mubr.bf16.gmra.mrb[0].mxu0 %v1067
        %v5371 = vpop.f32.mrb[0].mxu0
        %v5372 = vadd.f32 %v5259, %v5371
        %v5373 = vpop.f32.mrb[0].mxu0
        %v5374 = vadd.f32 %v5261, %v5373
        %v5375 = vpop.f32.mrb[0].mxu0
        %v5376 = vadd.f32 %v5263, %v5375
        %v5377 = vpop.f32.mrb[0].mxu0
        %v5378 = vadd.f32 %v5265, %v5377
        %5379 = vmatprep.mubr.bf16.mxu0 %v1076
        %5380 = vmatmul.mubr.bf16.gmra.mrb[0].mxu0 %v1075
        %v5381 = vpop.f32.mrb[0].mxu0
        %v5382 = vadd.f32 %v5269, %v5381
        %v5383 = vpop.f32.mrb[0].mxu0
        %v5384 = vadd.f32 %v5271, %v5383
        %v5385 = vpop.f32.mrb[0].mxu0
        %v5386 = vadd.f32 %v5273, %v5385
        %v5387 = vpop.f32.mrb[0].mxu0
        %v5388 = vadd.f32 %v5275, %v5387
        %5389 = vmatprep.mubr.bf16.mxu0 %v1084
        %5390 = vmatmul.mubr.bf16.gmra.mrb[0].mxu0 %v1083
        %v5391 = vpop.f32.mrb[0].mxu0
        %v5392 = vadd.f32 %v5279, %v5391
        %v5393 = vpop.f32.mrb[0].mxu0
        %v5394 = vadd.f32 %v5281, %v5393
        %v5395 = vpop.f32.mrb[0].mxu0
        %v5396 = vadd.f32 %v5283, %v5395
        %v5397 = vpop.f32.mrb[0].mxu0
        %v5398 = vadd.f32 %v5285, %v5397
        %5399 = vmatprep.mubr.bf16.mxu0 %v1092
        %5400 = vmatmul.mubr.bf16.gmra.mrb[0].mxu0 %v1091
        %v5401 = vpop.f32.mrb[0].mxu0
        %v5402 = vadd.f32 %v5289, %v5401
        %v5403 = vpop.f32.mrb[0].mxu0
        %v5404 = vadd.f32 %v5291, %v5403
        %v5405 = vpop.f32.mrb[0].mxu0
        %v5406 = vadd.f32 %v5293, %v5405
        %v5407 = vpop.f32.mrb[0].mxu0
        %v5408 = vadd.f32 %v5295, %v5407
        %5409 = vmatprep.mubr.bf16.mxu0 %v1100
        %5410 = vmatmul.mubr.bf16.gmra.mrb[0].mxu0 %v1099
        %v5411 = vpop.f32.mrb[0].mxu0
        %v5412 = vadd.f32 %v5299, %v5411
        %v5413 = vpop.f32.mrb[0].mxu0
        %v5414 = vadd.f32 %v5301, %v5413
        %v5415 = vpop.f32.mrb[0].mxu0
        %v5416 = vadd.f32 %v5303, %v5415
        %v5417 = vpop.f32.mrb[0].mxu0
        %v5418 = vadd.f32 %v5305, %v5417
        %5419 = vmatprep.mubr.bf16.mxu0 %v1108
        %5420 = vmatmul.mubr.bf16.gmra.mrb[0].mxu0 %v1107
        %v5421 = vpop.f32.mrb[0].mxu0
        %v5422 = vadd.f32 %v5309, %v5421
        %v5423 = vpop.f32.mrb[0].mxu0
        %v5424 = vadd.f32 %v5311, %v5423
        %v5425 = vpop.f32.mrb[0].mxu0
        %v5426 = vadd.f32 %v5313, %v5425
        %v5427 = vpop.f32.mrb[0].mxu0
        %v5428 = vadd.f32 %v5315, %v5427
        %5429 = vdwg.mxu0
        %5430 = vmatprep.subr.bf16.mxu0 %v3102
        %5431 = vmatpush1.bf16.msra.mxu0 %v3101
        %5432 = vmatprep.subr.bf16.mxu0 %v3110
        %5433 = vmatpush1.bf16.msra.mxu0 %v3109
        %5434 = vmatprep.subr.bf16.mxu0 %v3118
        %5435 = vmatpush1.bf16.msra.mxu0 %v3117
        %5436 = vmatprep.subr.bf16.mxu0 %v3126
        %5437 = vmatpush1.bf16.msra.mxu0 %v3125
        %5438 = vmatprep.subr.bf16.mxu0 %v3134
        %5439 = vmatpush1.bf16.msra.mxu0 %v3133
        %5440 = vmatprep.subr.bf16.mxu0 %v3142
        %5441 = vmatpush1.bf16.msra.mxu0 %v3141
        %5442 = vmatprep.subr.bf16.mxu0 %v3150
        %5443 = vmatpush1.bf16.msra.mxu0 %v3149
        %5444 = vmatprep.subr.bf16.mxu0 %v3158
        %5445 = vmatpush1.bf16.msra.mxu0 %v3157
        %5446 = vmatprep.subr.bf16.mxu0 %v3166
        %5447 = vmatpush1.bf16.msra.mxu0 %v3165
        %5448 = vmatprep.subr.bf16.mxu0 %v3174
        %5449 = vmatpush1.bf16.msra.mxu0 %v3173
        %5450 = vmatprep.subr.bf16.mxu0 %v3182
        %5451 = vmatpush1.bf16.msra.mxu0 %v3181
        %5452 = vmatprep.subr.bf16.mxu0 %v3190
        %5453 = vmatpush1.bf16.msra.mxu0 %v3189
        %5454 = vmatprep.subr.bf16.mxu0 %v3198
        %5455 = vmatpush1.bf16.msra.mxu0 %v3197
        %5456 = vmatprep.subr.bf16.mxu0 %v3206
        %5457 = vmatpush1.bf16.msra.mxu0 %v3205
        %5458 = vmatprep.subr.bf16.mxu0 %v3214
        %5459 = vmatpush1.bf16.msra.mxu0 %v3213
        %5460 = vmatprep.subr.bf16.mxu0 %v3222
        %5461 = vmatpush1.bf16.msra.mxu0 %v3221
        %5462 = vmatprep.mubr.bf16.mxu0 %v1054
        %5463 = vmatmul.mubr.bf16.gmra.mrb[0].mxu0 %v1053
        %v5464 = vpop.f32.mrb[0].mxu0
        %v5465 = vadd.f32 %v5352, %v5464
        %v5466 = vpop.f32.mrb[0].mxu0
        %v5467 = vadd.f32 %v5354, %v5466
        %v5468 = vpop.f32.mrb[0].mxu0
        %v5469 = vadd.f32 %v5356, %v5468
        %v5470 = vpop.f32.mrb[0].mxu0
        %v5471 = vadd.f32 %v5358, %v5470
        %5472 = vmatprep.mubr.bf16.mxu0 %v1062
        %5473 = vmatmul.mubr.bf16.gmra.mrb[0].mxu0 %v1061
        %v5474 = vpop.f32.mrb[0].mxu0
        %v5475 = vadd.f32 %v5362, %v5474
        %v5476 = vpop.f32.mrb[0].mxu0
        %v5477 = vadd.f32 %v5364, %v5476
        %v5478 = vpop.f32.mrb[0].mxu0
        %v5479 = vadd.f32 %v5366, %v5478
        %v5480 = vpop.f32.mrb[0].mxu0
        %v5481 = vadd.f32 %v5368, %v5480
        %5482 = vmatprep.mubr.bf16.mxu0 %v1070
        %5483 = vmatmul.mubr.bf16.gmra.mrb[0].mxu0 %v1069
        %v5484 = vpop.f32.mrb[0].mxu0
        %v5485 = vadd.f32 %v5372, %v5484
        %v5486 = vpop.f32.mrb[0].mxu0
        %v5487 = vadd.f32 %v5374, %v5486
        %v5488 = vpop.f32.mrb[0].mxu0
        %v5489 = vadd.f32 %v5376, %v5488
        %v5490 = vpop.f32.mrb[0].mxu0
        %v5491 = vadd.f32 %v5378, %v5490
        %5492 = vmatprep.mubr.bf16.mxu0 %v1078
        %5493 = vmatmul.mubr.bf16.gmra.mrb[0].mxu0 %v1077
        %v5494 = vpop.f32.mrb[0].mxu0
        %v5495 = vadd.f32 %v5382, %v5494
        %v5496 = vpop.f32.mrb[0].mxu0
        %v5497 = vadd.f32 %v5384, %v5496
        %v5498 = vpop.f32.mrb[0].mxu0
        %v5499 = vadd.f32 %v5386, %v5498
        %v5500 = vpop.f32.mrb[0].mxu0
        %v5501 = vadd.f32 %v5388, %v5500
        %5502 = vmatprep.mubr.bf16.mxu0 %v1086
        %5503 = vmatmul.mubr.bf16.gmra.mrb[0].mxu0 %v1085
        %v5504 = vpop.f32.mrb[0].mxu0
        %v5505 = vadd.f32 %v5392, %v5504
        %v5506 = vpop.f32.mrb[0].mxu0
        %v5507 = vadd.f32 %v5394, %v5506
        %v5508 = vpop.f32.mrb[0].mxu0
        %v5509 = vadd.f32 %v5396, %v5508
        %v5510 = vpop.f32.mrb[0].mxu0
        %v5511 = vadd.f32 %v5398, %v5510
        %5512 = vmatprep.mubr.bf16.mxu0 %v1094
        %5513 = vmatmul.mubr.bf16.gmra.mrb[0].mxu0 %v1093
        %v5514 = vpop.f32.mrb[0].mxu0
        %v5515 = vadd.f32 %v5402, %v5514
        %v5516 = vpop.f32.mrb[0].mxu0
        %v5517 = vadd.f32 %v5404, %v5516
        %v5518 = vpop.f32.mrb[0].mxu0
        %v5519 = vadd.f32 %v5406, %v5518
        %v5520 = vpop.f32.mrb[0].mxu0
        %v5521 = vadd.f32 %v5408, %v5520
        %5522 = vmatprep.mubr.bf16.mxu0 %v1102
        %5523 = vmatmul.mubr.bf16.gmra.mrb[0].mxu0 %v1101
        %v5524 = vpop.f32.mrb[0].mxu0
        %v5525 = vadd.f32 %v5412, %v5524
        %v5526 = vpop.f32.mrb[0].mxu0
        %v5527 = vadd.f32 %v5414, %v5526
        %v5528 = vpop.f32.mrb[0].mxu0
        %v5529 = vadd.f32 %v5416, %v5528
        %v5530 = vpop.f32.mrb[0].mxu0
        %v5531 = vadd.f32 %v5418, %v5530
        %5532 = vmatprep.mubr.bf16.mxu0 %v1110
        %5533 = vmatmul.mubr.bf16.gmra.mrb[0].mxu0 %v1109
        %v5534 = vpop.f32.mrb[0].mxu0
        %v5535 = vadd.f32 %v5422, %v5534
        %v5536 = vpop.f32.mrb[0].mxu0
        %v5537 = vadd.f32 %v5424, %v5536
        %v5538 = vpop.f32.mrb[0].mxu0
        %v5539 = vadd.f32 %v5426, %v5538
        %v5540 = vpop.f32.mrb[0].mxu0
        %v5541 = vadd.f32 %v5428, %v5540
        %5542 = vdwg.mxu0
        %v5543 = vmul.f32 %v4109, %v4109
        %v5544 = vmul.f32 %v4111, %v4111
        %v5545 = vmul.f32 %v4561, %v4561
        %v5546 = vmul.f32 %v4563, %v4563
        %v5547 = vmul.f32 %v4113, %v4113
        %v5548 = vmul.f32 %v4115, %v4115
        %v5549 = vmul.f32 %v4565, %v4565
        %v5550 = vmul.f32 %v4567, %v4567
        %v5551 = vmul.f32 %v4119, %v4119
        %v5552 = vmul.f32 %v4121, %v4121
        %v5553 = vmul.f32 %v4571, %v4571
        %v5554 = vmul.f32 %v4573, %v4573
        %v5555 = vmul.f32 %v4123, %v4123
        %v5556 = vmul.f32 %v4125, %v4125
        %v5557 = vmul.f32 %v4575, %v4575
        %v5558 = vmul.f32 %v4577, %v4577
        %v5559 = vmul.f32 %v4129, %v4129
        %v5560 = vmul.f32 %v4131, %v4131
        %v5561 = vmul.f32 %v4581, %v4581
        %v5562 = vmul.f32 %v4583, %v4583
        %v5563 = vmul.f32 %v4133, %v4133
        %v5564 = vmul.f32 %v4135, %v4135
        %v5565 = vmul.f32 %v4585, %v4585
        %v5566 = vmul.f32 %v4587, %v4587
        %v5567 = vmul.f32 %v4139, %v4139
        %v5568 = vmul.f32 %v4141, %v4141
        %v5569 = vmul.f32 %v4591, %v4591
        %v5570 = vmul.f32 %v4593, %v4593
        %v5571 = vmul.f32 %v4143, %v4143
        %v5572 = vmul.f32 %v4145, %v4145
        %v5573 = vmul.f32 %v4595, %v4595
        %v5574 = vmul.f32 %v4597, %v4597
        %v5575 = vmul.f32 %v4149, %v4149
        %v5576 = vmul.f32 %v4151, %v4151
        %v5577 = vmul.f32 %v4601, %v4601
        %v5578 = vmul.f32 %v4603, %v4603
        %v5579 = vmul.f32 %v4153, %v4153
        %v5580 = vmul.f32 %v4155, %v4155
        %v5581 = vmul.f32 %v4605, %v4605
        %v5582 = vmul.f32 %v4607, %v4607
        %v5583 = vmul.f32 %v4159, %v4159
        %v5584 = vmul.f32 %v4161, %v4161
        %v5585 = vmul.f32 %v4611, %v4611
        %v5586 = vmul.f32 %v4613, %v4613
        %v5587 = vmul.f32 %v4163, %v4163
        %v5588 = vmul.f32 %v4165, %v4165
        %v5589 = vmul.f32 %v4615, %v4615
        %v5590 = vmul.f32 %v4617, %v4617
        %v5591 = vmul.f32 %v4169, %v4169
        %v5592 = vmul.f32 %v4171, %v4171
        %v5593 = vmul.f32 %v4621, %v4621
        %v5594 = vmul.f32 %v4623, %v4623
        %v5595 = vmul.f32 %v4173, %v4173
        %v5596 = vmul.f32 %v4175, %v4175
        %v5597 = vmul.f32 %v4625, %v4625
        %v5598 = vmul.f32 %v4627, %v4627
        %v5599 = vmul.f32 %v4179, %v4179
        %v5600 = vmul.f32 %v4181, %v4181
        %v5601 = vmul.f32 %v4631, %v4631
        %v5602 = vmul.f32 %v4633, %v4633
        %v5603 = vmul.f32 %v4183, %v4183
        %v5604 = vmul.f32 %v4185, %v4185
        %v5605 = vmul.f32 %v4635, %v4635
        %v5606 = vmul.f32 %v4637, %v4637
        %v5607 = vmul.f32 %v5013, %v5013
        %v5608 = vmul.f32 %v5015, %v5015
        %v5609 = vmul.f32 %v5465, %v5465
        %v5610 = vmul.f32 %v5467, %v5467
        %v5611 = vmul.f32 %v5017, %v5017
        %v5612 = vmul.f32 %v5019, %v5019
        %v5613 = vmul.f32 %v5469, %v5469
        %v5614 = vmul.f32 %v5471, %v5471
        %v5615 = vmul.f32 %v5023, %v5023
        %v5616 = vmul.f32 %v5025, %v5025
        %v5617 = vmul.f32 %v5475, %v5475
        %v5618 = vmul.f32 %v5477, %v5477
        %v5619 = vmul.f32 %v5027, %v5027
        %v5620 = vmul.f32 %v5029, %v5029
        %v5621 = vmul.f32 %v5479, %v5479
        %v5622 = vmul.f32 %v5481, %v5481
        %v5623 = vmul.f32 %v5033, %v5033
        %v5624 = vmul.f32 %v5035, %v5035
        %v5625 = vmul.f32 %v5485, %v5485
        %v5626 = vmul.f32 %v5487, %v5487
        %v5627 = vmul.f32 %v5037, %v5037
        %v5628 = vmul.f32 %v5039, %v5039
        %v5629 = vmul.f32 %v5489, %v5489
        %v5630 = vmul.f32 %v5491, %v5491
        %v5631 = vmul.f32 %v5043, %v5043
        %v5632 = vmul.f32 %v5045, %v5045
        %v5633 = vmul.f32 %v5495, %v5495
        %v5634 = vmul.f32 %v5497, %v5497
        %v5635 = vmul.f32 %v5047, %v5047
        %v5636 = vmul.f32 %v5049, %v5049
        %v5637 = vmul.f32 %v5499, %v5499
        %v5638 = vmul.f32 %v5501, %v5501
        %v5639 = vmul.f32 %v5053, %v5053
        %v5640 = vmul.f32 %v5055, %v5055
        %v5641 = vmul.f32 %v5505, %v5505
        %v5642 = vmul.f32 %v5507, %v5507
        %v5643 = vmul.f32 %v5057, %v5057
        %v5644 = vmul.f32 %v5059, %v5059
        %v5645 = vmul.f32 %v5509, %v5509
        %v5646 = vmul.f32 %v5511, %v5511
        %v5647 = vmul.f32 %v5063, %v5063
        %v5648 = vmul.f32 %v5065, %v5065
        %v5649 = vmul.f32 %v5515, %v5515
        %v5650 = vmul.f32 %v5517, %v5517
        %v5651 = vmul.f32 %v5067, %v5067
        %v5652 = vmul.f32 %v5069, %v5069
        %v5653 = vmul.f32 %v5519, %v5519
        %v5654 = vmul.f32 %v5521, %v5521
        %v5655 = vmul.f32 %v5073, %v5073
        %v5656 = vmul.f32 %v5075, %v5075
        %v5657 = vmul.f32 %v5525, %v5525
        %v5658 = vmul.f32 %v5527, %v5527
        %v5659 = vmul.f32 %v5077, %v5077
        %v5660 = vmul.f32 %v5079, %v5079
        %v5661 = vmul.f32 %v5529, %v5529
        %v5662 = vmul.f32 %v5531, %v5531
        %v5663 = vmul.f32 %v5083, %v5083
        %v5664 = vmul.f32 %v5085, %v5085
        %v5665 = vmul.f32 %v5535, %v5535
        %v5666 = vmul.f32 %v5537, %v5537
        %v5667 = vmul.f32 %v5087, %v5087
        %v5668 = vmul.f32 %v5089, %v5089
        %v5669 = vmul.f32 %v5539, %v5539
        %v5670 = vmul.f32 %v5541, %v5541
        %v5671 = vadd.f32 %v5543, %v5607
        %v5672 = vadd.f32 %v5544, %v5608
        %v5673 = vadd.f32 %v5545, %v5609
        %v5674 = vadd.f32 %v5546, %v5610
        %v5675 = vadd.f32 %v5547, %v5611
        %v5676 = vadd.f32 %v5548, %v5612
        %v5677 = vadd.f32 %v5549, %v5613
        %v5678 = vadd.f32 %v5550, %v5614
        %v5679 = vadd.f32 %v5551, %v5615
        %v5680 = vadd.f32 %v5552, %v5616
        %v5681 = vadd.f32 %v5553, %v5617
        %v5682 = vadd.f32 %v5554, %v5618
        %v5683 = vadd.f32 %v5555, %v5619
        %v5684 = vadd.f32 %v5556, %v5620
        %v5685 = vadd.f32 %v5557, %v5621
        %v5686 = vadd.f32 %v5558, %v5622
        %v5687 = vadd.f32 %v5559, %v5623
        %v5688 = vadd.f32 %v5560, %v5624
        %v5689 = vadd.f32 %v5561, %v5625
        %v5690 = vadd.f32 %v5562, %v5626
        %v5691 = vadd.f32 %v5563, %v5627
        %v5692 = vadd.f32 %v5564, %v5628
        %v5693 = vadd.f32 %v5565, %v5629
        %v5694 = vadd.f32 %v5566, %v5630
        %v5695 = vadd.f32 %v5567, %v5631
        %v5696 = vadd.f32 %v5568, %v5632
        %v5697 = vadd.f32 %v5569, %v5633
        %v5698 = vadd.f32 %v5570, %v5634
        %v5699 = vadd.f32 %v5571, %v5635
        %v5700 = vadd.f32 %v5572, %v5636
        %v5701 = vadd.f32 %v5573, %v5637
        %v5702 = vadd.f32 %v5574, %v5638
        %v5703 = vadd.f32 %v5575, %v5639
        %v5704 = vadd.f32 %v5576, %v5640
        %v5705 = vadd.f32 %v5577, %v5641
        %v5706 = vadd.f32 %v5578, %v5642
        %v5707 = vadd.f32 %v5579, %v5643
        %v5708 = vadd.f32 %v5580, %v5644
        %v5709 = vadd.f32 %v5581, %v5645
        %v5710 = vadd.f32 %v5582, %v5646
        %v5711 = vadd.f32 %v5583, %v5647
        %v5712 = vadd.f32 %v5584, %v5648
        %v5713 = vadd.f32 %v5585, %v5649
        %v5714 = vadd.f32 %v5586, %v5650
        %v5715 = vadd.f32 %v5587, %v5651
        %v5716 = vadd.f32 %v5588, %v5652
        %v5717 = vadd.f32 %v5589, %v5653
        %v5718 = vadd.f32 %v5590, %v5654
        %v5719 = vadd.f32 %v5591, %v5655
        %v5720 = vadd.f32 %v5592, %v5656
        %v5721 = vadd.f32 %v5593, %v5657
        %v5722 = vadd.f32 %v5594, %v5658
        %v5723 = vadd.f32 %v5595, %v5659
        %v5724 = vadd.f32 %v5596, %v5660
        %v5725 = vadd.f32 %v5597, %v5661
        %v5726 = vadd.f32 %v5598, %v5662
        %v5727 = vadd.f32 %v5599, %v5663
        %v5728 = vadd.f32 %v5600, %v5664
        %v5729 = vadd.f32 %v5601, %v5665
        %v5730 = vadd.f32 %v5602, %v5666
        %v5731 = vadd.f32 %v5603, %v5667
        %v5732 = vadd.f32 %v5604, %v5668
        %v5733 = vadd.f32 %v5605, %v5669
        %v5734 = vadd.f32 %v5606, %v5670
        %v5735 = vpack.c.bf16 %v5675, %v5671
        %v5736 = vpack.c.bf16 %v5676, %v5672
        %v5737 = vpack.c.bf16 %v5677, %v5673
        %v5738 = vpack.c.bf16 %v5678, %v5674
        %v5739 = vpack.c.bf16 %v5683, %v5679
        %v5740 = vpack.c.bf16 %v5684, %v5680
        %v5741 = vpack.c.bf16 %v5685, %v5681
        %v5742 = vpack.c.bf16 %v5686, %v5682
        %v5743 = vpack.c.bf16 %v5691, %v5687
        %v5744 = vpack.c.bf16 %v5692, %v5688
        %v5745 = vpack.c.bf16 %v5693, %v5689
        %v5746 = vpack.c.bf16 %v5694, %v5690
        %v5747 = vpack.c.bf16 %v5699, %v5695
        %v5748 = vpack.c.bf16 %v5700, %v5696
        %v5749 = vpack.c.bf16 %v5701, %v5697
        %v5750 = vpack.c.bf16 %v5702, %v5698
        %v5751 = vpack.c.bf16 %v5707, %v5703
        %v5752 = vpack.c.bf16 %v5708, %v5704
        %v5753 = vpack.c.bf16 %v5709, %v5705
        %v5754 = vpack.c.bf16 %v5710, %v5706
        %v5755 = vpack.c.bf16 %v5715, %v5711
        %v5756 = vpack.c.bf16 %v5716, %v5712
        %v5757 = vpack.c.bf16 %v5717, %v5713
        %v5758 = vpack.c.bf16 %v5718, %v5714
        %v5759 = vpack.c.bf16 %v5723, %v5719
        %v5760 = vpack.c.bf16 %v5724, %v5720
        %v5761 = vpack.c.bf16 %v5725, %v5721
        %v5762 = vpack.c.bf16 %v5726, %v5722
        %v5763 = vpack.c.bf16 %v5731, %v5727
        %v5764 = vpack.c.bf16 %v5732, %v5728
        %v5765 = vpack.c.bf16 %v5733, %v5729
        %v5766 = vpack.c.bf16 %v5734, %v5730
        %v5767 = vld [vmem:[#allocation4] sm:$0xf]
        %v5768 = vld [vmem:[#allocation4 + $0x4] sm:$0xf]
        %v5769 = vld [vmem:[#allocation4 + $0x8] sm:$0xf]
        %v5770 = vld [vmem:[#allocation4 + $0xc] sm:$0xf]
        %v5771 = vld [vmem:[#allocation4 + $0x10] sm:$0xf]
        %v5772 = vld [vmem:[#allocation4 + $0x14] sm:$0xf]
        %v5773 = vld [vmem:[#allocation4 + $0x18] sm:$0xf]
        %v5774 = vld [vmem:[#allocation4 + $0x1c] sm:$0xf]
        %v5775 = vld [vmem:[#allocation4 + $0x20] sm:$0xf]
        %v5776 = vld [vmem:[#allocation4 + $0x24] sm:$0xf]
        %v5777 = vld [vmem:[#allocation4 + $0x28] sm:$0xf]
        %v5778 = vld [vmem:[#allocation4 + $0x2c] sm:$0xf]
        %v5779 = vld [vmem:[#allocation4 + $0x30] sm:$0xf]
        %v5780 = vld [vmem:[#allocation4 + $0x34] sm:$0xf]
        %v5781 = vld [vmem:[#allocation4 + $0x38] sm:$0xf]
        %v5782 = vld [vmem:[#allocation4 + $0x3c] sm:$0xf]
        %v5783 = vld [vmem:[#allocation4 + $0x40] sm:$0xf]
        %v5784 = vld [vmem:[#allocation4 + $0x44] sm:$0xf]
        %v5785 = vld [vmem:[#allocation4 + $0x48] sm:$0xf]
        %v5786 = vld [vmem:[#allocation4 + $0x4c] sm:$0xf]
        %v5787 = vld [vmem:[#allocation4 + $0x50] sm:$0xf]
        %v5788 = vld [vmem:[#allocation4 + $0x54] sm:$0xf]
        %v5789 = vld [vmem:[#allocation4 + $0x58] sm:$0xf]
        %v5790 = vld [vmem:[#allocation4 + $0x5c] sm:$0xf]
        %v5791 = vld [vmem:[#allocation4 + $0x60] sm:$0xf]
        %v5792 = vld [vmem:[#allocation4 + $0x64] sm:$0xf]
        %v5793 = vld [vmem:[#allocation4 + $0x68] sm:$0xf]
        %v5794 = vld [vmem:[#allocation4 + $0x6c] sm:$0xf]
        %v5795 = vld [vmem:[#allocation4 + $0x70] sm:$0xf]
        %v5796 = vld [vmem:[#allocation4 + $0x74] sm:$0xf]
        %v5797 = vld [vmem:[#allocation4 + $0x78] sm:$0xf]
        %v5798 = vld [vmem:[#allocation4 + $0x7c] sm:$0xf]
        %v5799 = vld [vmem:[#allocation4 + $0x80] sm:$0xf]
        %v5800 = vld [vmem:[#allocation4 + $0x84] sm:$0xf]
        %v5801 = vld [vmem:[#allocation4 + $0x88] sm:$0xf]
        %v5802 = vld [vmem:[#allocation4 + $0x8c] sm:$0xf]
        %v5803 = vld [vmem:[#allocation4 + $0x90] sm:$0xf]
        %v5804 = vld [vmem:[#allocation4 + $0x94] sm:$0xf]
        %v5805 = vld [vmem:[#allocation4 + $0x98] sm:$0xf]
        %v5806 = vld [vmem:[#allocation4 + $0x9c] sm:$0xf]
        %v5807 = vld [vmem:[#allocation4 + $0xa0] sm:$0xf]
        %v5808 = vld [vmem:[#allocation4 + $0xa4] sm:$0xf]
        %v5809 = vld [vmem:[#allocation4 + $0xa8] sm:$0xf]
        %v5810 = vld [vmem:[#allocation4 + $0xac] sm:$0xf]
        %v5811 = vld [vmem:[#allocation4 + $0xb0] sm:$0xf]
        %v5812 = vld [vmem:[#allocation4 + $0xb4] sm:$0xf]
        %v5813 = vld [vmem:[#allocation4 + $0xb8] sm:$0xf]
        %v5814 = vld [vmem:[#allocation4 + $0xbc] sm:$0xf]
        %v5815 = vld [vmem:[#allocation4 + $0xc0] sm:$0xf]
        %v5816 = vld [vmem:[#allocation4 + $0xc4] sm:$0xf]
        %v5817 = vld [vmem:[#allocation4 + $0xc8] sm:$0xf]
        %v5818 = vld [vmem:[#allocation4 + $0xcc] sm:$0xf]
        %v5819 = vld [vmem:[#allocation4 + $0xd0] sm:$0xf]
        %v5820 = vld [vmem:[#allocation4 + $0xd4] sm:$0xf]
        %v5821 = vld [vmem:[#allocation4 + $0xd8] sm:$0xf]
        %v5822 = vld [vmem:[#allocation4 + $0xdc] sm:$0xf]
        %v5823 = vld [vmem:[#allocation4 + $0xe0] sm:$0xf]
        %v5824 = vld [vmem:[#allocation4 + $0xe4] sm:$0xf]
        %v5825 = vld [vmem:[#allocation4 + $0xe8] sm:$0xf]
        %v5826 = vld [vmem:[#allocation4 + $0xec] sm:$0xf]
        %v5827 = vld [vmem:[#allocation4 + $0xf0] sm:$0xf]
        %v5828 = vld [vmem:[#allocation4 + $0xf4] sm:$0xf]
        %v5829 = vld [vmem:[#allocation4 + $0xf8] sm:$0xf]
        %v5830 = vld [vmem:[#allocation4 + $0xfc] sm:$0xf]
        %v5895 = vunpack.c.l.b16 %v5767
        %v5896 = vunpack.c.l.b16 %v5768
        %v5897 = vunpack.c.l.b16 %v5769
        %v5898 = vunpack.c.l.b16 %v5770
        %v5899 = vunpack.c.l.b16 %v5771
        %v5900 = vunpack.c.l.b16 %v5772
        %v5901 = vunpack.c.l.b16 %v5773
        %v5902 = vunpack.c.l.b16 %v5774
        %v5903 = vunpack.c.l.b16 %v5775
        %v5904 = vunpack.c.l.b16 %v5776
        %v5905 = vunpack.c.l.b16 %v5777
        %v5906 = vunpack.c.l.b16 %v5778
        %v5907 = vunpack.c.l.b16 %v5779
        %v5908 = vunpack.c.l.b16 %v5780
        %v5909 = vunpack.c.l.b16 %v5781
        %v5910 = vunpack.c.l.b16 %v5782
        %v5911 = vunpack.c.l.b16 %v5783
        %v5912 = vunpack.c.l.b16 %v5784
        %v5913 = vunpack.c.l.b16 %v5785
        %v5914 = vunpack.c.l.b16 %v5786
        %v5915 = vunpack.c.l.b16 %v5787
        %v5916 = vunpack.c.l.b16 %v5788
        %v5917 = vunpack.c.l.b16 %v5789
        %v5918 = vunpack.c.l.b16 %v5790
        %v5919 = vunpack.c.l.b16 %v5791
        %v5920 = vunpack.c.l.b16 %v5792
        %v5921 = vunpack.c.l.b16 %v5793
        %v5922 = vunpack.c.l.b16 %v5794
        %v5923 = vunpack.c.l.b16 %v5795
        %v5924 = vunpack.c.l.b16 %v5796
        %v5925 = vunpack.c.l.b16 %v5797
        %v5926 = vunpack.c.l.b16 %v5798
        %v5927 = vunpack.c.l.b16 %v5799
        %v5928 = vunpack.c.l.b16 %v5800
        %v5929 = vunpack.c.l.b16 %v5801
        %v5930 = vunpack.c.l.b16 %v5802
        %v5931 = vunpack.c.l.b16 %v5803
        %v5932 = vunpack.c.l.b16 %v5804
        %v5933 = vunpack.c.l.b16 %v5805
        %v5934 = vunpack.c.l.b16 %v5806
        %v5935 = vunpack.c.l.b16 %v5807
        %v5936 = vunpack.c.l.b16 %v5808
        %v5937 = vunpack.c.l.b16 %v5809
        %v5938 = vunpack.c.l.b16 %v5810
        %v5939 = vunpack.c.l.b16 %v5811
        %v5940 = vunpack.c.l.b16 %v5812
        %v5941 = vunpack.c.l.b16 %v5813
        %v5942 = vunpack.c.l.b16 %v5814
        %v5943 = vunpack.c.l.b16 %v5815
        %v5944 = vunpack.c.l.b16 %v5816
        %v5945 = vunpack.c.l.b16 %v5817
        %v5946 = vunpack.c.l.b16 %v5818
        %v5947 = vunpack.c.l.b16 %v5819
        %v5948 = vunpack.c.l.b16 %v5820
        %v5949 = vunpack.c.l.b16 %v5821
        %v5950 = vunpack.c.l.b16 %v5822
        %v5951 = vunpack.c.l.b16 %v5823
        %v5952 = vunpack.c.l.b16 %v5824
        %v5953 = vunpack.c.l.b16 %v5825
        %v5954 = vunpack.c.l.b16 %v5826
        %v5955 = vunpack.c.l.b16 %v5827
        %v5956 = vunpack.c.l.b16 %v5828
        %v5957 = vunpack.c.l.b16 %v5829
        %v5958 = vunpack.c.l.b16 %v5830
        %v5959 = vpack.c.b16 %v5896, %v5895
        %v5960 = vpack.c.b16 %v5898, %v5897
        %v5961 = vpack.c.b16 %v5900, %v5899
        %v5962 = vpack.c.b16 %v5902, %v5901
        %v5963 = vpack.c.b16 %v5904, %v5903
        %v5964 = vpack.c.b16 %v5906, %v5905
        %v5965 = vpack.c.b16 %v5908, %v5907
        %v5966 = vpack.c.b16 %v5910, %v5909
        %v5967 = vpack.c.b16 %v5912, %v5911
        %v5968 = vpack.c.b16 %v5914, %v5913
        %v5969 = vpack.c.b16 %v5916, %v5915
        %v5970 = vpack.c.b16 %v5918, %v5917
        %v5971 = vpack.c.b16 %v5920, %v5919
        %v5972 = vpack.c.b16 %v5922, %v5921
        %v5973 = vpack.c.b16 %v5924, %v5923
        %v5974 = vpack.c.b16 %v5926, %v5925
        %v5975 = vpack.c.b16 %v5928, %v5927
        %v5976 = vpack.c.b16 %v5930, %v5929
        %v5977 = vpack.c.b16 %v5932, %v5931
        %v5978 = vpack.c.b16 %v5934, %v5933
        %v5979 = vpack.c.b16 %v5936, %v5935
        %v5980 = vpack.c.b16 %v5938, %v5937
        %v5981 = vpack.c.b16 %v5940, %v5939
        %v5982 = vpack.c.b16 %v5942, %v5941
        %v5983 = vpack.c.b16 %v5944, %v5943
        %v5984 = vpack.c.b16 %v5946, %v5945
        %v5985 = vpack.c.b16 %v5948, %v5947
        %v5986 = vpack.c.b16 %v5950, %v5949
        %v5987 = vpack.c.b16 %v5952, %v5951
        %v5988 = vpack.c.b16 %v5954, %v5953
        %v5989 = vpack.c.b16 %v5956, %v5955
        %v5990 = vpack.c.b16 %v5958, %v5957
        %6023 = vmatprep.subr.bf16.mxu0 0
        %6024 = vmatpush1.bf16.msra.mxu0 %v5959
        %6025 = vmatprep.subr.bf16.mxu0 0
        %6026 = vmatpush1.bf16.msra.mxu0 %v5960
        %6027 = vmatprep.subr.bf16.mxu0 0
        %6028 = vmatpush1.bf16.msra.mxu0 %v5961
        %6029 = vmatprep.subr.bf16.mxu0 0
        %6030 = vmatpush1.bf16.msra.mxu0 %v5962
        %6031 = vmatprep.subr.bf16.mxu0 0
        %6032 = vmatpush1.bf16.msra.mxu0 %v5963
        %6033 = vmatprep.subr.bf16.mxu0 0
        %6034 = vmatpush1.bf16.msra.mxu0 %v5964
        %6035 = vmatprep.subr.bf16.mxu0 0
        %6036 = vmatpush1.bf16.msra.mxu0 %v5965
        %6037 = vmatprep.subr.bf16.mxu0 0
        %6038 = vmatpush1.bf16.msra.mxu0 %v5966
        %6039 = vmatprep.subr.bf16.mxu0 0
        %6040 = vmatpush1.bf16.msra.mxu0 %v5967
        %6041 = vmatprep.subr.bf16.mxu0 0
        %6042 = vmatpush1.bf16.msra.mxu0 %v5968
        %6043 = vmatprep.subr.bf16.mxu0 0
        %6044 = vmatpush1.bf16.msra.mxu0 %v5969
        %6045 = vmatprep.subr.bf16.mxu0 0
        %6046 = vmatpush1.bf16.msra.mxu0 %v5970
        %6047 = vmatprep.subr.bf16.mxu0 0
        %6048 = vmatpush1.bf16.msra.mxu0 %v5971
        %6049 = vmatprep.subr.bf16.mxu0 0
        %6050 = vmatpush1.bf16.msra.mxu0 %v5972
        %6051 = vmatprep.subr.bf16.mxu0 0
        %6052 = vmatpush1.bf16.msra.mxu0 %v5973
        %6053 = vmatprep.subr.bf16.mxu0 0
        %6054 = vmatpush1.bf16.msra.mxu0 %v5974
        %6055 = vmatprep.mubr.bf16.mxu0 %v5736
        %6056 = vmatmul.mubr.bf16.gmra.mrb[0].mxu0 %v5735
        %v6057 = vpop.f32.mrb[0].mxu0
        %v6058 = vadd.f32 0.0, %v6057
        %v6059 = vpop.f32.mrb[0].mxu0
        %v6060 = vpop.f32.mrb[0].mxu0
        %v6061 = vadd.f32 0.0, %v6060
        %v6062 = vpop.f32.mrb[0].mxu0
        %6063 = vmatprep.mubr.bf16.mxu0 %v5740
        %6064 = vmatmul.mubr.bf16.gmra.mrb[0].mxu0 %v5739
        %v6065 = vpop.f32.mrb[0].mxu0
        %v6066 = vadd.f32 0.0, %v6065
        %v6067 = vpop.f32.mrb[0].mxu0
        %v6068 = vpop.f32.mrb[0].mxu0
        %v6069 = vadd.f32 0.0, %v6068
        %v6070 = vpop.f32.mrb[0].mxu0
        %6071 = vmatprep.mubr.bf16.mxu0 %v5744
        %6072 = vmatmul.mubr.bf16.gmra.mrb[0].mxu0 %v5743
        %v6073 = vpop.f32.mrb[0].mxu0
        %v6074 = vadd.f32 0.0, %v6073
        %v6075 = vpop.f32.mrb[0].mxu0
        %v6076 = vpop.f32.mrb[0].mxu0
        %v6077 = vadd.f32 0.0, %v6076
        %v6078 = vpop.f32.mrb[0].mxu0
        %6079 = vmatprep.mubr.bf16.mxu0 %v5748
        %6080 = vmatmul.mubr.bf16.gmra.mrb[0].mxu0 %v5747
        %v6081 = vpop.f32.mrb[0].mxu0
        %v6082 = vadd.f32 0.0, %v6081
        %v6083 = vpop.f32.mrb[0].mxu0
        %v6084 = vpop.f32.mrb[0].mxu0
        %v6085 = vadd.f32 0.0, %v6084
        %v6086 = vpop.f32.mrb[0].mxu0
        %6087 = vmatprep.mubr.bf16.mxu0 %v5752
        %6088 = vmatmul.mubr.bf16.gmra.mrb[0].mxu0 %v5751
        %v6089 = vpop.f32.mrb[0].mxu0
        %v6090 = vadd.f32 0.0, %v6089
        %v6091 = vpop.f32.mrb[0].mxu0
        %v6092 = vpop.f32.mrb[0].mxu0
        %v6093 = vadd.f32 0.0, %v6092
        %v6094 = vpop.f32.mrb[0].mxu0
        %6095 = vmatprep.mubr.bf16.mxu0 %v5756
        %6096 = vmatmul.mubr.bf16.gmra.mrb[0].mxu0 %v5755
        %v6097 = vpop.f32.mrb[0].mxu0
        %v6098 = vadd.f32 0.0, %v6097
        %v6099 = vpop.f32.mrb[0].mxu0
        %v6100 = vpop.f32.mrb[0].mxu0
        %v6101 = vadd.f32 0.0, %v6100
        %v6102 = vpop.f32.mrb[0].mxu0
        %6103 = vmatprep.mubr.bf16.mxu0 %v5760
        %6104 = vmatmul.mubr.bf16.gmra.mrb[0].mxu0 %v5759
        %v6105 = vpop.f32.mrb[0].mxu0
        %v6106 = vadd.f32 0.0, %v6105
        %v6107 = vpop.f32.mrb[0].mxu0
        %v6108 = vpop.f32.mrb[0].mxu0
        %v6109 = vadd.f32 0.0, %v6108
        %v6110 = vpop.f32.mrb[0].mxu0
        %6111 = vmatprep.mubr.bf16.mxu0 %v5764
        %6112 = vmatmul.mubr.bf16.gmra.mrb[0].mxu0 %v5763
        %v6113 = vpop.f32.mrb[0].mxu0
        %v6114 = vadd.f32 0.0, %v6113
        %v6115 = vpop.f32.mrb[0].mxu0
        %v6116 = vpop.f32.mrb[0].mxu0
        %v6117 = vadd.f32 0.0, %v6116
        %v6118 = vpop.f32.mrb[0].mxu0
        %6119 = vdwg.mxu0
        %6120 = vmatprep.subr.bf16.mxu0 0
        %6121 = vmatpush1.bf16.msra.mxu0 %v5975
        %6122 = vmatprep.subr.bf16.mxu0 0
        %6123 = vmatpush1.bf16.msra.mxu0 %v5976
        %6124 = vmatprep.subr.bf16.mxu0 0
        %6125 = vmatpush1.bf16.msra.mxu0 %v5977
        %6126 = vmatprep.subr.bf16.mxu0 0
        %6127 = vmatpush1.bf16.msra.mxu0 %v5978
        %6128 = vmatprep.subr.bf16.mxu0 0
        %6129 = vmatpush1.bf16.msra.mxu0 %v5979
        %6130 = vmatprep.subr.bf16.mxu0 0
        %6131 = vmatpush1.bf16.msra.mxu0 %v5980
        %6132 = vmatprep.subr.bf16.mxu0 0
        %6133 = vmatpush1.bf16.msra.mxu0 %v5981
        %6134 = vmatprep.subr.bf16.mxu0 0
        %6135 = vmatpush1.bf16.msra.mxu0 %v5982
        %6136 = vmatprep.subr.bf16.mxu0 0
        %6137 = vmatpush1.bf16.msra.mxu0 %v5983
        %6138 = vmatprep.subr.bf16.mxu0 0
        %6139 = vmatpush1.bf16.msra.mxu0 %v5984
        %6140 = vmatprep.subr.bf16.mxu0 0
        %6141 = vmatpush1.bf16.msra.mxu0 %v5985
        %6142 = vmatprep.subr.bf16.mxu0 0
        %6143 = vmatpush1.bf16.msra.mxu0 %v5986
        %6144 = vmatprep.subr.bf16.mxu0 0
        %6145 = vmatpush1.bf16.msra.mxu0 %v5987
        %6146 = vmatprep.subr.bf16.mxu0 0
        %6147 = vmatpush1.bf16.msra.mxu0 %v5988
        %6148 = vmatprep.subr.bf16.mxu0 0
        %6149 = vmatpush1.bf16.msra.mxu0 %v5989
        %6150 = vmatprep.subr.bf16.mxu0 0
        %6151 = vmatpush1.bf16.msra.mxu0 %v5990
        %6152 = vmatprep.mubr.bf16.mxu0 %v5738
        %6153 = vmatmul.mubr.bf16.gmra.mrb[0].mxu0 %v5737
        %v6154 = vpop.f32.mrb[0].mxu0
        %v6155 = vadd.f32 %v6058, %v6154
        %v6156 = vpop.f32.mrb[0].mxu0
        %v6157 = vpop.f32.mrb[0].mxu0
        %v6158 = vadd.f32 %v6061, %v6157
        %v6159 = vpop.f32.mrb[0].mxu0
        %6160 = vmatprep.mubr.bf16.mxu0 %v5742
        %6161 = vmatmul.mubr.bf16.gmra.mrb[0].mxu0 %v5741
        %v6162 = vpop.f32.mrb[0].mxu0
        %v6163 = vadd.f32 %v6066, %v6162
        %v6164 = vpop.f32.mrb[0].mxu0
        %v6165 = vpop.f32.mrb[0].mxu0
        %v6166 = vadd.f32 %v6069, %v6165
        %v6167 = vpop.f32.mrb[0].mxu0
        %6168 = vmatprep.mubr.bf16.mxu0 %v5746
        %6169 = vmatmul.mubr.bf16.gmra.mrb[0].mxu0 %v5745
        %v6170 = vpop.f32.mrb[0].mxu0
        %v6171 = vadd.f32 %v6074, %v6170
        %v6172 = vpop.f32.mrb[0].mxu0
        %v6173 = vpop.f32.mrb[0].mxu0
        %v6174 = vadd.f32 %v6077, %v6173
        %v6175 = vpop.f32.mrb[0].mxu0
        %6176 = vmatprep.mubr.bf16.mxu0 %v5750
        %6177 = vmatmul.mubr.bf16.gmra.mrb[0].mxu0 %v5749
        %v6178 = vpop.f32.mrb[0].mxu0
        %v6179 = vadd.f32 %v6082, %v6178
        %v6180 = vpop.f32.mrb[0].mxu0
        %v6181 = vpop.f32.mrb[0].mxu0
        %v6182 = vadd.f32 %v6085, %v6181
        %v6183 = vpop.f32.mrb[0].mxu0
        %6184 = vmatprep.mubr.bf16.mxu0 %v5754
        %6185 = vmatmul.mubr.bf16.gmra.mrb[0].mxu0 %v5753
        %v6186 = vpop.f32.mrb[0].mxu0
        %v6187 = vadd.f32 %v6090, %v6186
        %v6188 = vpop.f32.mrb[0].mxu0
        %v6189 = vpop.f32.mrb[0].mxu0
        %v6190 = vadd.f32 %v6093, %v6189
        %v6191 = vpop.f32.mrb[0].mxu0
        %6192 = vmatprep.mubr.bf16.mxu0 %v5758
        %6193 = vmatmul.mubr.bf16.gmra.mrb[0].mxu0 %v5757
        %v6194 = vpop.f32.mrb[0].mxu0
        %v6195 = vadd.f32 %v6098, %v6194
        %v6196 = vpop.f32.mrb[0].mxu0
        %v6197 = vpop.f32.mrb[0].mxu0
        %v6198 = vadd.f32 %v6101, %v6197
        %v6199 = vpop.f32.mrb[0].mxu0
        %6200 = vmatprep.mubr.bf16.mxu0 %v5762
        %6201 = vmatmul.mubr.bf16.gmra.mrb[0].mxu0 %v5761
        %v6202 = vpop.f32.mrb[0].mxu0
        %v6203 = vadd.f32 %v6106, %v6202
        %v6204 = vpop.f32.mrb[0].mxu0
        %v6205 = vpop.f32.mrb[0].mxu0
        %v6206 = vadd.f32 %v6109, %v6205
        %v6207 = vpop.f32.mrb[0].mxu0
        %6208 = vmatprep.mubr.bf16.mxu0 %v5766
        %6209 = vmatmul.mubr.bf16.gmra.mrb[0].mxu0 %v5765
        %v6210 = vpop.f32.mrb[0].mxu0
        %v6211 = vadd.f32 %v6114, %v6210
        %v6212 = vpop.f32.mrb[0].mxu0
        %v6213 = vpop.f32.mrb[0].mxu0
        %v6214 = vadd.f32 %v6117, %v6213
        %v6215 = vpop.f32.mrb[0].mxu0
        %6216 = vdwg.mxu0
        %v6217 = vmax.f32 %v6155, 1e-10
        %v6218 = vmax.f32 %v6158, 1e-10
        %v6219 = vmax.f32 %v6163, 1e-10
        %v6220 = vmax.f32 %v6166, 1e-10
        %v6221 = vmax.f32 %v6171, 1e-10
        %v6222 = vmax.f32 %v6174, 1e-10
        %v6223 = vmax.f32 %v6179, 1e-10
        %v6224 = vmax.f32 %v6182, 1e-10
        %v6225 = vmax.f32 %v6187, 1e-10
        %v6226 = vmax.f32 %v6190, 1e-10
        %v6227 = vmax.f32 %v6195, 1e-10
        %v6228 = vmax.f32 %v6198, 1e-10
        %v6229 = vmax.f32 %v6203, 1e-10
        %v6230 = vmax.f32 %v6206, 1e-10
        %v6231 = vmax.f32 %v6211, 1e-10
        %v6232 = vmax.f32 %v6214, 1e-10
        %v6233 = vlog2.pop %v6217
        %v6234 = vmul.f32 %v6233, 0.6931472
        %v6235 = vlog2.pop %v6218
        %v6236 = vmul.f32 %v6235, 0.6931472
        %v6237 = vlog2.pop %v6219
        %v6238 = vmul.f32 %v6237, 0.6931472
        %v6239 = vlog2.pop %v6220
        %v6240 = vmul.f32 %v6239, 0.6931472
        %v6241 = vlog2.pop %v6221
        %v6242 = vmul.f32 %v6241, 0.6931472
        %v6243 = vlog2.pop %v6222
        %v6244 = vmul.f32 %v6243, 0.6931472
        %v6245 = vlog2.pop %v6223
        %v6246 = vmul.f32 %v6245, 0.6931472
        %v6247 = vlog2.pop %v6224
        %v6248 = vmul.f32 %v6247, 0.6931472
        %v6249 = vlog2.pop %v6225
        %v6250 = vmul.f32 %v6249, 0.6931472
        %v6251 = vlog2.pop %v6226
        %v6252 = vmul.f32 %v6251, 0.6931472
        %v6253 = vlog2.pop %v6227
        %v6254 = vmul.f32 %v6253, 0.6931472
        %v6255 = vlog2.pop %v6228
        %v6256 = vmul.f32 %v6255, 0.6931472
        %v6257 = vlog2.pop %v6229
        %v6258 = vmul.f32 %v6257, 0.6931472
        %v6259 = vlog2.pop %v6230
        %v6260 = vmul.f32 %v6259, 0.6931472
        %v6261 = vlog2.pop %v6231
        %v6262 = vmul.f32 %v6261, 0.6931472
        %v6263 = vlog2.pop %v6232
        %v6264 = vmul.f32 %v6263, 0.6931472
        %v6265 = vmul.f32 %v6234, 0.4342945
        %v6266 = vmul.f32 %v6236, 0.4342945
        %v6267 = vmul.f32 %v6238, 0.4342945
        %v6268 = vmul.f32 %v6240, 0.4342945
        %v6269 = vmul.f32 %v6242, 0.4342945
        %v6270 = vmul.f32 %v6244, 0.4342945
        %v6271 = vmul.f32 %v6246, 0.4342945
        %v6272 = vmul.f32 %v6248, 0.4342945
        %v6273 = vmul.f32 %v6250, 0.4342945
        %v6274 = vmul.f32 %v6252, 0.4342945
        %v6275 = vmul.f32 %v6254, 0.4342945
        %v6276 = vmul.f32 %v6256, 0.4342945
        %v6277 = vmul.f32 %v6258, 0.4342945
        %v6278 = vmul.f32 %v6260, 0.4342945
        %v6279 = vmul.f32 %v6262, 0.4342945
        %v6280 = vmul.f32 %v6264, 0.4342945
        %v6281 = vmul.f32 %v6265, 10.0
        %v6282 = vmul.f32 %v6266, 10.0
        %v6283 = vmul.f32 %v6267, 10.0
        %v6284 = vmul.f32 %v6268, 10.0
        %v6285 = vmul.f32 %v6269, 10.0
        %v6286 = vmul.f32 %v6270, 10.0
        %v6287 = vmul.f32 %v6271, 10.0
        %v6288 = vmul.f32 %v6272, 10.0
        %v6289 = vmul.f32 %v6273, 10.0
        %v6290 = vmul.f32 %v6274, 10.0
        %v6291 = vmul.f32 %v6275, 10.0
        %v6292 = vmul.f32 %v6276, 10.0
        %v6293 = vmul.f32 %v6277, 10.0
        %v6294 = vmul.f32 %v6278, 10.0
        %v6295 = vmul.f32 %v6279, 10.0
        %v6296 = vmul.f32 %v6280, 10.0
        %6297 = vxpose.xlu0.b32.start [1/16] %v6281, 128
        %6298 = vxpose.xlu0.b32.cont [2/16] %v6282, 128
        %6299 = vxpose.xlu0.b32.cont [3/16] %v6283, 128
        %6300 = vxpose.xlu0.b32.cont [4/16] %v6284, 128
        %6301 = vxpose.xlu0.b32.cont [5/16] %v6285, 128
        %6302 = vxpose.xlu0.b32.cont [6/16] %v6286, 128
        %6303 = vxpose.xlu0.b32.cont [7/16] %v6287, 128
        %6304 = vxpose.xlu0.b32.cont [8/16] %v6288, 128
        %6305 = vxpose.xlu0.b32.cont [9/16] %v6289, 128
        %6306 = vxpose.xlu0.b32.cont [10/16] %v6290, 128
        %6307 = vxpose.xlu0.b32.cont [11/16] %v6291, 128
        %6308 = vxpose.xlu0.b32.cont [12/16] %v6292, 128
        %6309 = vxpose.xlu0.b32.cont [13/16] %v6293, 128
        %6310 = vxpose.xlu0.b32.cont [14/16] %v6294, 128
        %6311 = vxpose.xlu0.b32.cont [15/16] %v6295, 128
        %6312 = vxpose.xlu0.b32.end [16/16] %v6296, 128
        %v6313 = vpop.trf.xlu0
        %v6314 = vpop.trf.xlu0
        %v6315 = vpop.trf.xlu0
        %v6316 = vpop.trf.xlu0
        %v6317 = vpop.trf.xlu0
        %v6318 = vpop.trf.xlu0
        %v6319 = vpop.trf.xlu0
        %v6320 = vpop.trf.xlu0
        %v6321 = vpop.trf.xlu0
        %v6322 = vpop.trf.xlu0
        %v6323 = vpop.trf.xlu0
        %v6324 = vpop.trf.xlu0
        %v6325 = vpop.trf.xlu0
        %v6326 = vpop.trf.xlu0
        %v6327 = vpop.trf.xlu0
        %v6328 = vpop.trf.xlu0
        %6329 = vst [vmem:[%s270] sm:$0xff] %v6313
        %6330 = vst [vmem:[%s270 + $0x8] sm:$0xff] %v6314
        %6331 = vst [vmem:[%s270 + $0x10] sm:$0xff] %v6315
        %6332 = vst [vmem:[%s270 + $0x18] sm:$0xff] %v6316
        %6333 = vst [vmem:[%s270 + $0x20] sm:$0xff] %v6317
        %6334 = vst [vmem:[%s270 + $0x28] sm:$0xff] %v6318
        %6335 = vst [vmem:[%s270 + $0x30] sm:$0xff] %v6319
        %6336 = vst [vmem:[%s270 + $0x38] sm:$0xff] %v6320
        %s6337 = smul.u32 %s25, 128
        %v6338 = vlaneseq
        %v6339 = vand.u32 %v6338, 127
        %v6340 = vstv %s6337
        %v6341 = vadd.s32 %v6340, %v6339
        %vm6342 = vcmp.lt.s32.totalorder %v6341, 11
        %v6343 = vsel %vm6342, %v6313, -1e+09
        %v6344 = vsel %vm6342, %v6314, -1e+09
        %v6345 = vsel %vm6342, %v6315, -1e+09
        %v6346 = vsel %vm6342, %v6316, -1e+09
        %v6347 = vsel %vm6342, %v6317, -1e+09
        %v6348 = vsel %vm6342, %v6318, -1e+09
        %v6349 = vsel %vm6342, %v6319, -1e+09
        %v6350 = vsel %vm6342, %v6320, -1e+09
        %v6351 = vmax.f32 %v6343, %v6347
        %v6352 = vmax.f32 %v6344, %v6348
        %v6353 = vmax.f32 %v6345, %v6349
        %v6354 = vmax.f32 %v6346, %v6350
        %v6355 = vmax.f32 %v6351, %v6352
        %v6356 = vmax.f32 %v6353, %v6354
        %v6357 = vmax.f32 %v6355, %v6356
        %6358 = vmax.xlane.f32.xlu0 %v6357
        %v6359 = vpop.xlane.xlu0 %6358
        %v6360 = vrot.slane %v6359, 4
        %v6361 = vmax.f32 %v6359, %v6360
        %v6362 = vrot.slane %v6361, 2
        %v6363 = vmax.f32 %v6361, %v6362
        %v6364 = vrot.slane %v6363, 1
        %v6365 = vmax.f32 %v6363, %v6364
        %s6366 = vtos %v6365
        %v6367 = vstv %s6366
        %v6368 = vadd.f32 %v6367, 0.0
        %6369 = vst [vmem:[%s277] sm:$0xff] %v6368
        %p6370 = scmp.lt.s32.totalorder %s24, 1
        %s6371 = scalar_select %p6370, %s24, 1
        %p6372 = scmp.lt.s32.totalorder %s25, 0
        %s6373 = scalar_select %p6372, %s25, 0
        %s6374 = smul.addr %s6371, 8
        %s6375 = sadd.s32 %s6373, %s6374
        %s6376 = smul.addr %s6375, 8
        %s6377 = scalar_lea.vmem %s3, %s6376
        %p6378 = scmp.lt.s32.totalorder %s24, 1
        %s6379 = scalar_select %p6378, %s24, 1
        %p6380 = scmp.lt.s32.totalorder %s25, 0
        %s6381 = scalar_select %p6380, %s25, 0
        %s6382 = sadd.s32 %s6381, %s6379
        %s6383 = smul.addr %s6382, 8
        %s6384 = scalar_lea.vmem %s4, %s6383
        // Predicated region
        $region41: #{atst_mel.1} parent=31 // pred_check
          %p6385 = pneg %p122
        $region42: #{atst_mel.1} parent=31 // pred_check_branch
          %6387 = sbr.rel (%p6385) target = $region44
        $region43: #{atst_mel.1} parent=31 // pred_region
          _
        $region44: #{atst_mel.1} parent=31 // pred_fallthru
          _
        // Predicated region
        $region45: #{atst_mel.1} parent=31 // pred_check
          %p6388 = pneg %p150
        $region46: #{atst_mel.1} parent=31 // pred_check_branch
          %6390 = sbr.rel (%p6388) target = $region48
        $region47: #{atst_mel.1} parent=31 // pred_region
          _
        $region48: #{atst_mel.1} parent=31 // pred_fallthru
          _
      $region32: #{atst_mel.1} parent=5 // pred_fallthru
        _
      %p6391 = scmp.le.s32.totalorder 2, %s15
      // Predicated region
      $region49: #{atst_mel.1} parent=5 // pred_check
        %p6392 = pneg %p6391
      $region50: #{atst_mel.1} parent=5 // pred_check_branch
        %6394 = sbr.rel (%p6392) target = $region52
      $region51: #{atst_mel.1} parent=5 // pred_region
        %s6395 = ssub.s32 %s15, 2
        // Predicated region
        $region53: #{atst_mel.1} parent=51 // pred_check
          %p6396 = pneg %p128
        $region54: #{atst_mel.1} parent=51 // pred_check_branch
          %6398 = sbr.rel (%p6396) target = $region56
        $region55: #{atst_mel.1} parent=51 // pred_region
          %p6399 = scmp.lt.s32.totalorder %s26, 1
          %s6400 = scalar_select %p6399, %s26, 1
          %p6401 = scmp.lt.s32.totalorder %s27, 0
          %s6402 = scalar_select %p6401, %s27, 0
          %s6403 = smul.addr %s6400, 8
          %s6404 = sadd.s32 %s6402, %s6403
          %s6405 = smul.addr %s6404, 8
          %s6406 = scalar_lea.vmem %s3, %s6405
        $region56: #{atst_mel.1} parent=51 // pred_fallthru
          _
        // Predicated region
        $region57: #{atst_mel.1} parent=51 // pred_check
          %p6407 = pneg %p156
        $region58: #{atst_mel.1} parent=51 // pred_check_branch
          %6409 = sbr.rel (%p6407) target = $region60
        $region59: #{atst_mel.1} parent=51 // pred_region
          %p6410 = scmp.lt.s32.totalorder %s26, 1
          %s6411 = scalar_select %p6410, %s26, 1
          %p6412 = scmp.lt.s32.totalorder %s27, 0
          %s6413 = scalar_select %p6412, %s27, 0
          %s6414 = sadd.s32 %s6413, %s6411
          %s6415 = smul.addr %s6414, 8
          %s6416 = scalar_lea.vmem %s4, %s6415
        $region60: #{atst_mel.1} parent=51 // pred_fallthru
          _
      $region52: #{atst_mel.1} parent=5 // pred_fallthru
        _
    $region6: #{atst_mel.1} parent=1 // loop_footer
      %s19 = sadd.s32 1, %s15
    $region7: #{atst_mel.1} parent=1 // loop_footer_branch
      %14 = sbr.rel target = $region3
    $region8: #{atst_mel.1} parent=1 // loop_exit
      _
    %6417 = vsyncpa [#allocation3], 1
    %s6418 = scalar_lea.sflag [#allocation3], 1
    %6419 = vsyncpa %s6418, 1
    %6420 = vsyncpa [#allocation5], 1

</llo_original>
